<compile_context>
chip_gen: v7x
topology: tpu7x:2x2x1
jax: 0.10.0
libtpu: 0.0.40
codegen_flags: <defaults>
</compile_context>

<pallas_src>
import jax
import jax.numpy as jnp
from jax.experimental import pallas as pl
from jax.experimental.pallas import tpu as pltpu

# ---------------- model sizes (module defaults) ----------------
NUM_PROPOSALS = 256          # K
LANG_SIZE = 256
FEAT_SIZE = 128              # channel dim of aggregated_vote_features
HIDDEN = 128
IN_FUSE = LANG_SIZE + FEAT_SIZE   # 384
BN_EPS = 1e-5

# MXU operand dtype (accumulation is always f32).
MATMUL_DTYPE = jnp.bfloat16


# ---------------- Pallas kernel ----------------
def match_kernel(feat_ref, obj_ref, lang_ref,
                 wf_ref, w1_ref, w2_ref, w3_ref, ep_ref, b3_ref,
                 out_ref):
    """One row tile (BB batch elements x K proposals) per grid step.

    feat_ref : (BB, K, 128)  features, f32 (cast to bf16 in-kernel)
    obj_ref  : (BB, K, 2)    objectness logits, f32
    lang_ref : (BB, 1, H)    lang_emb @ Wf_lang + b_f, precomputed per batch, f32
    wf_ref   : (128, H)      fuse conv weight, feature half (pre-transposed, bf16)
    w1_ref   : (H, H)        match conv1 weight (bf16)
    w2_ref   : (H, H)        match conv2 weight (bf16)
    w3_ref   : (1, H)        match conv3 weight row (bf16)
    ep_ref   : (6, H)        f32 epilogue rows: b1, s1, t1, b2, s2, t2
    b3_ref   : (1, 1)        final conv bias, f32
    out_ref  : (1, 1, BB*K)  cluster_ref scores, one lane-dense row per grid step
    """
    bb, vk, c = feat_ref.shape
    h_dim = wf_ref.shape[1]
    r = bb * vk

    b1 = ep_ref[0:1, :]
    s1 = ep_ref[1:2, :]
    t1 = ep_ref[2:3, :]
    b2 = ep_ref[3:4, :]
    s2 = ep_ref[4:5, :]
    t2 = ep_ref[5:6, :]

    # fuse conv, feature half: one long (r, 128) x (128, H) matmul for the whole
    # tile (cast to bf16 in-kernel; no wrapper-side HBM round trip).
    x = feat_ref[...].astype(wf_ref.dtype).reshape(r, c)
    h = jnp.dot(x, wf_ref[...], preferred_element_type=jnp.float32)     # (r, H)

    # add the per-batch-element language half (identical for all K proposals)
    h = h.reshape(bb, vk, h_dim) + lang_ref[...]                         # (BB,K,H)

    # objectness mask computed once for the whole tile; strict `>` matches torch
    # argmax tie-breaking (ties -> index 0); kept in f32 for exact tie behaviour.
    obj = obj_ref[...]                                                   # (BB,K,2)
    mask = (obj[..., 1:2] > obj[..., 0:1]).astype(jnp.float32)           # (BB,K,1)
    h = (jnp.maximum(h, 0.0) * mask).reshape(r, h_dim)                   # (r, H)

    # match conv1 + ReLU + BN1 (BN as exact f32 VPU epilogue)
    h1 = jnp.dot(h.astype(w1_ref.dtype), w1_ref[...],
                 preferred_element_type=jnp.float32) + b1
    h1 = jnp.maximum(h1, 0.0) * s1 + t1

    # match conv2 + ReLU + BN2
    h2 = jnp.dot(h1.astype(w2_ref.dtype), w2_ref[...],
                 preferred_element_type=jnp.float32) + b2
    h2 = jnp.maximum(h2, 0.0) * s2 + t2

    # final Conv1d(H->1), batched over the whole tile: w3_row @ h2^T gives one
    # lane-dense (1, r) score row per step (single M=1 MXU pass, unmasked vst).
    row = jax.lax.dot_general(
        w3_ref[...], h2.astype(w3_ref.dtype),
        dimension_numbers=(((1,), (1,)), ((), ())),
        preferred_element_type=jnp.float32)                              # (1, r)
    out_ref[...] = (row + b3_ref[...]).reshape(1, 1, r)


# ---------------- tiling heuristic ----------------
def _num_tensorcores_per_device():
    """Best-effort TC count per JAX device (2 for v7x and v4/v5p megacore)."""
    try:
        kind = jax.devices()[0].device_kind.lower()
    except Exception:
        return 1
    if "v4" in kind or "v5p" in kind or kind.strip() == "tpu v5" or "7" in kind:
        return 2
    return 1


def _pick_tiling(batch, num_prop, *, target_rows=2048):
    """Returns (ks, bb): K-split factor and batch elements per grid step.

    Single-TC chips (v5e/v6e): just maximize the tile (fewest ~0.35us steps).
    2-TC chips (v7x / megacore): prefer an even number of grid steps so both
    TensorCores get balanced work; if the batch alone can't give >= 2 steps,
    split K in half (exact for these per-proposal 1x1 convs).
    """
    multi_tc = _num_tensorcores_per_device() >= 2

    def best_bb(vb, vk, prefer_even):
        max_bb = max(1, target_rows // max(vk, 1))
        divs = [d for d in range(1, vb + 1) if vb % d == 0 and d <= max_bb]
        if prefer_even:
            even = [d for d in divs if (vb // d) % 2 == 0]
            if even:
                return max(even)
        return max(divs)

    ks = 1
    bb = best_bb(batch, num_prop, prefer_even=multi_tc)
    if multi_tc and (batch // bb) % 2 == 1 and num_prop % 16 == 0:
        bb2 = best_bb(batch * 2, num_prop // 2, prefer_even=True)
        if ((batch * 2) // bb2) % 2 == 0:
            ks, bb = 2, bb2
    return ks, bb


# ---------------- JAX wrapper ----------------
def match_module_forward(features, objectness_scores, lang_feat, params):
    """votenet / no-chunking branch of MatchModule.forward.  Returns (B, K)."""
    B, K, C = features.shape
    assert C == FEAT_SIZE and K % 8 == 0

    (wf_t, bf, w1_t, b1, s1, t1, w2_t, b2, s2, t2, w3_t, b3) = params

    # --- parameter prep (tiny, once per call) -------------------------------
    # Split the fuse conv: the language half is identical for every proposal, so
    # compute it once per batch element in f32 and never build the (B,K,384)
    # concat in HBM.
    wf_feat_t = wf_t[:FEAT_SIZE]                            # (128, H)
    wf_lang_t = wf_t[FEAT_SIZE:]                            # (256, H)
    lang_fused = (lang_feat @ wf_lang_t + bf)[:, None, :]   # (B, 1, H) f32

    # bf16 MXU weights; BN scale/shift + conv biases stay f32 (VPU epilogue).
    wf = wf_feat_t.astype(MATMUL_DTYPE)
    w1 = w1_t.astype(MATMUL_DTYPE)
    w2 = w2_t.astype(MATMUL_DTYPE)
    w3 = w3_t.T.astype(MATMUL_DTYPE)                        # (1, H)
    ep = jnp.concatenate([b1, s1, t1, b2, s2, t2], axis=0)  # (6, H) f32

    # --- tiling (generation-aware; optional K-split for 2-TC parts) ---------
    ks, bb = _pick_tiling(B, K)
    vB, vK = B * ks, K // ks
    T = vB // bb
    R = bb * vK

    # Free contiguous reshapes: virtual batch index vb = b*ks + k_chunk.
    feats_v = features.reshape(vB, vK, FEAT_SIZE)
    obj_v = objectness_scores.reshape(vB, vK, 2)
    if ks == 1:
        lang_v = lang_fused
    else:
        lang_v = jnp.broadcast_to(
            lang_fused[:, None], (B, ks, 1, HIDDEN)).reshape(vB, 1, HIDDEN)

    def resident(arr):   # whole-array, grid-invariant block (loaded once)
        n = arr.ndim
        return pl.BlockSpec(arr.shape, lambda t: (0,) * n)

    flops = 2 * B * K * (FEAT_SIZE * HIDDEN + 2 * HIDDEN * HIDDEN + HIDDEN)
    bytes_accessed = (B * K * FEAT_SIZE * 4 + B * K * 2 * 4 + B * HIDDEN * 4
                      + B * K * 4
                      + (FEAT_SIZE * HIDDEN + 2 * HIDDEN * HIDDEN + HIDDEN) * 2
                      + (6 * HIDDEN + 1) * 4)

    out = pl.pallas_call(
        match_kernel,
        out_shape=jax.ShapeDtypeStruct((T, 1, R), jnp.float32),
        grid_spec=pltpu.PrefetchScalarGridSpec(
            num_scalar_prefetch=0,
            grid=(T,),
            in_specs=[
                pl.BlockSpec((bb, vK, FEAT_SIZE), lambda t: (t, 0, 0)),  # features
                pl.BlockSpec((bb, vK, 2), lambda t: (t, 0, 0)),          # objectness
                pl.BlockSpec((bb, 1, HIDDEN), lambda t: (t, 0, 0)),      # lang term
                resident(wf), resident(w1), resident(w2), resident(w3),
                resident(ep), resident(b3),
            ],
            out_specs=pl.BlockSpec((1, 1, R), lambda t: (t, 0, 0)),
        ),
        compiler_params=pltpu.CompilerParams(
            dimension_semantics=("parallel",),
            vmem_limit_bytes=32 * 1024 * 1024),
        cost_estimate=pl.CostEstimate(
            flops=flops, transcendentals=0, bytes_accessed=bytes_accessed),
    )(feats_v, obj_v, lang_v, wf, w1, w2, w3, ep, b3)

    # (T, 1, bb*vK) -> (vB, vK) -> (B, K): contiguous, free reshape.
    return out.reshape(B, K)   # == data_dict['cluster_ref']


# ---------------- deterministic parameter init ----------------
def init_params(key):
    ks = jax.random.split(key, 12)
    scale = 0.05
    # Conv1d weights stored pre-transposed as (C_in, C_out); biases as (1, C_out)
    wf_t = scale * jax.random.normal(ks[0], (IN_FUSE, HIDDEN), jnp.float32)
    bf = scale * jax.random.normal(ks[1], (1, HIDDEN), jnp.float32)
    w1_t = scale * jax.random.normal(ks[2], (HIDDEN, HIDDEN), jnp.float32)
    b1 = scale * jax.random.normal(ks[3], (1, HIDDEN), jnp.float32)
    w2_t = scale * jax.random.normal(ks[4], (HIDDEN, HIDDEN), jnp.float32)
    b2 = scale * jax.random.normal(ks[5], (1, HIDDEN), jnp.float32)
    w3_t = scale * jax.random.normal(ks[6], (HIDDEN, 1), jnp.float32)
    b3 = scale * jax.random.normal(ks[7], (1, 1), jnp.float32)

    # BatchNorm1d (eval mode) params -> scale/shift rows
    def bn_fold(kg, kb, km, kv):
        gamma = 1.0 + 0.1 * jax.random.normal(kg, (HIDDEN,), jnp.float32)
        beta = 0.1 * jax.random.normal(kb, (HIDDEN,), jnp.float32)
        rmean = 0.1 * jax.random.normal(km, (HIDDEN,), jnp.float32)
        rvar = 1.0 + 0.1 * jax.random.uniform(kv, (HIDDEN,), jnp.float32)
        s = gamma / jnp.sqrt(rvar + BN_EPS)
        t = beta - rmean * s
        return s[None, :], t[None, :]

    s1, t1 = bn_fold(ks[8], ks[9], ks[10], ks[11])
    k2 = jax.random.split(ks[11], 4)
    s2, t2 = bn_fold(k2[0], k2[1], k2[2], k2[3])
    return (wf_t, bf, w1_t, b1, s1, t1, w2_t, b2, s2, t2, w3_t, b3)


# ---------------- pure-JAX f32 reference (for correctness check) ----------------
def reference_forward(features, objectness_scores, lang_feat, params):
    (wf_t, bf, w1_t, b1, s1, t1, w2_t, b2, s2, t2, w3_t, b3) = params
    B, K, _ = features.shape
    mask = jnp.argmax(objectness_scores, axis=2).astype(jnp.float32)[:, :, None]
    lang_rep = jnp.broadcast_to(lang_feat[:, None, :], (B, K, LANG_SIZE))
    x = jnp.concatenate([features, lang_rep], axis=-1)
    h = jnp.maximum(x @ wf_t + bf, 0.0) * mask
    h1 = jnp.maximum(h @ w1_t + b1, 0.0) * s1 + t1
    h2 = jnp.maximum(h1 @ w2_t + b2, 0.0) * s2 + t2
    return (h2 @ w3_t + b3)[:, :, 0]


if __name__ == "__main__":
    # TODO(synk): the '3detr' + int_layers / use_chunking branches just re-run the
    # same fuse/match stack on replicated inputs; only the votenet/no-chunking path
    # is exercised here.
    key = jax.random.PRNGKey(0)
    k_feat, k_obj, k_lang, k_param = jax.random.split(key, 4)

    B = 4
    features = jax.random.normal(k_feat, (B, NUM_PROPOSALS, FEAT_SIZE), jnp.float32)
    objectness_scores = jax.random.normal(k_obj, (B, NUM_PROPOSALS, 2), jnp.float32)
    lang_feat = jax.random.normal(k_lang, (B, LANG_SIZE), jnp.float32)
    params = init_params(k_param)

    cluster_ref = jax.jit(match_module_forward)(
        features, objectness_scores, lang_feat, params)
    cluster_ref = jax.block_until_ready(cluster_ref)
    assert cluster_ref.shape == (B, NUM_PROPOSALS)

    ref = reference_forward(features, objectness_scores, lang_feat, params)
    # bf16 MXU operands (f32 accumulation + f32 BN epilogue) vs f32 reference.
    max_err = float(jnp.max(jnp.abs(cluster_ref - ref)))
    assert jnp.allclose(cluster_ref, ref, atol=5e-2, rtol=5e-2), max_err

    print("KERNEL_OK")
</pallas_src>

<mosaic_0001>
module attributes {stable_mosaic.version = 11 : i64} {
  func.func @match_kernel(%arg0: i32, %arg1: memref<4x256x128xf32, #tpu.memory_space<vmem>>, %arg2: memref<4x256x2xf32, #tpu.memory_space<vmem>>, %arg3: memref<4x1x128xf32, #tpu.memory_space<vmem>>, %arg4: memref<128x128xbf16, #tpu.memory_space<vmem>>, %arg5: memref<128x128xbf16, #tpu.memory_space<vmem>>, %arg6: memref<128x128xbf16, #tpu.memory_space<vmem>>, %arg7: memref<1x128xbf16, #tpu.memory_space<vmem>>, %arg8: memref<6x128xf32, #tpu.memory_space<vmem>>, %arg9: memref<1x1xf32, #tpu.memory_space<vmem>>, %arg10: memref<1x1x1024xf32, #tpu.memory_space<vmem>>) attributes {dimension_semantics = [#tpu.dimension_semantics<parallel>], iteration_bounds = array<i64: 1>, scalar_prefetch = 0 : i64, scratch_operands = 0 : i64, tpu.core_type = #tpu.core_type<tc>, window_params = [{transform_indices = @transform_0, window_bounds = array<i64: 4, 256, 128>}, {transform_indices = @transform_1, window_bounds = array<i64: 4, 256, 2>}, {transform_indices = @transform_2, window_bounds = array<i64: 4, 1, 128>}, {pipeline_mode = #tpu.pipeline_mode<synchronous>, transform_indices = @transform_3, window_bounds = array<i64: 128, 128>}, {pipeline_mode = #tpu.pipeline_mode<synchronous>, transform_indices = @transform_4, window_bounds = array<i64: 128, 128>}, {pipeline_mode = #tpu.pipeline_mode<synchronous>, transform_indices = @transform_5, window_bounds = array<i64: 128, 128>}, {pipeline_mode = #tpu.pipeline_mode<synchronous>, transform_indices = @transform_6, window_bounds = array<i64: 1, 128>}, {pipeline_mode = #tpu.pipeline_mode<synchronous>, transform_indices = @transform_7, window_bounds = array<i64: 6, 128>}, {pipeline_mode = #tpu.pipeline_mode<synchronous>, transform_indices = @transform_8, window_bounds = array<i64: 1, 1>}, {transform_indices = @transform_9, window_bounds = array<i64: 1, 1, 1024>}]} {
    %c0 = arith.constant 0 : index
    %c0_0 = arith.constant 0 : index
    %0 = vector.load %arg8[%c0, %c0_0] : memref<6x128xf32, #tpu.memory_space<vmem>>, vector<1x128xf32>
    %c1 = arith.constant 1 : index
    %c0_1 = arith.constant 0 : index
    %1 = vector.load %arg8[%c1, %c0_1] : memref<6x128xf32, #tpu.memory_space<vmem>>, vector<1x128xf32>
    %c2 = arith.constant 2 : index
    %c0_2 = arith.constant 0 : index
    %2 = vector.load %arg8[%c2, %c0_2] : memref<6x128xf32, #tpu.memory_space<vmem>>, vector<1x128xf32>
    %c3 = arith.constant 3 : index
    %c0_3 = arith.constant 0 : index
    %3 = vector.load %arg8[%c3, %c0_3] : memref<6x128xf32, #tpu.memory_space<vmem>>, vector<1x128xf32>
    %c4 = arith.constant 4 : index
    %c0_4 = arith.constant 0 : index
    %4 = vector.load %arg8[%c4, %c0_4] : memref<6x128xf32, #tpu.memory_space<vmem>>, vector<1x128xf32>
    %c5 = arith.constant 5 : index
    %c0_5 = arith.constant 0 : index
    %5 = vector.load %arg8[%c5, %c0_5] : memref<6x128xf32, #tpu.memory_space<vmem>>, vector<1x128xf32>
    %c0_6 = arith.constant 0 : index
    %c0_7 = arith.constant 0 : index
    %c0_8 = arith.constant 0 : index
    %6 = vector.load %arg1[%c0_6, %c0_7, %c0_8] : memref<4x256x128xf32, #tpu.memory_space<vmem>>, vector<4x256x128xf32>
    %7 = arith.truncf %6 : vector<4x256x128xf32> to vector<4x256x128xbf16>
    %8 = vector.shape_cast %7 : vector<4x256x128xbf16> to vector<1024x128xbf16>
    %c0_9 = arith.constant 0 : index
    %c0_10 = arith.constant 0 : index
    %9 = vector.load %arg4[%c0_9, %c0_10] : memref<128x128xbf16, #tpu.memory_space<vmem>>, vector<128x128xbf16>
    %cst = arith.constant dense<0.000000e+00> : vector<1024x128xf32>
    %10 = tpu.matmul %8, %9, %cst {dimension_numbers = #tpu.dot_dimension_numbers<[1], [0], [0], [1], [0, 0, 1, 1], [], []>} : vector<1024x128xbf16>, vector<128x128xbf16>, vector<1024x128xf32> -> vector<1024x128xf32>
    %11 = vector.shape_cast %10 : vector<1024x128xf32> to vector<4x256x128xf32>
    %c0_11 = arith.constant 0 : index
    %c0_12 = arith.constant 0 : index
    %c0_13 = arith.constant 0 : index
    %12 = vector.load %arg3[%c0_11, %c0_12, %c0_13] : memref<4x1x128xf32, #tpu.memory_space<vmem>>, vector<4x1x128xf32>
    %13 = vector.broadcast %12 : vector<4x1x128xf32> to vector<4x256x128xf32>
    %14 = arith.addf %11, %13 : vector<4x256x128xf32>
    %c0_14 = arith.constant 0 : index
    %c0_15 = arith.constant 0 : index
    %c0_16 = arith.constant 0 : index
    %15 = vector.load %arg2[%c0_14, %c0_15, %c0_16] : memref<4x256x2xf32, #tpu.memory_space<vmem>>, vector<4x256x2xf32>
    %16 = vector.extract_strided_slice %15 {offsets = [0, 0, 1], sizes = [4, 256, 1], strides = [1, 1, 1]} : vector<4x256x2xf32> to vector<4x256x1xf32>
    %17 = vector.extract_strided_slice %15 {offsets = [0, 0, 0], sizes = [4, 256, 1], strides = [1, 1, 1]} : vector<4x256x2xf32> to vector<4x256x1xf32>
    %18 = arith.cmpf ogt, %16, %17 : vector<4x256x1xf32>
    %19 = arith.extui %18 : vector<4x256x1xi1> to vector<4x256x1xi32>
    %20 = arith.sitofp %19 : vector<4x256x1xi32> to vector<4x256x1xf32>
    %cst_17 = arith.constant 0.000000e+00 : f32
    %21 = vector.broadcast %cst_17 : f32 to vector<4x256x128xf32>
    %22 = arith.maximumf %14, %21 : vector<4x256x128xf32>
    %23 = vector.broadcast %20 : vector<4x256x1xf32> to vector<4x256x128xf32>
    %24 = arith.mulf %22, %23 : vector<4x256x128xf32>
    %25 = vector.shape_cast %24 : vector<4x256x128xf32> to vector<1024x128xf32>
    %26 = arith.truncf %25 : vector<1024x128xf32> to vector<1024x128xbf16>
    %c0_18 = arith.constant 0 : index
    %c0_19 = arith.constant 0 : index
    %27 = vector.load %arg5[%c0_18, %c0_19] : memref<128x128xbf16, #tpu.memory_space<vmem>>, vector<128x128xbf16>
    %cst_20 = arith.constant dense<0.000000e+00> : vector<1024x128xf32>
    %28 = tpu.matmul %26, %27, %cst_20 {dimension_numbers = #tpu.dot_dimension_numbers<[1], [0], [0], [1], [0, 0, 1, 1], [], []>} : vector<1024x128xbf16>, vector<128x128xbf16>, vector<1024x128xf32> -> vector<1024x128xf32>
    %29 = vector.broadcast %0 : vector<1x128xf32> to vector<1024x128xf32>
    %30 = arith.addf %28, %29 : vector<1024x128xf32>
    %cst_21 = arith.constant 0.000000e+00 : f32
    %31 = vector.broadcast %cst_21 : f32 to vector<1024x128xf32>
    %32 = arith.maximumf %30, %31 : vector<1024x128xf32>
    %33 = vector.broadcast %1 : vector<1x128xf32> to vector<1024x128xf32>
    %34 = arith.mulf %32, %33 : vector<1024x128xf32>
    %35 = vector.broadcast %2 : vector<1x128xf32> to vector<1024x128xf32>
    %36 = arith.addf %34, %35 : vector<1024x128xf32>
    %37 = arith.truncf %36 : vector<1024x128xf32> to vector<1024x128xbf16>
    %c0_22 = arith.constant 0 : index
    %c0_23 = arith.constant 0 : index
    %38 = vector.load %arg6[%c0_22, %c0_23] : memref<128x128xbf16, #tpu.memory_space<vmem>>, vector<128x128xbf16>
    %cst_24 = arith.constant dense<0.000000e+00> : vector<1024x128xf32>
    %39 = tpu.matmul %37, %38, %cst_24 {dimension_numbers = #tpu.dot_dimension_numbers<[1], [0], [0], [1], [0, 0, 1, 1], [], []>} : vector<1024x128xbf16>, vector<128x128xbf16>, vector<1024x128xf32> -> vector<1024x128xf32>
    %40 = vector.broadcast %3 : vector<1x128xf32> to vector<1024x128xf32>
    %41 = arith.addf %39, %40 : vector<1024x128xf32>
    %cst_25 = arith.constant 0.000000e+00 : f32
    %42 = vector.broadcast %cst_25 : f32 to vector<1024x128xf32>
    %43 = arith.maximumf %41, %42 : vector<1024x128xf32>
    %44 = vector.broadcast %4 : vector<1x128xf32> to vector<1024x128xf32>
    %45 = arith.mulf %43, %44 : vector<1024x128xf32>
    %46 = vector.broadcast %5 : vector<1x128xf32> to vector<1024x128xf32>
    %47 = arith.addf %45, %46 : vector<1024x128xf32>
    %c0_26 = arith.constant 0 : index
    %c0_27 = arith.constant 0 : index
    %48 = vector.load %arg7[%c0_26, %c0_27] : memref<1x128xbf16, #tpu.memory_space<vmem>>, vector<1x128xbf16>
    %49 = arith.truncf %47 : vector<1024x128xf32> to vector<1024x128xbf16>
    %cst_28 = arith.constant dense<0.000000e+00> : vector<1x1024xf32>
    %50 = tpu.matmul %48, %49, %cst_28 {dimension_numbers = #tpu.dot_dimension_numbers<[1], [1], [0], [0], [0, 0, 1, 0], [], []>} : vector<1x128xbf16>, vector<1024x128xbf16>, vector<1x1024xf32> -> vector<1x1024xf32>
    %c0_29 = arith.constant 0 : index
    %c0_30 = arith.constant 0 : index
    %51 = vector.load %arg9[%c0_29, %c0_30] : memref<1x1xf32, #tpu.memory_space<vmem>>, vector<1x1xf32>
    %52 = vector.broadcast %51 : vector<1x1xf32> to vector<1x1024xf32>
    %53 = arith.addf %50, %52 : vector<1x1024xf32>
    %54 = vector.shape_cast %53 : vector<1x1024xf32> to vector<1x1x1024xf32>
    %c0_31 = arith.constant 0 : index
    %c0_32 = arith.constant 0 : index
    %c0_33 = arith.constant 0 : index
    %55 = vector.load %arg10[%c0_31, %c0_32, %c0_33] : memref<1x1x1024xf32, #tpu.memory_space<vmem>>, vector<1x1x1024xf32>
    tpu.vector_store %arg10[%c0_31, %c0_32, %c0_33], %54 {strides = array<i32>} : memref<1x1x1024xf32, #tpu.memory_space<vmem>>, vector<1x1x1024xf32>,
    return
  }
  func.func @transform_0(%arg0: i32) -> (i32, i32, i32) {
    %c0_i32 = arith.constant 0 : i32
    %c0_i32_0 = arith.constant 0 : i32
    %c0_i32_1 = arith.constant 0 : i32
    return %arg0, %c0_i32, %c0_i32_0 : i32, i32, i32
  }
  func.func @transform_1(%arg0: i32) -> (i32, i32, i32) {
    %c0_i32 = arith.constant 0 : i32
    %c0_i32_0 = arith.constant 0 : i32
    %c0_i32_1 = arith.constant 0 : i32
    return %arg0, %c0_i32, %c0_i32_0 : i32, i32, i32
  }
  func.func @transform_2(%arg0: i32) -> (i32, i32, i32) {
    %c0_i32 = arith.constant 0 : i32
    %c0_i32_0 = arith.constant 0 : i32
    %c0_i32_1 = arith.constant 0 : i32
    return %arg0, %c0_i32, %c0_i32_0 : i32, i32, i32
  }
  func.func @transform_3(%arg0: i32) -> (i32, i32) {
    %c0_i32 = arith.constant 0 : i32
    %c0_i32_0 = arith.constant 0 : i32
    %c0_i32_1 = arith.constant 0 : i32
    return %c0_i32, %c0_i32_0 : i32, i32
  }
  func.func @transform_4(%arg0: i32) -> (i32, i32) {
    %c0_i32 = arith.constant 0 : i32
    %c0_i32_0 = arith.constant 0 : i32
    %c0_i32_1 = arith.constant 0 : i32
    return %c0_i32, %c0_i32_0 : i32, i32
  }
  func.func @transform_5(%arg0: i32) -> (i32, i32) {
    %c0_i32 = arith.constant 0 : i32
    %c0_i32_0 = arith.constant 0 : i32
    %c0_i32_1 = arith.constant 0 : i32
    return %c0_i32, %c0_i32_0 : i32, i32
  }
  func.func @transform_6(%arg0: i32) -> (i32, i32) {
    %c0_i32 = arith.constant 0 : i32
    %c0_i32_0 = arith.constant 0 : i32
    %c0_i32_1 = arith.constant 0 : i32
    return %c0_i32, %c0_i32_0 : i32, i32
  }
  func.func @transform_7(%arg0: i32) -> (i32, i32) {
    %c0_i32 = arith.constant 0 : i32
    %c0_i32_0 = arith.constant 0 : i32
    %c0_i32_1 = arith.constant 0 : i32
    return %c0_i32, %c0_i32_0 : i32, i32
  }
  func.func @transform_8(%arg0: i32) -> (i32, i32) {
    %c0_i32 = arith.constant 0 : i32
    %c0_i32_0 = arith.constant 0 : i32
    %c0_i32_1 = arith.constant 0 : i32
    return %c0_i32, %c0_i32_0 : i32, i32
  }
  func.func @transform_9(%arg0: i32) -> (i32, i32, i32) {
    %c0_i32 = arith.constant 0 : i32
    %c0_i32_0 = arith.constant 0 : i32
    %c0_i32_1 = arith.constant 0 : i32
    return %arg0, %c0_i32, %c0_i32_0 : i32, i32, i32
  }
}

</mosaic_0001>

<llo_original>
// kernel: match_module_forward.1
$region0: #{match_module_forward.1}
  #allocation0 [shape = 'u32[]', space=smem, size = 0x4, offset = 0x4, fixed_abs, tag = 'smem constant byte address 0x4 - core index']
  #allocation1 [shape = 'u32[144,128]{1,0:T(1,128)}', space=vmem, size = 0x12000, scoped, tag = 'internal scratch']
  #allocation2 [shape = 'f32[1,1]{1,0:T(1,128)S(1)}', space=vmem, size = 0x200, scoped, tag = 'scoped memory for match_module_forward.1']
  %s0 = inlined_call_operand.vmem [shape: f32[4,256,128], index: 0, kind: input, shape index: {}]
  %s1 = inlined_call_operand.vmem [shape: f32[4,256,2], index: 1, kind: input, shape index: {}]
  %s2 = inlined_call_operand.vmem [shape: f32[4,1,128], index: 2, kind: input, shape index: {}]
  %s3 = inlined_call_operand.vmem [shape: bf16[128,128], index: 3, kind: input, shape index: {}]
  %s4 = inlined_call_operand.vmem [shape: bf16[128,128], index: 4, kind: input, shape index: {}]
  %s5 = inlined_call_operand.vmem [shape: bf16[128,128], index: 5, kind: input, shape index: {}]
  %s6 = inlined_call_operand.vmem [shape: bf16[1,128], index: 6, kind: input, shape index: {}]
  %s7 = inlined_call_operand.vmem [shape: f32[6,128], index: 7, kind: input, shape index: {}]
  %s8 = inlined_call_operand.<no memory space> [shape: f32[1,1], index: 8, kind: input, shape index: {}]
  %s9 = inlined_call_operand.vmem [shape: f32[1,1,1024], index: 9, kind: output, shape index: {}]
  %s10 = sld [smem:[#allocation0]]
  $region46: #{match_module_forward.1} parent=0
    _
  %s12 = ssub.s32 1, %s10
  %s13 = scalar_select 0, %s12, %s10
  %v14 = vstv %s8
  %15 = vst [vmem:[#allocation2] sm:$0x1] %v14
  // Predicated region
  $region2: #{match_module_forward.1} parent=0 // pred_check
    _
  $region3: #{match_module_forward.1} parent=0 // pred_check_branch
    %17 = sbr.rel (0) target = $region5
  $region4: #{match_module_forward.1} parent=0 // pred_region
    _
  $region5: #{match_module_forward.1} parent=0 // pred_fallthru
    _
  // Predicated region
  $region6: #{match_module_forward.1} parent=0 // pred_check
    _
  $region7: #{match_module_forward.1} parent=0 // pred_check_branch
    %19 = sbr.rel (0) target = $region9
  $region8: #{match_module_forward.1} parent=0 // pred_region
    _
  $region9: #{match_module_forward.1} parent=0 // pred_fallthru
    _
  // Predicated region
  $region10: #{match_module_forward.1} parent=0 // pred_check
    _
  $region11: #{match_module_forward.1} parent=0 // pred_check_branch
    %21 = sbr.rel (0) target = $region13
  $region12: #{match_module_forward.1} parent=0 // pred_region
    _
  $region13: #{match_module_forward.1} parent=0 // pred_fallthru
    _
  // Predicated region
  $region14: #{match_module_forward.1} parent=0 // pred_check
    _
  $region15: #{match_module_forward.1} parent=0 // pred_check_branch
    %23 = sbr.rel (0) target = $region17
  $region16: #{match_module_forward.1} parent=0 // pred_region
    _
  $region17: #{match_module_forward.1} parent=0 // pred_fallthru
    _
  // Predicated region
  $region18: #{match_module_forward.1} parent=0 // pred_check
    _
  $region19: #{match_module_forward.1} parent=0 // pred_check_branch
    %25 = sbr.rel (0) target = $region21
  $region20: #{match_module_forward.1} parent=0 // pred_region
    _
  $region21: #{match_module_forward.1} parent=0 // pred_fallthru
    _
  // Predicated region
  $region22: #{match_module_forward.1} parent=0 // pred_check
    _
  $region23: #{match_module_forward.1} parent=0 // pred_check_branch
    %27 = sbr.rel (0) target = $region25
  $region24: #{match_module_forward.1} parent=0 // pred_region
    _
  $region25: #{match_module_forward.1} parent=0 // pred_fallthru
    _
  // Predicated region
  $region26: #{match_module_forward.1} parent=0 // pred_check
    _
  $region27: #{match_module_forward.1} parent=0 // pred_check_branch
    %29 = sbr.rel (0) target = $region29
  $region28: #{match_module_forward.1} parent=0 // pred_region
    _
  $region29: #{match_module_forward.1} parent=0 // pred_fallthru
    _
  // Predicated region
  $region30: #{match_module_forward.1} parent=0 // pred_check
    _
  $region31: #{match_module_forward.1} parent=0 // pred_check_branch
    %31 = sbr.rel (0) target = $region33
  $region32: #{match_module_forward.1} parent=0 // pred_region
    _
  $region33: #{match_module_forward.1} parent=0 // pred_fallthru
    _
  // Predicated region
  $region34: #{match_module_forward.1} parent=0 // pred_check
    _
  $region35: #{match_module_forward.1} parent=0 // pred_check_branch
    %33 = sbr.rel (0) target = $region37
  $region36: #{match_module_forward.1} parent=0 // pred_region
    _
  $region37: #{match_module_forward.1} parent=0 // pred_fallthru
    _
  %v35 = vld [vmem:[%s7] sm:$0x1]
  %v36 = vld [vmem:[%s7 + $0x1] sm:$0x1]
  %v37 = vld [vmem:[%s7 + $0x2] sm:$0x1]
  %v38 = vld [vmem:[%s7 + $0x3] sm:$0x1]
  %v39 = vld [vmem:[%s7 + $0x4] sm:$0x1]
  %v40 = vld [vmem:[%s7 + $0x5] sm:$0x1]
  %v41 = vld [vmem:[%s0] sm:$0xff]
  %v42 = vld [vmem:[%s0 + $0x8] sm:$0xff]
  %v43 = vld [vmem:[%s0 + $0x10] sm:$0xff]
  %v44 = vld [vmem:[%s0 + $0x18] sm:$0xff]
  %v45 = vld [vmem:[%s0 + $0x20] sm:$0xff]
  %v46 = vld [vmem:[%s0 + $0x28] sm:$0xff]
  %v47 = vld [vmem:[%s0 + $0x30] sm:$0xff]
  %v48 = vld [vmem:[%s0 + $0x38] sm:$0xff]
  %v49 = vld [vmem:[%s0 + $0x40] sm:$0xff]
  %v50 = vld [vmem:[%s0 + $0x48] sm:$0xff]
  %v51 = vld [vmem:[%s0 + $0x50] sm:$0xff]
  %v52 = vld [vmem:[%s0 + $0x58] sm:$0xff]
  %v53 = vld [vmem:[%s0 + $0x60] sm:$0xff]
  %v54 = vld [vmem:[%s0 + $0x68] sm:$0xff]
  %v55 = vld [vmem:[%s0 + $0x70] sm:$0xff]
  %v56 = vld [vmem:[%s0 + $0x78] sm:$0xff]
  %v57 = vld [vmem:[%s0 + $0x80] sm:$0xff]
  %v58 = vld [vmem:[%s0 + $0x88] sm:$0xff]
  %v59 = vld [vmem:[%s0 + $0x90] sm:$0xff]
  %v60 = vld [vmem:[%s0 + $0x98] sm:$0xff]
  %v61 = vld [vmem:[%s0 + $0xa0] sm:$0xff]
  %v62 = vld [vmem:[%s0 + $0xa8] sm:$0xff]
  %v63 = vld [vmem:[%s0 + $0xb0] sm:$0xff]
  %v64 = vld [vmem:[%s0 + $0xb8] sm:$0xff]
  %v65 = vld [vmem:[%s0 + $0xc0] sm:$0xff]
  %v66 = vld [vmem:[%s0 + $0xc8] sm:$0xff]
  %v67 = vld [vmem:[%s0 + $0xd0] sm:$0xff]
  %v68 = vld [vmem:[%s0 + $0xd8] sm:$0xff]
  %v69 = vld [vmem:[%s0 + $0xe0] sm:$0xff]
  %v70 = vld [vmem:[%s0 + $0xe8] sm:$0xff]
  %v71 = vld [vmem:[%s0 + $0xf0] sm:$0xff]
  %v72 = vld [vmem:[%s0 + $0xf8] sm:$0xff]
  %v73 = vld [vmem:[%s0 + $0x100] sm:$0xff]
  %v74 = vld [vmem:[%s0 + $0x108] sm:$0xff]
  %v75 = vld [vmem:[%s0 + $0x110] sm:$0xff]
  %v76 = vld [vmem:[%s0 + $0x118] sm:$0xff]
  %v77 = vld [vmem:[%s0 + $0x120] sm:$0xff]
  %v78 = vld [vmem:[%s0 + $0x128] sm:$0xff]
  %v79 = vld [vmem:[%s0 + $0x130] sm:$0xff]
  %v80 = vld [vmem:[%s0 + $0x138] sm:$0xff]
  %v81 = vld [vmem:[%s0 + $0x140] sm:$0xff]
  %v82 = vld [vmem:[%s0 + $0x148] sm:$0xff]
  %v83 = vld [vmem:[%s0 + $0x150] sm:$0xff]
  %v84 = vld [vmem:[%s0 + $0x158] sm:$0xff]
  %v85 = vld [vmem:[%s0 + $0x160] sm:$0xff]
  %v86 = vld [vmem:[%s0 + $0x168] sm:$0xff]
  %v87 = vld [vmem:[%s0 + $0x170] sm:$0xff]
  %v88 = vld [vmem:[%s0 + $0x178] sm:$0xff]
  %v89 = vld [vmem:[%s0 + $0x180] sm:$0xff]
  %v90 = vld [vmem:[%s0 + $0x188] sm:$0xff]
  %v91 = vld [vmem:[%s0 + $0x190] sm:$0xff]
  %v92 = vld [vmem:[%s0 + $0x198] sm:$0xff]
  %v93 = vld [vmem:[%s0 + $0x1a0] sm:$0xff]
  %v94 = vld [vmem:[%s0 + $0x1a8] sm:$0xff]
  %v95 = vld [vmem:[%s0 + $0x1b0] sm:$0xff]
  %v96 = vld [vmem:[%s0 + $0x1b8] sm:$0xff]
  %v97 = vld [vmem:[%s0 + $0x1c0] sm:$0xff]
  %v98 = vld [vmem:[%s0 + $0x1c8] sm:$0xff]
  %v99 = vld [vmem:[%s0 + $0x1d0] sm:$0xff]
  %v100 = vld [vmem:[%s0 + $0x1d8] sm:$0xff]
  %v101 = vld [vmem:[%s0 + $0x1e0] sm:$0xff]
  %v102 = vld [vmem:[%s0 + $0x1e8] sm:$0xff]
  %v103 = vld [vmem:[%s0 + $0x1f0] sm:$0xff]
  %v104 = vld [vmem:[%s0 + $0x1f8] sm:$0xff]
  %v105 = vld [vmem:[%s0 + $0x200] sm:$0xff]
  %v106 = vld [vmem:[%s0 + $0x208] sm:$0xff]
  %v107 = vld [vmem:[%s0 + $0x210] sm:$0xff]
  %v108 = vld [vmem:[%s0 + $0x218] sm:$0xff]
  %v109 = vld [vmem:[%s0 + $0x220] sm:$0xff]
  %v110 = vld [vmem:[%s0 + $0x228] sm:$0xff]
  %v111 = vld [vmem:[%s0 + $0x230] sm:$0xff]
  %v112 = vld [vmem:[%s0 + $0x238] sm:$0xff]
  %v113 = vld [vmem:[%s0 + $0x240] sm:$0xff]
  %v114 = vld [vmem:[%s0 + $0x248] sm:$0xff]
  %v115 = vld [vmem:[%s0 + $0x250] sm:$0xff]
  %v116 = vld [vmem:[%s0 + $0x258] sm:$0xff]
  %v117 = vld [vmem:[%s0 + $0x260] sm:$0xff]
  %v118 = vld [vmem:[%s0 + $0x268] sm:$0xff]
  %v119 = vld [vmem:[%s0 + $0x270] sm:$0xff]
  %v120 = vld [vmem:[%s0 + $0x278] sm:$0xff]
  %v121 = vld [vmem:[%s0 + $0x280] sm:$0xff]
  %v122 = vld [vmem:[%s0 + $0x288] sm:$0xff]
  %v123 = vld [vmem:[%s0 + $0x290] sm:$0xff]
  %v124 = vld [vmem:[%s0 + $0x298] sm:$0xff]
  %v125 = vld [vmem:[%s0 + $0x2a0] sm:$0xff]
  %v126 = vld [vmem:[%s0 + $0x2a8] sm:$0xff]
  %v127 = vld [vmem:[%s0 + $0x2b0] sm:$0xff]
  %v128 = vld [vmem:[%s0 + $0x2b8] sm:$0xff]
  %v129 = vld [vmem:[%s0 + $0x2c0] sm:$0xff]
  %v130 = vld [vmem:[%s0 + $0x2c8] sm:$0xff]
  %v131 = vld [vmem:[%s0 + $0x2d0] sm:$0xff]
  %v132 = vld [vmem:[%s0 + $0x2d8] sm:$0xff]
  %v133 = vld [vmem:[%s0 + $0x2e0] sm:$0xff]
  %v134 = vld [vmem:[%s0 + $0x2e8] sm:$0xff]
  %v135 = vld [vmem:[%s0 + $0x2f0] sm:$0xff]
  %v136 = vld [vmem:[%s0 + $0x2f8] sm:$0xff]
  %v137 = vld [vmem:[%s0 + $0x300] sm:$0xff]
  %v138 = vld [vmem:[%s0 + $0x308] sm:$0xff]
  %v139 = vld [vmem:[%s0 + $0x310] sm:$0xff]
  %v140 = vld [vmem:[%s0 + $0x318] sm:$0xff]
  %v141 = vld [vmem:[%s0 + $0x320] sm:$0xff]
  %v142 = vld [vmem:[%s0 + $0x328] sm:$0xff]
  %v143 = vld [vmem:[%s0 + $0x330] sm:$0xff]
  %v144 = vld [vmem:[%s0 + $0x338] sm:$0xff]
  %v145 = vld [vmem:[%s0 + $0x340] sm:$0xff]
  %v146 = vld [vmem:[%s0 + $0x348] sm:$0xff]
  %v147 = vld [vmem:[%s0 + $0x350] sm:$0xff]
  %v148 = vld [vmem:[%s0 + $0x358] sm:$0xff]
  %v149 = vld [vmem:[%s0 + $0x360] sm:$0xff]
  %v150 = vld [vmem:[%s0 + $0x368] sm:$0xff]
  %v151 = vld [vmem:[%s0 + $0x370] sm:$0xff]
  %v152 = vld [vmem:[%s0 + $0x378] sm:$0xff]
  %v153 = vld [vmem:[%s0 + $0x380] sm:$0xff]
  %v154 = vld [vmem:[%s0 + $0x388] sm:$0xff]
  %v155 = vld [vmem:[%s0 + $0x390] sm:$0xff]
  %v156 = vld [vmem:[%s0 + $0x398] sm:$0xff]
  %v157 = vld [vmem:[%s0 + $0x3a0] sm:$0xff]
  %v158 = vld [vmem:[%s0 + $0x3a8] sm:$0xff]
  %v159 = vld [vmem:[%s0 + $0x3b0] sm:$0xff]
  %v160 = vld [vmem:[%s0 + $0x3b8] sm:$0xff]
  %v161 = vld [vmem:[%s0 + $0x3c0] sm:$0xff]
  %v162 = vld [vmem:[%s0 + $0x3c8] sm:$0xff]
  %v163 = vld [vmem:[%s0 + $0x3d0] sm:$0xff]
  %v164 = vld [vmem:[%s0 + $0x3d8] sm:$0xff]
  %v165 = vld [vmem:[%s0 + $0x3e0] sm:$0xff]
  %v166 = vld [vmem:[%s0 + $0x3e8] sm:$0xff]
  %v167 = vld [vmem:[%s0 + $0x3f0] sm:$0xff]
  %v168 = vld [vmem:[%s0 + $0x3f8] sm:$0xff]
  %v169 = vpack.c.bf16 %v42, %v41
  %v170 = vpack.c.bf16 %v44, %v43
  %v171 = vpack.c.bf16 %v46, %v45
  %v172 = vpack.c.bf16 %v48, %v47
  %v173 = vpack.c.bf16 %v50, %v49
  %v174 = vpack.c.bf16 %v52, %v51
  %v175 = vpack.c.bf16 %v54, %v53
  %v176 = vpack.c.bf16 %v56, %v55
  %v177 = vpack.c.bf16 %v58, %v57
  %v178 = vpack.c.bf16 %v60, %v59
  %v179 = vpack.c.bf16 %v62, %v61
  %v180 = vpack.c.bf16 %v64, %v63
  %v181 = vpack.c.bf16 %v66, %v65
  %v182 = vpack.c.bf16 %v68, %v67
  %v183 = vpack.c.bf16 %v70, %v69
  %v184 = vpack.c.bf16 %v72, %v71
  %v185 = vpack.c.bf16 %v74, %v73
  %v186 = vpack.c.bf16 %v76, %v75
  %v187 = vpack.c.bf16 %v78, %v77
  %v188 = vpack.c.bf16 %v80, %v79
  %v189 = vpack.c.bf16 %v82, %v81
  %v190 = vpack.c.bf16 %v84, %v83
  %v191 = vpack.c.bf16 %v86, %v85
  %v192 = vpack.c.bf16 %v88, %v87
  %v193 = vpack.c.bf16 %v90, %v89
  %v194 = vpack.c.bf16 %v92, %v91
  %v195 = vpack.c.bf16 %v94, %v93
  %v196 = vpack.c.bf16 %v96, %v95
  %v197 = vpack.c.bf16 %v98, %v97
  %v198 = vpack.c.bf16 %v100, %v99
  %v199 = vpack.c.bf16 %v102, %v101
  %v200 = vpack.c.bf16 %v104, %v103
  %v201 = vpack.c.bf16 %v106, %v105
  %v202 = vpack.c.bf16 %v108, %v107
  %v203 = vpack.c.bf16 %v110, %v109
  %v204 = vpack.c.bf16 %v112, %v111
  %v205 = vpack.c.bf16 %v114, %v113
  %v206 = vpack.c.bf16 %v116, %v115
  %v207 = vpack.c.bf16 %v118, %v117
  %v208 = vpack.c.bf16 %v120, %v119
  %v209 = vpack.c.bf16 %v122, %v121
  %v210 = vpack.c.bf16 %v124, %v123
  %v211 = vpack.c.bf16 %v126, %v125
  %v212 = vpack.c.bf16 %v128, %v127
  %v213 = vpack.c.bf16 %v130, %v129
  %v214 = vpack.c.bf16 %v132, %v131
  %v215 = vpack.c.bf16 %v134, %v133
  %v216 = vpack.c.bf16 %v136, %v135
  %v217 = vpack.c.bf16 %v138, %v137
  %v218 = vpack.c.bf16 %v140, %v139
  %v219 = vpack.c.bf16 %v142, %v141
  %v220 = vpack.c.bf16 %v144, %v143
  %v221 = vpack.c.bf16 %v146, %v145
  %v222 = vpack.c.bf16 %v148, %v147
  %v223 = vpack.c.bf16 %v150, %v149
  %v224 = vpack.c.bf16 %v152, %v151
  %v225 = vpack.c.bf16 %v154, %v153
  %v226 = vpack.c.bf16 %v156, %v155
  %v227 = vpack.c.bf16 %v158, %v157
  %v228 = vpack.c.bf16 %v160, %v159
  %v229 = vpack.c.bf16 %v162, %v161
  %v230 = vpack.c.bf16 %v164, %v163
  %v231 = vpack.c.bf16 %v166, %v165
  %v232 = vpack.c.bf16 %v168, %v167
  %v233 = vld [vmem:[%s3] sm:$0xf]
  %v234 = vld [vmem:[%s3 + $0x4] sm:$0xf]
  %v235 = vld [vmem:[%s3 + $0x8] sm:$0xf]
  %v236 = vld [vmem:[%s3 + $0xc] sm:$0xf]
  %v237 = vld [vmem:[%s3 + $0x10] sm:$0xf]
  %v238 = vld [vmem:[%s3 + $0x14] sm:$0xf]
  %v239 = vld [vmem:[%s3 + $0x18] sm:$0xf]
  %v240 = vld [vmem:[%s3 + $0x1c] sm:$0xf]
  %v241 = vld [vmem:[%s3 + $0x20] sm:$0xf]
  %v242 = vld [vmem:[%s3 + $0x24] sm:$0xf]
  %v243 = vld [vmem:[%s3 + $0x28] sm:$0xf]
  %v244 = vld [vmem:[%s3 + $0x2c] sm:$0xf]
  %v245 = vld [vmem:[%s3 + $0x30] sm:$0xf]
  %v246 = vld [vmem:[%s3 + $0x34] sm:$0xf]
  %v247 = vld [vmem:[%s3 + $0x38] sm:$0xf]
  %v248 = vld [vmem:[%s3 + $0x3c] sm:$0xf]
  %v265 = vunpack.c.l.b16 %v233
  %v266 = vunpack.c.l.b16 %v234
  %v267 = vunpack.c.l.b16 %v235
  %v268 = vunpack.c.l.b16 %v236
  %v269 = vunpack.c.l.b16 %v237
  %v270 = vunpack.c.l.b16 %v238
  %v271 = vunpack.c.l.b16 %v239
  %v272 = vunpack.c.l.b16 %v240
  %v273 = vunpack.c.l.b16 %v241
  %v274 = vunpack.c.l.b16 %v242
  %v275 = vunpack.c.l.b16 %v243
  %v276 = vunpack.c.l.b16 %v244
  %v277 = vunpack.c.l.b16 %v245
  %v278 = vunpack.c.l.b16 %v246
  %v279 = vunpack.c.l.b16 %v247
  %v280 = vunpack.c.l.b16 %v248
  %v281 = vpack.c.b16 %v266, %v265
  %v282 = vpack.c.b16 %v268, %v267
  %v283 = vpack.c.b16 %v270, %v269
  %v284 = vpack.c.b16 %v272, %v271
  %v285 = vpack.c.b16 %v274, %v273
  %v286 = vpack.c.b16 %v276, %v275
  %v287 = vpack.c.b16 %v278, %v277
  %v288 = vpack.c.b16 %v280, %v279
  %297 = vmatprep.subr.bf16.mxu0 0
  %298 = vmatpush1.bf16.msra.mxu0 %v281
  %299 = vmatprep.subr.bf16.mxu0 0
  %300 = vmatpush1.bf16.msra.mxu0 %v282
  %301 = vmatprep.subr.bf16.mxu0 0
  %302 = vmatpush1.bf16.msra.mxu0 %v283
  %303 = vmatprep.subr.bf16.mxu0 0
  %304 = vmatpush1.bf16.msra.mxu0 %v284
  %305 = vmatprep.subr.bf16.mxu0 0
  %306 = vmatpush1.bf16.msra.mxu0 %v285
  %307 = vmatprep.subr.bf16.mxu0 0
  %308 = vmatpush1.bf16.msra.mxu0 %v286
  %309 = vmatprep.subr.bf16.mxu0 0
  %310 = vmatpush1.bf16.msra.mxu0 %v287
  %311 = vmatprep.subr.bf16.mxu0 0
  %312 = vmatpush1.bf16.msra.mxu0 %v288
  %313 = vmatprep.subr.bf16.mxu0 0
  %314 = vmatpush1.bf16.msra.mxu0 0
  %315 = vmatprep.subr.bf16.mxu0 0
  %316 = vmatpush1.bf16.msra.mxu0 0
  %317 = vmatprep.subr.bf16.mxu0 0
  %318 = vmatpush1.bf16.msra.mxu0 0
  %319 = vmatprep.subr.bf16.mxu0 0
  %320 = vmatpush1.bf16.msra.mxu0 0
  %321 = vmatprep.subr.bf16.mxu0 0
  %322 = vmatpush1.bf16.msra.mxu0 0
  %323 = vmatprep.subr.bf16.mxu0 0
  %324 = vmatpush1.bf16.msra.mxu0 0
  %325 = vmatprep.subr.bf16.mxu0 0
  %326 = vmatpush1.bf16.msra.mxu0 0
  %327 = vmatprep.subr.bf16.mxu0 0
  %328 = vmatpush1.bf16.msra.mxu0 0
  %329 = vmatprep.mubr.bf16.mxu0 0
  %330 = vmatmul.mubr.bf16.gmra.mrb[0].mxu0 %v169
  %v331 = vpop.f32.mrb[0].mxu0
  %v332 = vadd.f32 0.0, %v331
  %v333 = vpop.f32.mrb[0].mxu0
  %v334 = vpop.f32.mrb[0].mxu0
  %v335 = vadd.f32 0.0, %v334
  %v336 = vpop.f32.mrb[0].mxu0
  %337 = vmatprep.mubr.bf16.mxu0 0
  %338 = vmatmul.mubr.bf16.gmra.mrb[0].mxu0 %v170
  %v339 = vpop.f32.mrb[0].mxu0
  %v340 = vadd.f32 0.0, %v339
  %v341 = vpop.f32.mrb[0].mxu0
  %v342 = vpop.f32.mrb[0].mxu0
  %v343 = vadd.f32 0.0, %v342
  %v344 = vpop.f32.mrb[0].mxu0
  %345 = vmatprep.mubr.bf16.mxu0 0
  %346 = vmatmul.mubr.bf16.gmra.mrb[0].mxu0 %v171
  %v347 = vpop.f32.mrb[0].mxu0
  %v348 = vadd.f32 0.0, %v347
  %v349 = vpop.f32.mrb[0].mxu0
  %v350 = vpop.f32.mrb[0].mxu0
  %v351 = vadd.f32 0.0, %v350
  %v352 = vpop.f32.mrb[0].mxu0
  %353 = vmatprep.mubr.bf16.mxu0 0
  %354 = vmatmul.mubr.bf16.gmra.mrb[0].mxu0 %v172
  %v355 = vpop.f32.mrb[0].mxu0
  %v356 = vadd.f32 0.0, %v355
  %v357 = vpop.f32.mrb[0].mxu0
  %v358 = vpop.f32.mrb[0].mxu0
  %v359 = vadd.f32 0.0, %v358
  %v360 = vpop.f32.mrb[0].mxu0
  %361 = vmatprep.mubr.bf16.mxu0 0
  %362 = vmatmul.mubr.bf16.gmra.mrb[0].mxu0 %v173
  %v363 = vpop.f32.mrb[0].mxu0
  %v364 = vadd.f32 0.0, %v363
  %v365 = vpop.f32.mrb[0].mxu0
  %v366 = vpop.f32.mrb[0].mxu0
  %v367 = vadd.f32 0.0, %v366
  %v368 = vpop.f32.mrb[0].mxu0
  %369 = vmatprep.mubr.bf16.mxu0 0
  %370 = vmatmul.mubr.bf16.gmra.mrb[0].mxu0 %v174
  %v371 = vpop.f32.mrb[0].mxu0
  %v372 = vadd.f32 0.0, %v371
  %v373 = vpop.f32.mrb[0].mxu0
  %v374 = vpop.f32.mrb[0].mxu0
  %v375 = vadd.f32 0.0, %v374
  %v376 = vpop.f32.mrb[0].mxu0
  %377 = vmatprep.mubr.bf16.mxu0 0
  %378 = vmatmul.mubr.bf16.gmra.mrb[0].mxu0 %v175
  %v379 = vpop.f32.mrb[0].mxu0
  %v380 = vadd.f32 0.0, %v379
  %v381 = vpop.f32.mrb[0].mxu0
  %v382 = vpop.f32.mrb[0].mxu0
  %v383 = vadd.f32 0.0, %v382
  %v384 = vpop.f32.mrb[0].mxu0
  %385 = vmatprep.mubr.bf16.mxu0 0
  %386 = vmatmul.mubr.bf16.gmra.mrb[0].mxu0 %v176
  %v387 = vpop.f32.mrb[0].mxu0
  %v388 = vadd.f32 0.0, %v387
  %v389 = vpop.f32.mrb[0].mxu0
  %v390 = vpop.f32.mrb[0].mxu0
  %v391 = vadd.f32 0.0, %v390
  %v392 = vpop.f32.mrb[0].mxu0
  %393 = vmatprep.mubr.bf16.mxu0 0
  %394 = vmatmul.mubr.bf16.gmra.mrb[0].mxu0 %v177
  %v395 = vpop.f32.mrb[0].mxu0
  %v396 = vadd.f32 0.0, %v395
  %v397 = vpop.f32.mrb[0].mxu0
  %v398 = vpop.f32.mrb[0].mxu0
  %v399 = vadd.f32 0.0, %v398
  %v400 = vpop.f32.mrb[0].mxu0
  %401 = vmatprep.mubr.bf16.mxu0 0
  %402 = vmatmul.mubr.bf16.gmra.mrb[0].mxu0 %v178
  %v403 = vpop.f32.mrb[0].mxu0
  %v404 = vadd.f32 0.0, %v403
  %v405 = vpop.f32.mrb[0].mxu0
  %v406 = vpop.f32.mrb[0].mxu0
  %v407 = vadd.f32 0.0, %v406
  %v408 = vpop.f32.mrb[0].mxu0
  %409 = vmatprep.mubr.bf16.mxu0 0
  %410 = vmatmul.mubr.bf16.gmra.mrb[0].mxu0 %v179
  %v411 = vpop.f32.mrb[0].mxu0
  %v412 = vadd.f32 0.0, %v411
  %v413 = vpop.f32.mrb[0].mxu0
  %v414 = vpop.f32.mrb[0].mxu0
  %v415 = vadd.f32 0.0, %v414
  %v416 = vpop.f32.mrb[0].mxu0
  %417 = vmatprep.mubr.bf16.mxu0 0
  %418 = vmatmul.mubr.bf16.gmra.mrb[0].mxu0 %v180
  %v419 = vpop.f32.mrb[0].mxu0
  %v420 = vadd.f32 0.0, %v419
  %v421 = vpop.f32.mrb[0].mxu0
  %v422 = vpop.f32.mrb[0].mxu0
  %v423 = vadd.f32 0.0, %v422
  %v424 = vpop.f32.mrb[0].mxu0
  %425 = vmatprep.mubr.bf16.mxu0 0
  %426 = vmatmul.mubr.bf16.gmra.mrb[0].mxu0 %v181
  %v427 = vpop.f32.mrb[0].mxu0
  %v428 = vadd.f32 0.0, %v427
  %v429 = vpop.f32.mrb[0].mxu0
  %v430 = vpop.f32.mrb[0].mxu0
  %v431 = vadd.f32 0.0, %v430
  %v432 = vpop.f32.mrb[0].mxu0
  %433 = vmatprep.mubr.bf16.mxu0 0
  %434 = vmatmul.mubr.bf16.gmra.mrb[0].mxu0 %v182
  %v435 = vpop.f32.mrb[0].mxu0
  %v436 = vadd.f32 0.0, %v435
  %v437 = vpop.f32.mrb[0].mxu0
  %v438 = vpop.f32.mrb[0].mxu0
  %v439 = vadd.f32 0.0, %v438
  %v440 = vpop.f32.mrb[0].mxu0
  %441 = vmatprep.mubr.bf16.mxu0 0
  %442 = vmatmul.mubr.bf16.gmra.mrb[0].mxu0 %v183
  %v443 = vpop.f32.mrb[0].mxu0
  %v444 = vadd.f32 0.0, %v443
  %v445 = vpop.f32.mrb[0].mxu0
  %v446 = vpop.f32.mrb[0].mxu0
  %v447 = vadd.f32 0.0, %v446
  %v448 = vpop.f32.mrb[0].mxu0
  %449 = vmatprep.mubr.bf16.mxu0 0
  %450 = vmatmul.mubr.bf16.gmra.mrb[0].mxu0 %v184
  %v451 = vpop.f32.mrb[0].mxu0
  %v452 = vadd.f32 0.0, %v451
  %v453 = vpop.f32.mrb[0].mxu0
  %v454 = vpop.f32.mrb[0].mxu0
  %v455 = vadd.f32 0.0, %v454
  %v456 = vpop.f32.mrb[0].mxu0
  %457 = vmatprep.mubr.bf16.mxu0 0
  %458 = vmatmul.mubr.bf16.gmra.mrb[0].mxu0 %v185
  %v459 = vpop.f32.mrb[0].mxu0
  %v460 = vadd.f32 0.0, %v459
  %v461 = vpop.f32.mrb[0].mxu0
  %v462 = vpop.f32.mrb[0].mxu0
  %v463 = vadd.f32 0.0, %v462
  %v464 = vpop.f32.mrb[0].mxu0
  %465 = vmatprep.mubr.bf16.mxu0 0
  %466 = vmatmul.mubr.bf16.gmra.mrb[0].mxu0 %v186
  %v467 = vpop.f32.mrb[0].mxu0
  %v468 = vadd.f32 0.0, %v467
  %v469 = vpop.f32.mrb[0].mxu0
  %v470 = vpop.f32.mrb[0].mxu0
  %v471 = vadd.f32 0.0, %v470
  %v472 = vpop.f32.mrb[0].mxu0
  %473 = vmatprep.mubr.bf16.mxu0 0
  %474 = vmatmul.mubr.bf16.gmra.mrb[0].mxu0 %v187
  %v475 = vpop.f32.mrb[0].mxu0
  %v476 = vadd.f32 0.0, %v475
  %v477 = vpop.f32.mrb[0].mxu0
  %v478 = vpop.f32.mrb[0].mxu0
  %v479 = vadd.f32 0.0, %v478
  %v480 = vpop.f32.mrb[0].mxu0
  %481 = vmatprep.mubr.bf16.mxu0 0
  %482 = vmatmul.mubr.bf16.gmra.mrb[0].mxu0 %v188
  %v483 = vpop.f32.mrb[0].mxu0
  %v484 = vadd.f32 0.0, %v483
  %v485 = vpop.f32.mrb[0].mxu0
  %v486 = vpop.f32.mrb[0].mxu0
  %v487 = vadd.f32 0.0, %v486
  %v488 = vpop.f32.mrb[0].mxu0
  %489 = vmatprep.mubr.bf16.mxu0 0
  %490 = vmatmul.mubr.bf16.gmra.mrb[0].mxu0 %v189
  %v491 = vpop.f32.mrb[0].mxu0
  %v492 = vadd.f32 0.0, %v491
  %v493 = vpop.f32.mrb[0].mxu0
  %v494 = vpop.f32.mrb[0].mxu0
  %v495 = vadd.f32 0.0, %v494
  %v496 = vpop.f32.mrb[0].mxu0
  %497 = vmatprep.mubr.bf16.mxu0 0
  %498 = vmatmul.mubr.bf16.gmra.mrb[0].mxu0 %v190
  %v499 = vpop.f32.mrb[0].mxu0
  %v500 = vadd.f32 0.0, %v499
  %v501 = vpop.f32.mrb[0].mxu0
  %v502 = vpop.f32.mrb[0].mxu0
  %v503 = vadd.f32 0.0, %v502
  %v504 = vpop.f32.mrb[0].mxu0
  %505 = vmatprep.mubr.bf16.mxu0 0
  %506 = vmatmul.mubr.bf16.gmra.mrb[0].mxu0 %v191
  %v507 = vpop.f32.mrb[0].mxu0
  %v508 = vadd.f32 0.0, %v507
  %v509 = vpop.f32.mrb[0].mxu0
  %v510 = vpop.f32.mrb[0].mxu0
  %v511 = vadd.f32 0.0, %v510
  %v512 = vpop.f32.mrb[0].mxu0
  %513 = vmatprep.mubr.bf16.mxu0 0
  %514 = vmatmul.mubr.bf16.gmra.mrb[0].mxu0 %v192
  %v515 = vpop.f32.mrb[0].mxu0
  %v516 = vadd.f32 0.0, %v515
  %v517 = vpop.f32.mrb[0].mxu0
  %v518 = vpop.f32.mrb[0].mxu0
  %v519 = vadd.f32 0.0, %v518
  %v520 = vpop.f32.mrb[0].mxu0
  %521 = vmatprep.mubr.bf16.mxu0 0
  %522 = vmatmul.mubr.bf16.gmra.mrb[0].mxu0 %v193
  %v523 = vpop.f32.mrb[0].mxu0
  %v524 = vadd.f32 0.0, %v523
  %v525 = vpop.f32.mrb[0].mxu0
  %v526 = vpop.f32.mrb[0].mxu0
  %v527 = vadd.f32 0.0, %v526
  %v528 = vpop.f32.mrb[0].mxu0
  %529 = vmatprep.mubr.bf16.mxu0 0
  %530 = vmatmul.mubr.bf16.gmra.mrb[0].mxu0 %v194
  %v531 = vpop.f32.mrb[0].mxu0
  %v532 = vadd.f32 0.0, %v531
  %v533 = vpop.f32.mrb[0].mxu0
  %v534 = vpop.f32.mrb[0].mxu0
  %v535 = vadd.f32 0.0, %v534
  %v536 = vpop.f32.mrb[0].mxu0
  %537 = vmatprep.mubr.bf16.mxu0 0
  %538 = vmatmul.mubr.bf16.gmra.mrb[0].mxu0 %v195
  %v539 = vpop.f32.mrb[0].mxu0
  %v540 = vadd.f32 0.0, %v539
  %v541 = vpop.f32.mrb[0].mxu0
  %v542 = vpop.f32.mrb[0].mxu0
  %v543 = vadd.f32 0.0, %v542
  %v544 = vpop.f32.mrb[0].mxu0
  %545 = vmatprep.mubr.bf16.mxu0 0
  %546 = vmatmul.mubr.bf16.gmra.mrb[0].mxu0 %v196
  %v547 = vpop.f32.mrb[0].mxu0
  %v548 = vadd.f32 0.0, %v547
  %v549 = vpop.f32.mrb[0].mxu0
  %v550 = vpop.f32.mrb[0].mxu0
  %v551 = vadd.f32 0.0, %v550
  %v552 = vpop.f32.mrb[0].mxu0
  %553 = vmatprep.mubr.bf16.mxu0 0
  %554 = vmatmul.mubr.bf16.gmra.mrb[0].mxu0 %v197
  %v555 = vpop.f32.mrb[0].mxu0
  %v556 = vadd.f32 0.0, %v555
  %v557 = vpop.f32.mrb[0].mxu0
  %v558 = vpop.f32.mrb[0].mxu0
  %v559 = vadd.f32 0.0, %v558
  %v560 = vpop.f32.mrb[0].mxu0
  %561 = vmatprep.mubr.bf16.mxu0 0
  %562 = vmatmul.mubr.bf16.gmra.mrb[0].mxu0 %v198
  %v563 = vpop.f32.mrb[0].mxu0
  %v564 = vadd.f32 0.0, %v563
  %v565 = vpop.f32.mrb[0].mxu0
  %v566 = vpop.f32.mrb[0].mxu0
  %v567 = vadd.f32 0.0, %v566
  %v568 = vpop.f32.mrb[0].mxu0
  %569 = vmatprep.mubr.bf16.mxu0 0
  %570 = vmatmul.mubr.bf16.gmra.mrb[0].mxu0 %v199
  %v571 = vpop.f32.mrb[0].mxu0
  %v572 = vadd.f32 0.0, %v571
  %v573 = vpop.f32.mrb[0].mxu0
  %v574 = vpop.f32.mrb[0].mxu0
  %v575 = vadd.f32 0.0, %v574
  %v576 = vpop.f32.mrb[0].mxu0
  %577 = vmatprep.mubr.bf16.mxu0 0
  %578 = vmatmul.mubr.bf16.gmra.mrb[0].mxu0 %v200
  %v579 = vpop.f32.mrb[0].mxu0
  %v580 = vadd.f32 0.0, %v579
  %v581 = vpop.f32.mrb[0].mxu0
  %v582 = vpop.f32.mrb[0].mxu0
  %v583 = vadd.f32 0.0, %v582
  %v584 = vpop.f32.mrb[0].mxu0
  %585 = vmatprep.mubr.bf16.mxu0 0
  %586 = vmatmul.mubr.bf16.gmra.mrb[0].mxu0 %v201
  %v587 = vpop.f32.mrb[0].mxu0
  %v588 = vadd.f32 0.0, %v587
  %v589 = vpop.f32.mrb[0].mxu0
  %v590 = vpop.f32.mrb[0].mxu0
  %v591 = vadd.f32 0.0, %v590
  %v592 = vpop.f32.mrb[0].mxu0
  %593 = vmatprep.mubr.bf16.mxu0 0
  %594 = vmatmul.mubr.bf16.gmra.mrb[0].mxu0 %v202
  %v595 = vpop.f32.mrb[0].mxu0
  %v596 = vadd.f32 0.0, %v595
  %v597 = vpop.f32.mrb[0].mxu0
  %v598 = vpop.f32.mrb[0].mxu0
  %v599 = vadd.f32 0.0, %v598
  %v600 = vpop.f32.mrb[0].mxu0
  %601 = vmatprep.mubr.bf16.mxu0 0
  %602 = vmatmul.mubr.bf16.gmra.mrb[0].mxu0 %v203
  %v603 = vpop.f32.mrb[0].mxu0
  %v604 = vadd.f32 0.0, %v603
  %v605 = vpop.f32.mrb[0].mxu0
  %v606 = vpop.f32.mrb[0].mxu0
  %v607 = vadd.f32 0.0, %v606
  %v608 = vpop.f32.mrb[0].mxu0
  %609 = vmatprep.mubr.bf16.mxu0 0
  %610 = vmatmul.mubr.bf16.gmra.mrb[0].mxu0 %v204
  %v611 = vpop.f32.mrb[0].mxu0
  %v612 = vadd.f32 0.0, %v611
  %v613 = vpop.f32.mrb[0].mxu0
  %v614 = vpop.f32.mrb[0].mxu0
  %v615 = vadd.f32 0.0, %v614
  %v616 = vpop.f32.mrb[0].mxu0
  %617 = vmatprep.mubr.bf16.mxu0 0
  %618 = vmatmul.mubr.bf16.gmra.mrb[0].mxu0 %v205
  %v619 = vpop.f32.mrb[0].mxu0
  %v620 = vadd.f32 0.0, %v619
  %v621 = vpop.f32.mrb[0].mxu0
  %v622 = vpop.f32.mrb[0].mxu0
  %v623 = vadd.f32 0.0, %v622
  %v624 = vpop.f32.mrb[0].mxu0
  %625 = vmatprep.mubr.bf16.mxu0 0
  %626 = vmatmul.mubr.bf16.gmra.mrb[0].mxu0 %v206
  %v627 = vpop.f32.mrb[0].mxu0
  %v628 = vadd.f32 0.0, %v627
  %v629 = vpop.f32.mrb[0].mxu0
  %v630 = vpop.f32.mrb[0].mxu0
  %v631 = vadd.f32 0.0, %v630
  %v632 = vpop.f32.mrb[0].mxu0
  %633 = vmatprep.mubr.bf16.mxu0 0
  %634 = vmatmul.mubr.bf16.gmra.mrb[0].mxu0 %v207
  %v635 = vpop.f32.mrb[0].mxu0
  %v636 = vadd.f32 0.0, %v635
  %v637 = vpop.f32.mrb[0].mxu0
  %v638 = vpop.f32.mrb[0].mxu0
  %v639 = vadd.f32 0.0, %v638
  %v640 = vpop.f32.mrb[0].mxu0
  %641 = vmatprep.mubr.bf16.mxu0 0
  %642 = vmatmul.mubr.bf16.gmra.mrb[0].mxu0 %v208
  %v643 = vpop.f32.mrb[0].mxu0
  %v644 = vadd.f32 0.0, %v643
  %v645 = vpop.f32.mrb[0].mxu0
  %v646 = vpop.f32.mrb[0].mxu0
  %v647 = vadd.f32 0.0, %v646
  %v648 = vpop.f32.mrb[0].mxu0
  %649 = vmatprep.mubr.bf16.mxu0 0
  %650 = vmatmul.mubr.bf16.gmra.mrb[0].mxu0 %v209
  %v651 = vpop.f32.mrb[0].mxu0
  %v652 = vadd.f32 0.0, %v651
  %v653 = vpop.f32.mrb[0].mxu0
  %v654 = vpop.f32.mrb[0].mxu0
  %v655 = vadd.f32 0.0, %v654
  %v656 = vpop.f32.mrb[0].mxu0
  %657 = vmatprep.mubr.bf16.mxu0 0
  %658 = vmatmul.mubr.bf16.gmra.mrb[0].mxu0 %v210
  %v659 = vpop.f32.mrb[0].mxu0
  %v660 = vadd.f32 0.0, %v659
  %v661 = vpop.f32.mrb[0].mxu0
  %v662 = vpop.f32.mrb[0].mxu0
  %v663 = vadd.f32 0.0, %v662
  %v664 = vpop.f32.mrb[0].mxu0
  %665 = vmatprep.mubr.bf16.mxu0 0
  %666 = vmatmul.mubr.bf16.gmra.mrb[0].mxu0 %v211
  %v667 = vpop.f32.mrb[0].mxu0
  %v668 = vadd.f32 0.0, %v667
  %v669 = vpop.f32.mrb[0].mxu0
  %v670 = vpop.f32.mrb[0].mxu0
  %v671 = vadd.f32 0.0, %v670
  %v672 = vpop.f32.mrb[0].mxu0
  %673 = vmatprep.mubr.bf16.mxu0 0
  %674 = vmatmul.mubr.bf16.gmra.mrb[0].mxu0 %v212
  %v675 = vpop.f32.mrb[0].mxu0
  %v676 = vadd.f32 0.0, %v675
  %v677 = vpop.f32.mrb[0].mxu0
  %v678 = vpop.f32.mrb[0].mxu0
  %v679 = vadd.f32 0.0, %v678
  %v680 = vpop.f32.mrb[0].mxu0
  %681 = vmatprep.mubr.bf16.mxu0 0
  %682 = vmatmul.mubr.bf16.gmra.mrb[0].mxu0 %v213
  %v683 = vpop.f32.mrb[0].mxu0
  %v684 = vadd.f32 0.0, %v683
  %v685 = vpop.f32.mrb[0].mxu0
  %v686 = vpop.f32.mrb[0].mxu0
  %v687 = vadd.f32 0.0, %v686
  %v688 = vpop.f32.mrb[0].mxu0
  %689 = vmatprep.mubr.bf16.mxu0 0
  %690 = vmatmul.mubr.bf16.gmra.mrb[0].mxu0 %v214
  %v691 = vpop.f32.mrb[0].mxu0
  %v692 = vadd.f32 0.0, %v691
  %v693 = vpop.f32.mrb[0].mxu0
  %v694 = vpop.f32.mrb[0].mxu0
  %v695 = vadd.f32 0.0, %v694
  %v696 = vpop.f32.mrb[0].mxu0
  %697 = vmatprep.mubr.bf16.mxu0 0
  %698 = vmatmul.mubr.bf16.gmra.mrb[0].mxu0 %v215
  %v699 = vpop.f32.mrb[0].mxu0
  %v700 = vadd.f32 0.0, %v699
  %v701 = vpop.f32.mrb[0].mxu0
  %v702 = vpop.f32.mrb[0].mxu0
  %v703 = vadd.f32 0.0, %v702
  %v704 = vpop.f32.mrb[0].mxu0
  %705 = vmatprep.mubr.bf16.mxu0 0
  %706 = vmatmul.mubr.bf16.gmra.mrb[0].mxu0 %v216
  %v707 = vpop.f32.mrb[0].mxu0
  %v708 = vadd.f32 0.0, %v707
  %v709 = vpop.f32.mrb[0].mxu0
  %v710 = vpop.f32.mrb[0].mxu0
  %v711 = vadd.f32 0.0, %v710
  %v712 = vpop.f32.mrb[0].mxu0
  %713 = vmatprep.mubr.bf16.mxu0 0
  %714 = vmatmul.mubr.bf16.gmra.mrb[0].mxu0 %v217
  %v715 = vpop.f32.mrb[0].mxu0
  %v716 = vadd.f32 0.0, %v715
  %v717 = vpop.f32.mrb[0].mxu0
  %v718 = vpop.f32.mrb[0].mxu0
  %v719 = vadd.f32 0.0, %v718
  %v720 = vpop.f32.mrb[0].mxu0
  %721 = vmatprep.mubr.bf16.mxu0 0
  %722 = vmatmul.mubr.bf16.gmra.mrb[0].mxu0 %v218
  %v723 = vpop.f32.mrb[0].mxu0
  %v724 = vadd.f32 0.0, %v723
  %v725 = vpop.f32.mrb[0].mxu0
  %v726 = vpop.f32.mrb[0].mxu0
  %v727 = vadd.f32 0.0, %v726
  %v728 = vpop.f32.mrb[0].mxu0
  %729 = vmatprep.mubr.bf16.mxu0 0
  %730 = vmatmul.mubr.bf16.gmra.mrb[0].mxu0 %v219
  %v731 = vpop.f32.mrb[0].mxu0
  %v732 = vadd.f32 0.0, %v731
  %v733 = vpop.f32.mrb[0].mxu0
  %v734 = vpop.f32.mrb[0].mxu0
  %v735 = vadd.f32 0.0, %v734
  %v736 = vpop.f32.mrb[0].mxu0
  %737 = vmatprep.mubr.bf16.mxu0 0
  %738 = vmatmul.mubr.bf16.gmra.mrb[0].mxu0 %v220
  %v739 = vpop.f32.mrb[0].mxu0
  %v740 = vadd.f32 0.0, %v739
  %v741 = vpop.f32.mrb[0].mxu0
  %v742 = vpop.f32.mrb[0].mxu0
  %v743 = vadd.f32 0.0, %v742
  %v744 = vpop.f32.mrb[0].mxu0
  %745 = vmatprep.mubr.bf16.mxu0 0
  %746 = vmatmul.mubr.bf16.gmra.mrb[0].mxu0 %v221
  %v747 = vpop.f32.mrb[0].mxu0
  %v748 = vadd.f32 0.0, %v747
  %v749 = vpop.f32.mrb[0].mxu0
  %v750 = vpop.f32.mrb[0].mxu0
  %v751 = vadd.f32 0.0, %v750
  %v752 = vpop.f32.mrb[0].mxu0
  %753 = vmatprep.mubr.bf16.mxu0 0
  %754 = vmatmul.mubr.bf16.gmra.mrb[0].mxu0 %v222
  %v755 = vpop.f32.mrb[0].mxu0
  %v756 = vadd.f32 0.0, %v755
  %v757 = vpop.f32.mrb[0].mxu0
  %v758 = vpop.f32.mrb[0].mxu0
  %v759 = vadd.f32 0.0, %v758
  %v760 = vpop.f32.mrb[0].mxu0
  %761 = vmatprep.mubr.bf16.mxu0 0
  %762 = vmatmul.mubr.bf16.gmra.mrb[0].mxu0 %v223
  %v763 = vpop.f32.mrb[0].mxu0
  %v764 = vadd.f32 0.0, %v763
  %v765 = vpop.f32.mrb[0].mxu0
  %v766 = vpop.f32.mrb[0].mxu0
  %v767 = vadd.f32 0.0, %v766
  %v768 = vpop.f32.mrb[0].mxu0
  %769 = vmatprep.mubr.bf16.mxu0 0
  %770 = vmatmul.mubr.bf16.gmra.mrb[0].mxu0 %v224
  %v771 = vpop.f32.mrb[0].mxu0
  %v772 = vadd.f32 0.0, %v771
  %v773 = vpop.f32.mrb[0].mxu0
  %v774 = vpop.f32.mrb[0].mxu0
  %v775 = vadd.f32 0.0, %v774
  %v776 = vpop.f32.mrb[0].mxu0
  %777 = vmatprep.mubr.bf16.mxu0 0
  %778 = vmatmul.mubr.bf16.gmra.mrb[0].mxu0 %v225
  %v779 = vpop.f32.mrb[0].mxu0
  %v780 = vadd.f32 0.0, %v779
  %v781 = vpop.f32.mrb[0].mxu0
  %v782 = vpop.f32.mrb[0].mxu0
  %v783 = vadd.f32 0.0, %v782
  %v784 = vpop.f32.mrb[0].mxu0
  %785 = vmatprep.mubr.bf16.mxu0 0
  %786 = vmatmul.mubr.bf16.gmra.mrb[0].mxu0 %v226
  %v787 = vpop.f32.mrb[0].mxu0
  %v788 = vadd.f32 0.0, %v787
  %v789 = vpop.f32.mrb[0].mxu0
  %v790 = vpop.f32.mrb[0].mxu0
  %v791 = vadd.f32 0.0, %v790
  %v792 = vpop.f32.mrb[0].mxu0
  %793 = vmatprep.mubr.bf16.mxu0 0
  %794 = vmatmul.mubr.bf16.gmra.mrb[0].mxu0 %v227
  %v795 = vpop.f32.mrb[0].mxu0
  %v796 = vadd.f32 0.0, %v795
  %v797 = vpop.f32.mrb[0].mxu0
  %v798 = vpop.f32.mrb[0].mxu0
  %v799 = vadd.f32 0.0, %v798
  %v800 = vpop.f32.mrb[0].mxu0
  %801 = vmatprep.mubr.bf16.mxu0 0
  %802 = vmatmul.mubr.bf16.gmra.mrb[0].mxu0 %v228
  %v803 = vpop.f32.mrb[0].mxu0
  %v804 = vadd.f32 0.0, %v803
  %v805 = vpop.f32.mrb[0].mxu0
  %v806 = vpop.f32.mrb[0].mxu0
  %v807 = vadd.f32 0.0, %v806
  %v808 = vpop.f32.mrb[0].mxu0
  %809 = vmatprep.mubr.bf16.mxu0 0
  %810 = vmatmul.mubr.bf16.gmra.mrb[0].mxu0 %v229
  %v811 = vpop.f32.mrb[0].mxu0
  %v812 = vadd.f32 0.0, %v811
  %v813 = vpop.f32.mrb[0].mxu0
  %v814 = vpop.f32.mrb[0].mxu0
  %v815 = vadd.f32 0.0, %v814
  %v816 = vpop.f32.mrb[0].mxu0
  %817 = vmatprep.mubr.bf16.mxu0 0
  %818 = vmatmul.mubr.bf16.gmra.mrb[0].mxu0 %v230
  %v819 = vpop.f32.mrb[0].mxu0
  %v820 = vadd.f32 0.0, %v819
  %v821 = vpop.f32.mrb[0].mxu0
  %v822 = vpop.f32.mrb[0].mxu0
  %v823 = vadd.f32 0.0, %v822
  %v824 = vpop.f32.mrb[0].mxu0
  %825 = vmatprep.mubr.bf16.mxu0 0
  %826 = vmatmul.mubr.bf16.gmra.mrb[0].mxu0 %v231
  %v827 = vpop.f32.mrb[0].mxu0
  %v828 = vadd.f32 0.0, %v827
  %v829 = vpop.f32.mrb[0].mxu0
  %v830 = vpop.f32.mrb[0].mxu0
  %v831 = vadd.f32 0.0, %v830
  %v832 = vpop.f32.mrb[0].mxu0
  %833 = vmatprep.mubr.bf16.mxu0 0
  %834 = vmatmul.mubr.bf16.gmra.mrb[0].mxu0 %v232
  %v835 = vpop.f32.mrb[0].mxu0
  %v836 = vadd.f32 0.0, %v835
  %v837 = vpop.f32.mrb[0].mxu0
  %v838 = vpop.f32.mrb[0].mxu0
  %v839 = vadd.f32 0.0, %v838
  %v840 = vpop.f32.mrb[0].mxu0
  %841 = vdwg.mxu0
  %v842 = vld [vmem:[%s2] sm:$0x1]
  %v843 = vld [vmem:[%s2 + $0x1] sm:$0x1]
  %v844 = vld [vmem:[%s2 + $0x2] sm:$0x1]
  %v845 = vld [vmem:[%s2 + $0x3] sm:$0x1]
  %v850 = vlaneseq
  %v851 = vshrl.u32 %v850, 7
  %v852 = vsub.s32 0, %v851
  %v853 = vrot.slane %v842, %v852
  %v854 = vlaneseq
  %v855 = vshrl.u32 %v854, 7
  %v856 = vsub.s32 0, %v855
  %v857 = vrot.slane %v843, %v856
  %v858 = vlaneseq
  %v859 = vshrl.u32 %v858, 7
  %v860 = vsub.s32 0, %v859
  %v861 = vrot.slane %v844, %v860
  %v862 = vlaneseq
  %v863 = vshrl.u32 %v862, 7
  %v864 = vsub.s32 0, %v863
  %v865 = vrot.slane %v845, %v864
  %v870 = vadd.f32 %v332, %v853
  %v871 = vadd.f32 %v335, %v853
  %v872 = vadd.f32 %v340, %v853
  %v873 = vadd.f32 %v343, %v853
  %v874 = vadd.f32 %v348, %v853
  %v875 = vadd.f32 %v351, %v853
  %v876 = vadd.f32 %v356, %v853
  %v877 = vadd.f32 %v359, %v853
  %v878 = vadd.f32 %v364, %v853
  %v879 = vadd.f32 %v367, %v853
  %v880 = vadd.f32 %v372, %v853
  %v881 = vadd.f32 %v375, %v853
  %v882 = vadd.f32 %v380, %v853
  %v883 = vadd.f32 %v383, %v853
  %v884 = vadd.f32 %v388, %v853
  %v885 = vadd.f32 %v391, %v853
  %v886 = vadd.f32 %v396, %v853
  %v887 = vadd.f32 %v399, %v853
  %v888 = vadd.f32 %v404, %v853
  %v889 = vadd.f32 %v407, %v853
  %v890 = vadd.f32 %v412, %v853
  %v891 = vadd.f32 %v415, %v853
  %v892 = vadd.f32 %v420, %v853
  %v893 = vadd.f32 %v423, %v853
  %v894 = vadd.f32 %v428, %v853
  %v895 = vadd.f32 %v431, %v853
  %v896 = vadd.f32 %v436, %v853
  %v897 = vadd.f32 %v439, %v853
  %v898 = vadd.f32 %v444, %v853
  %v899 = vadd.f32 %v447, %v853
  %v900 = vadd.f32 %v452, %v853
  %v901 = vadd.f32 %v455, %v853
  %v902 = vadd.f32 %v460, %v857
  %v903 = vadd.f32 %v463, %v857
  %v904 = vadd.f32 %v468, %v857
  %v905 = vadd.f32 %v471, %v857
  %v906 = vadd.f32 %v476, %v857
  %v907 = vadd.f32 %v479, %v857
  %v908 = vadd.f32 %v484, %v857
  %v909 = vadd.f32 %v487, %v857
  %v910 = vadd.f32 %v492, %v857
  %v911 = vadd.f32 %v495, %v857
  %v912 = vadd.f32 %v500, %v857
  %v913 = vadd.f32 %v503, %v857
  %v914 = vadd.f32 %v508, %v857
  %v915 = vadd.f32 %v511, %v857
  %v916 = vadd.f32 %v516, %v857
  %v917 = vadd.f32 %v519, %v857
  %v918 = vadd.f32 %v524, %v857
  %v919 = vadd.f32 %v527, %v857
  %v920 = vadd.f32 %v532, %v857
  %v921 = vadd.f32 %v535, %v857
  %v922 = vadd.f32 %v540, %v857
  %v923 = vadd.f32 %v543, %v857
  %v924 = vadd.f32 %v548, %v857
  %v925 = vadd.f32 %v551, %v857
  %v926 = vadd.f32 %v556, %v857
  %v927 = vadd.f32 %v559, %v857
  %v928 = vadd.f32 %v564, %v857
  %v929 = vadd.f32 %v567, %v857
  %v930 = vadd.f32 %v572, %v857
  %v931 = vadd.f32 %v575, %v857
  %v932 = vadd.f32 %v580, %v857
  %v933 = vadd.f32 %v583, %v857
  %v934 = vadd.f32 %v588, %v861
  %v935 = vadd.f32 %v591, %v861
  %v936 = vadd.f32 %v596, %v861
  %v937 = vadd.f32 %v599, %v861
  %v938 = vadd.f32 %v604, %v861
  %v939 = vadd.f32 %v607, %v861
  %v940 = vadd.f32 %v612, %v861
  %v941 = vadd.f32 %v615, %v861
  %v942 = vadd.f32 %v620, %v861
  %v943 = vadd.f32 %v623, %v861
  %v944 = vadd.f32 %v628, %v861
  %v945 = vadd.f32 %v631, %v861
  %v946 = vadd.f32 %v636, %v861
  %v947 = vadd.f32 %v639, %v861
  %v948 = vadd.f32 %v644, %v861
  %v949 = vadd.f32 %v647, %v861
  %v950 = vadd.f32 %v652, %v861
  %v951 = vadd.f32 %v655, %v861
  %v952 = vadd.f32 %v660, %v861
  %v953 = vadd.f32 %v663, %v861
  %v954 = vadd.f32 %v668, %v861
  %v955 = vadd.f32 %v671, %v861
  %v956 = vadd.f32 %v676, %v861
  %v957 = vadd.f32 %v679, %v861
  %v958 = vadd.f32 %v684, %v861
  %v959 = vadd.f32 %v687, %v861
  %v960 = vadd.f32 %v692, %v861
  %v961 = vadd.f32 %v695, %v861
  %v962 = vadd.f32 %v700, %v861
  %v963 = vadd.f32 %v703, %v861
  %v964 = vadd.f32 %v708, %v861
  %v965 = vadd.f32 %v711, %v861
  %v966 = vadd.f32 %v716, %v865
  %v967 = vadd.f32 %v719, %v865
  %v968 = vadd.f32 %v724, %v865
  %v969 = vadd.f32 %v727, %v865
  %v970 = vadd.f32 %v732, %v865
  %v971 = vadd.f32 %v735, %v865
  %v972 = vadd.f32 %v740, %v865
  %v973 = vadd.f32 %v743, %v865
  %v974 = vadd.f32 %v748, %v865
  %v975 = vadd.f32 %v751, %v865
  %v976 = vadd.f32 %v756, %v865
  %v977 = vadd.f32 %v759, %v865
  %v978 = vadd.f32 %v764, %v865
  %v979 = vadd.f32 %v767, %v865
  %v980 = vadd.f32 %v772, %v865
  %v981 = vadd.f32 %v775, %v865
  %v982 = vadd.f32 %v780, %v865
  %v983 = vadd.f32 %v783, %v865
  %v984 = vadd.f32 %v788, %v865
  %v985 = vadd.f32 %v791, %v865
  %v986 = vadd.f32 %v796, %v865
  %v987 = vadd.f32 %v799, %v865
  %v988 = vadd.f32 %v804, %v865
  %v989 = vadd.f32 %v807, %v865
  %v990 = vadd.f32 %v812, %v865
  %v991 = vadd.f32 %v815, %v865
  %v992 = vadd.f32 %v820, %v865
  %v993 = vadd.f32 %v823, %v865
  %v994 = vadd.f32 %v828, %v865
  %v995 = vadd.f32 %v831, %v865
  %v996 = vadd.f32 %v836, %v865
  %v997 = vadd.f32 %v839, %v865
  %v998 = vld [vmem:[%s1] sm:$0xff]
  %v999 = vld [vmem:[%s1 + $0x8] sm:$0xff]
  %v1000 = vld [vmem:[%s1 + $0x10] sm:$0xff]
  %v1001 = vld [vmem:[%s1 + $0x18] sm:$0xff]
  %v1002 = vld [vmem:[%s1 + $0x20] sm:$0xff]
  %v1003 = vld [vmem:[%s1 + $0x28] sm:$0xff]
  %v1004 = vld [vmem:[%s1 + $0x30] sm:$0xff]
  %v1005 = vld [vmem:[%s1 + $0x38] sm:$0xff]
  %v1006 = vld [vmem:[%s1 + $0x40] sm:$0xff]
  %v1007 = vld [vmem:[%s1 + $0x48] sm:$0xff]
  %v1008 = vld [vmem:[%s1 + $0x50] sm:$0xff]
  %v1009 = vld [vmem:[%s1 + $0x58] sm:$0xff]
  %v1010 = vld [vmem:[%s1 + $0x60] sm:$0xff]
  %v1011 = vld [vmem:[%s1 + $0x68] sm:$0xff]
  %v1012 = vld [vmem:[%s1 + $0x70] sm:$0xff]
  %v1013 = vld [vmem:[%s1 + $0x78] sm:$0xff]
  %v1014 = vld [vmem:[%s1 + $0x80] sm:$0xff]
  %v1015 = vld [vmem:[%s1 + $0x88] sm:$0xff]
  %v1016 = vld [vmem:[%s1 + $0x90] sm:$0xff]
  %v1017 = vld [vmem:[%s1 + $0x98] sm:$0xff]
  %v1018 = vld [vmem:[%s1 + $0xa0] sm:$0xff]
  %v1019 = vld [vmem:[%s1 + $0xa8] sm:$0xff]
  %v1020 = vld [vmem:[%s1 + $0xb0] sm:$0xff]
  %v1021 = vld [vmem:[%s1 + $0xb8] sm:$0xff]
  %v1022 = vld [vmem:[%s1 + $0xc0] sm:$0xff]
  %v1023 = vld [vmem:[%s1 + $0xc8] sm:$0xff]
  %v1024 = vld [vmem:[%s1 + $0xd0] sm:$0xff]
  %v1025 = vld [vmem:[%s1 + $0xd8] sm:$0xff]
  %v1026 = vld [vmem:[%s1 + $0xe0] sm:$0xff]
  %v1027 = vld [vmem:[%s1 + $0xe8] sm:$0xff]
  %v1028 = vld [vmem:[%s1 + $0xf0] sm:$0xff]
  %v1029 = vld [vmem:[%s1 + $0xf8] sm:$0xff]
  %v1030 = vld [vmem:[%s1 + $0x100] sm:$0xff]
  %v1031 = vld [vmem:[%s1 + $0x108] sm:$0xff]
  %v1032 = vld [vmem:[%s1 + $0x110] sm:$0xff]
  %v1033 = vld [vmem:[%s1 + $0x118] sm:$0xff]
  %v1034 = vld [vmem:[%s1 + $0x120] sm:$0xff]
  %v1035 = vld [vmem:[%s1 + $0x128] sm:$0xff]
  %v1036 = vld [vmem:[%s1 + $0x130] sm:$0xff]
  %v1037 = vld [vmem:[%s1 + $0x138] sm:$0xff]
  %v1038 = vld [vmem:[%s1 + $0x140] sm:$0xff]
  %v1039 = vld [vmem:[%s1 + $0x148] sm:$0xff]
  %v1040 = vld [vmem:[%s1 + $0x150] sm:$0xff]
  %v1041 = vld [vmem:[%s1 + $0x158] sm:$0xff]
  %v1042 = vld [vmem:[%s1 + $0x160] sm:$0xff]
  %v1043 = vld [vmem:[%s1 + $0x168] sm:$0xff]
  %v1044 = vld [vmem:[%s1 + $0x170] sm:$0xff]
  %v1045 = vld [vmem:[%s1 + $0x178] sm:$0xff]
  %v1046 = vld [vmem:[%s1 + $0x180] sm:$0xff]
  %v1047 = vld [vmem:[%s1 + $0x188] sm:$0xff]
  %v1048 = vld [vmem:[%s1 + $0x190] sm:$0xff]
  %v1049 = vld [vmem:[%s1 + $0x198] sm:$0xff]
  %v1050 = vld [vmem:[%s1 + $0x1a0] sm:$0xff]
  %v1051 = vld [vmem:[%s1 + $0x1a8] sm:$0xff]
  %v1052 = vld [vmem:[%s1 + $0x1b0] sm:$0xff]
  %v1053 = vld [vmem:[%s1 + $0x1b8] sm:$0xff]
  %v1054 = vld [vmem:[%s1 + $0x1c0] sm:$0xff]
  %v1055 = vld [vmem:[%s1 + $0x1c8] sm:$0xff]
  %v1056 = vld [vmem:[%s1 + $0x1d0] sm:$0xff]
  %v1057 = vld [vmem:[%s1 + $0x1d8] sm:$0xff]
  %v1058 = vld [vmem:[%s1 + $0x1e0] sm:$0xff]
  %v1059 = vld [vmem:[%s1 + $0x1e8] sm:$0xff]
  %v1060 = vld [vmem:[%s1 + $0x1f0] sm:$0xff]
  %v1061 = vld [vmem:[%s1 + $0x1f8] sm:$0xff]
  %v1062 = vld [vmem:[%s1 + $0x200] sm:$0xff]
  %v1063 = vld [vmem:[%s1 + $0x208] sm:$0xff]
  %v1064 = vld [vmem:[%s1 + $0x210] sm:$0xff]
  %v1065 = vld [vmem:[%s1 + $0x218] sm:$0xff]
  %v1066 = vld [vmem:[%s1 + $0x220] sm:$0xff]
  %v1067 = vld [vmem:[%s1 + $0x228] sm:$0xff]
  %v1068 = vld [vmem:[%s1 + $0x230] sm:$0xff]
  %v1069 = vld [vmem:[%s1 + $0x238] sm:$0xff]
  %v1070 = vld [vmem:[%s1 + $0x240] sm:$0xff]
  %v1071 = vld [vmem:[%s1 + $0x248] sm:$0xff]
  %v1072 = vld [vmem:[%s1 + $0x250] sm:$0xff]
  %v1073 = vld [vmem:[%s1 + $0x258] sm:$0xff]
  %v1074 = vld [vmem:[%s1 + $0x260] sm:$0xff]
  %v1075 = vld [vmem:[%s1 + $0x268] sm:$0xff]
  %v1076 = vld [vmem:[%s1 + $0x270] sm:$0xff]
  %v1077 = vld [vmem:[%s1 + $0x278] sm:$0xff]
  %v1078 = vld [vmem:[%s1 + $0x280] sm:$0xff]
  %v1079 = vld [vmem:[%s1 + $0x288] sm:$0xff]
  %v1080 = vld [vmem:[%s1 + $0x290] sm:$0xff]
  %v1081 = vld [vmem:[%s1 + $0x298] sm:$0xff]
  %v1082 = vld [vmem:[%s1 + $0x2a0] sm:$0xff]
  %v1083 = vld [vmem:[%s1 + $0x2a8] sm:$0xff]
  %v1084 = vld [vmem:[%s1 + $0x2b0] sm:$0xff]
  %v1085 = vld [vmem:[%s1 + $0x2b8] sm:$0xff]
  %v1086 = vld [vmem:[%s1 + $0x2c0] sm:$0xff]
  %v1087 = vld [vmem:[%s1 + $0x2c8] sm:$0xff]
  %v1088 = vld [vmem:[%s1 + $0x2d0] sm:$0xff]
  %v1089 = vld [vmem:[%s1 + $0x2d8] sm:$0xff]
  %v1090 = vld [vmem:[%s1 + $0x2e0] sm:$0xff]
  %v1091 = vld [vmem:[%s1 + $0x2e8] sm:$0xff]
  %v1092 = vld [vmem:[%s1 + $0x2f0] sm:$0xff]
  %v1093 = vld [vmem:[%s1 + $0x2f8] sm:$0xff]
  %v1094 = vld [vmem:[%s1 + $0x300] sm:$0xff]
  %v1095 = vld [vmem:[%s1 + $0x308] sm:$0xff]
  %v1096 = vld [vmem:[%s1 + $0x310] sm:$0xff]
  %v1097 = vld [vmem:[%s1 + $0x318] sm:$0xff]
  %v1098 = vld [vmem:[%s1 + $0x320] sm:$0xff]
  %v1099 = vld [vmem:[%s1 + $0x328] sm:$0xff]
  %v1100 = vld [vmem:[%s1 + $0x330] sm:$0xff]
  %v1101 = vld [vmem:[%s1 + $0x338] sm:$0xff]
  %v1102 = vld [vmem:[%s1 + $0x340] sm:$0xff]
  %v1103 = vld [vmem:[%s1 + $0x348] sm:$0xff]
  %v1104 = vld [vmem:[%s1 + $0x350] sm:$0xff]
  %v1105 = vld [vmem:[%s1 + $0x358] sm:$0xff]
  %v1106 = vld [vmem:[%s1 + $0x360] sm:$0xff]
  %v1107 = vld [vmem:[%s1 + $0x368] sm:$0xff]
  %v1108 = vld [vmem:[%s1 + $0x370] sm:$0xff]
  %v1109 = vld [vmem:[%s1 + $0x378] sm:$0xff]
  %v1110 = vld [vmem:[%s1 + $0x380] sm:$0xff]
  %v1111 = vld [vmem:[%s1 + $0x388] sm:$0xff]
  %v1112 = vld [vmem:[%s1 + $0x390] sm:$0xff]
  %v1113 = vld [vmem:[%s1 + $0x398] sm:$0xff]
  %v1114 = vld [vmem:[%s1 + $0x3a0] sm:$0xff]
  %v1115 = vld [vmem:[%s1 + $0x3a8] sm:$0xff]
  %v1116 = vld [vmem:[%s1 + $0x3b0] sm:$0xff]
  %v1117 = vld [vmem:[%s1 + $0x3b8] sm:$0xff]
  %v1118 = vld [vmem:[%s1 + $0x3c0] sm:$0xff]
  %v1119 = vld [vmem:[%s1 + $0x3c8] sm:$0xff]
  %v1120 = vld [vmem:[%s1 + $0x3d0] sm:$0xff]
  %v1121 = vld [vmem:[%s1 + $0x3d8] sm:$0xff]
  %v1122 = vld [vmem:[%s1 + $0x3e0] sm:$0xff]
  %v1123 = vld [vmem:[%s1 + $0x3e8] sm:$0xff]
  %v1124 = vld [vmem:[%s1 + $0x3f0] sm:$0xff]
  %v1125 = vld [vmem:[%s1 + $0x3f8] sm:$0xff]
  %1254 = vrot.lane.b32.xlu0 %v998, 1
  %v1255 = vpop.permute.xlu0 %1254
  %1256 = vrot.lane.b32.xlu0 %v999, 1
  %v1257 = vpop.permute.xlu0 %1256
  %1258 = vrot.lane.b32.xlu0 %v1000, 1
  %v1259 = vpop.permute.xlu0 %1258
  %1260 = vrot.lane.b32.xlu0 %v1001, 1
  %v1261 = vpop.permute.xlu0 %1260
  %1262 = vrot.lane.b32.xlu0 %v1002, 1
  %v1263 = vpop.permute.xlu0 %1262
  %1264 = vrot.lane.b32.xlu0 %v1003, 1
  %v1265 = vpop.permute.xlu0 %1264
  %1266 = vrot.lane.b32.xlu0 %v1004, 1
  %v1267 = vpop.permute.xlu0 %1266
  %1268 = vrot.lane.b32.xlu0 %v1005, 1
  %v1269 = vpop.permute.xlu0 %1268
  %1270 = vrot.lane.b32.xlu0 %v1006, 1
  %v1271 = vpop.permute.xlu0 %1270
  %1272 = vrot.lane.b32.xlu0 %v1007, 1
  %v1273 = vpop.permute.xlu0 %1272
  %1274 = vrot.lane.b32.xlu0 %v1008, 1
  %v1275 = vpop.permute.xlu0 %1274
  %1276 = vrot.lane.b32.xlu0 %v1009, 1
  %v1277 = vpop.permute.xlu0 %1276
  %1278 = vrot.lane.b32.xlu0 %v1010, 1
  %v1279 = vpop.permute.xlu0 %1278
  %1280 = vrot.lane.b32.xlu0 %v1011, 1
  %v1281 = vpop.permute.xlu0 %1280
  %1282 = vrot.lane.b32.xlu0 %v1012, 1
  %v1283 = vpop.permute.xlu0 %1282
  %1284 = vrot.lane.b32.xlu0 %v1013, 1
  %v1285 = vpop.permute.xlu0 %1284
  %1286 = vrot.lane.b32.xlu0 %v1014, 1
  %v1287 = vpop.permute.xlu0 %1286
  %1288 = vrot.lane.b32.xlu0 %v1015, 1
  %v1289 = vpop.permute.xlu0 %1288
  %1290 = vrot.lane.b32.xlu0 %v1016, 1
  %v1291 = vpop.permute.xlu0 %1290
  %1292 = vrot.lane.b32.xlu0 %v1017, 1
  %v1293 = vpop.permute.xlu0 %1292
  %1294 = vrot.lane.b32.xlu0 %v1018, 1
  %v1295 = vpop.permute.xlu0 %1294
  %1296 = vrot.lane.b32.xlu0 %v1019, 1
  %v1297 = vpop.permute.xlu0 %1296
  %1298 = vrot.lane.b32.xlu0 %v1020, 1
  %v1299 = vpop.permute.xlu0 %1298
  %1300 = vrot.lane.b32.xlu0 %v1021, 1
  %v1301 = vpop.permute.xlu0 %1300
  %1302 = vrot.lane.b32.xlu0 %v1022, 1
  %v1303 = vpop.permute.xlu0 %1302
  %1304 = vrot.lane.b32.xlu0 %v1023, 1
  %v1305 = vpop.permute.xlu0 %1304
  %1306 = vrot.lane.b32.xlu0 %v1024, 1
  %v1307 = vpop.permute.xlu0 %1306
  %1308 = vrot.lane.b32.xlu0 %v1025, 1
  %v1309 = vpop.permute.xlu0 %1308
  %1310 = vrot.lane.b32.xlu0 %v1026, 1
  %v1311 = vpop.permute.xlu0 %1310
  %1312 = vrot.lane.b32.xlu0 %v1027, 1
  %v1313 = vpop.permute.xlu0 %1312
  %1314 = vrot.lane.b32.xlu0 %v1028, 1
  %v1315 = vpop.permute.xlu0 %1314
  %1316 = vrot.lane.b32.xlu0 %v1029, 1
  %v1317 = vpop.permute.xlu0 %1316
  %1318 = vrot.lane.b32.xlu0 %v1030, 1
  %v1319 = vpop.permute.xlu0 %1318
  %1320 = vrot.lane.b32.xlu0 %v1031, 1
  %v1321 = vpop.permute.xlu0 %1320
  %1322 = vrot.lane.b32.xlu0 %v1032, 1
  %v1323 = vpop.permute.xlu0 %1322
  %1324 = vrot.lane.b32.xlu0 %v1033, 1
  %v1325 = vpop.permute.xlu0 %1324
  %1326 = vrot.lane.b32.xlu0 %v1034, 1
  %v1327 = vpop.permute.xlu0 %1326
  %1328 = vrot.lane.b32.xlu0 %v1035, 1
  %v1329 = vpop.permute.xlu0 %1328
  %1330 = vrot.lane.b32.xlu0 %v1036, 1
  %v1331 = vpop.permute.xlu0 %1330
  %1332 = vrot.lane.b32.xlu0 %v1037, 1
  %v1333 = vpop.permute.xlu0 %1332
  %1334 = vrot.lane.b32.xlu0 %v1038, 1
  %v1335 = vpop.permute.xlu0 %1334
  %1336 = vrot.lane.b32.xlu0 %v1039, 1
  %v1337 = vpop.permute.xlu0 %1336
  %1338 = vrot.lane.b32.xlu0 %v1040, 1
  %v1339 = vpop.permute.xlu0 %1338
  %1340 = vrot.lane.b32.xlu0 %v1041, 1
  %v1341 = vpop.permute.xlu0 %1340
  %1342 = vrot.lane.b32.xlu0 %v1042, 1
  %v1343 = vpop.permute.xlu0 %1342
  %1344 = vrot.lane.b32.xlu0 %v1043, 1
  %v1345 = vpop.permute.xlu0 %1344
  %1346 = vrot.lane.b32.xlu0 %v1044, 1
  %v1347 = vpop.permute.xlu0 %1346
  %1348 = vrot.lane.b32.xlu0 %v1045, 1
  %v1349 = vpop.permute.xlu0 %1348
  %1350 = vrot.lane.b32.xlu0 %v1046, 1
  %v1351 = vpop.permute.xlu0 %1350
  %1352 = vrot.lane.b32.xlu0 %v1047, 1
  %v1353 = vpop.permute.xlu0 %1352
  %1354 = vrot.lane.b32.xlu0 %v1048, 1
  %v1355 = vpop.permute.xlu0 %1354
  %1356 = vrot.lane.b32.xlu0 %v1049, 1
  %v1357 = vpop.permute.xlu0 %1356
  %1358 = vrot.lane.b32.xlu0 %v1050, 1
  %v1359 = vpop.permute.xlu0 %1358
  %1360 = vrot.lane.b32.xlu0 %v1051, 1
  %v1361 = vpop.permute.xlu0 %1360
  %1362 = vrot.lane.b32.xlu0 %v1052, 1
  %v1363 = vpop.permute.xlu0 %1362
  %1364 = vrot.lane.b32.xlu0 %v1053, 1
  %v1365 = vpop.permute.xlu0 %1364
  %1366 = vrot.lane.b32.xlu0 %v1054, 1
  %v1367 = vpop.permute.xlu0 %1366
  %1368 = vrot.lane.b32.xlu0 %v1055, 1
  %v1369 = vpop.permute.xlu0 %1368
  %1370 = vrot.lane.b32.xlu0 %v1056, 1
  %v1371 = vpop.permute.xlu0 %1370
  %1372 = vrot.lane.b32.xlu0 %v1057, 1
  %v1373 = vpop.permute.xlu0 %1372
  %1374 = vrot.lane.b32.xlu0 %v1058, 1
  %v1375 = vpop.permute.xlu0 %1374
  %1376 = vrot.lane.b32.xlu0 %v1059, 1
  %v1377 = vpop.permute.xlu0 %1376
  %1378 = vrot.lane.b32.xlu0 %v1060, 1
  %v1379 = vpop.permute.xlu0 %1378
  %1380 = vrot.lane.b32.xlu0 %v1061, 1
  %v1381 = vpop.permute.xlu0 %1380
  %1382 = vrot.lane.b32.xlu0 %v1062, 1
  %v1383 = vpop.permute.xlu0 %1382
  %1384 = vrot.lane.b32.xlu0 %v1063, 1
  %v1385 = vpop.permute.xlu0 %1384
  %1386 = vrot.lane.b32.xlu0 %v1064, 1
  %v1387 = vpop.permute.xlu0 %1386
  %1388 = vrot.lane.b32.xlu0 %v1065, 1
  %v1389 = vpop.permute.xlu0 %1388
  %1390 = vrot.lane.b32.xlu0 %v1066, 1
  %v1391 = vpop.permute.xlu0 %1390
  %1392 = vrot.lane.b32.xlu0 %v1067, 1
  %v1393 = vpop.permute.xlu0 %1392
  %1394 = vrot.lane.b32.xlu0 %v1068, 1
  %v1395 = vpop.permute.xlu0 %1394
  %1396 = vrot.lane.b32.xlu0 %v1069, 1
  %v1397 = vpop.permute.xlu0 %1396
  %1398 = vrot.lane.b32.xlu0 %v1070, 1
  %v1399 = vpop.permute.xlu0 %1398
  %1400 = vrot.lane.b32.xlu0 %v1071, 1
  %v1401 = vpop.permute.xlu0 %1400
  %1402 = vrot.lane.b32.xlu0 %v1072, 1
  %v1403 = vpop.permute.xlu0 %1402
  %1404 = vrot.lane.b32.xlu0 %v1073, 1
  %v1405 = vpop.permute.xlu0 %1404
  %1406 = vrot.lane.b32.xlu0 %v1074, 1
  %v1407 = vpop.permute.xlu0 %1406
  %1408 = vrot.lane.b32.xlu0 %v1075, 1
  %v1409 = vpop.permute.xlu0 %1408
  %1410 = vrot.lane.b32.xlu0 %v1076, 1
  %v1411 = vpop.permute.xlu0 %1410
  %1412 = vrot.lane.b32.xlu0 %v1077, 1
  %v1413 = vpop.permute.xlu0 %1412
  %1414 = vrot.lane.b32.xlu0 %v1078, 1
  %v1415 = vpop.permute.xlu0 %1414
  %1416 = vrot.lane.b32.xlu0 %v1079, 1
  %v1417 = vpop.permute.xlu0 %1416
  %1418 = vrot.lane.b32.xlu0 %v1080, 1
  %v1419 = vpop.permute.xlu0 %1418
  %1420 = vrot.lane.b32.xlu0 %v1081, 1
  %v1421 = vpop.permute.xlu0 %1420
  %1422 = vrot.lane.b32.xlu0 %v1082, 1
  %v1423 = vpop.permute.xlu0 %1422
  %1424 = vrot.lane.b32.xlu0 %v1083, 1
  %v1425 = vpop.permute.xlu0 %1424
  %1426 = vrot.lane.b32.xlu0 %v1084, 1
  %v1427 = vpop.permute.xlu0 %1426
  %1428 = vrot.lane.b32.xlu0 %v1085, 1
  %v1429 = vpop.permute.xlu0 %1428
  %1430 = vrot.lane.b32.xlu0 %v1086, 1
  %v1431 = vpop.permute.xlu0 %1430
  %1432 = vrot.lane.b32.xlu0 %v1087, 1
  %v1433 = vpop.permute.xlu0 %1432
  %1434 = vrot.lane.b32.xlu0 %v1088, 1
  %v1435 = vpop.permute.xlu0 %1434
  %1436 = vrot.lane.b32.xlu0 %v1089, 1
  %v1437 = vpop.permute.xlu0 %1436
  %1438 = vrot.lane.b32.xlu0 %v1090, 1
  %v1439 = vpop.permute.xlu0 %1438
  %1440 = vrot.lane.b32.xlu0 %v1091, 1
  %v1441 = vpop.permute.xlu0 %1440
  %1442 = vrot.lane.b32.xlu0 %v1092, 1
  %v1443 = vpop.permute.xlu0 %1442
  %1444 = vrot.lane.b32.xlu0 %v1093, 1
  %v1445 = vpop.permute.xlu0 %1444
  %1446 = vrot.lane.b32.xlu0 %v1094, 1
  %v1447 = vpop.permute.xlu0 %1446
  %1448 = vrot.lane.b32.xlu0 %v1095, 1
  %v1449 = vpop.permute.xlu0 %1448
  %1450 = vrot.lane.b32.xlu0 %v1096, 1
  %v1451 = vpop.permute.xlu0 %1450
  %1452 = vrot.lane.b32.xlu0 %v1097, 1
  %v1453 = vpop.permute.xlu0 %1452
  %1454 = vrot.lane.b32.xlu0 %v1098, 1
  %v1455 = vpop.permute.xlu0 %1454
  %1456 = vrot.lane.b32.xlu0 %v1099, 1
  %v1457 = vpop.permute.xlu0 %1456
  %1458 = vrot.lane.b32.xlu0 %v1100, 1
  %v1459 = vpop.permute.xlu0 %1458
  %1460 = vrot.lane.b32.xlu0 %v1101, 1
  %v1461 = vpop.permute.xlu0 %1460
  %1462 = vrot.lane.b32.xlu0 %v1102, 1
  %v1463 = vpop.permute.xlu0 %1462
  %1464 = vrot.lane.b32.xlu0 %v1103, 1
  %v1465 = vpop.permute.xlu0 %1464
  %1466 = vrot.lane.b32.xlu0 %v1104, 1
  %v1467 = vpop.permute.xlu0 %1466
  %1468 = vrot.lane.b32.xlu0 %v1105, 1
  %v1469 = vpop.permute.xlu0 %1468
  %1470 = vrot.lane.b32.xlu0 %v1106, 1
  %v1471 = vpop.permute.xlu0 %1470
  %1472 = vrot.lane.b32.xlu0 %v1107, 1
  %v1473 = vpop.permute.xlu0 %1472
  %1474 = vrot.lane.b32.xlu0 %v1108, 1
  %v1475 = vpop.permute.xlu0 %1474
  %1476 = vrot.lane.b32.xlu0 %v1109, 1
  %v1477 = vpop.permute.xlu0 %1476
  %1478 = vrot.lane.b32.xlu0 %v1110, 1
  %v1479 = vpop.permute.xlu0 %1478
  %1480 = vrot.lane.b32.xlu0 %v1111, 1
  %v1481 = vpop.permute.xlu0 %1480
  %1482 = vrot.lane.b32.xlu0 %v1112, 1
  %v1483 = vpop.permute.xlu0 %1482
  %1484 = vrot.lane.b32.xlu0 %v1113, 1
  %v1485 = vpop.permute.xlu0 %1484
  %1486 = vrot.lane.b32.xlu0 %v1114, 1
  %v1487 = vpop.permute.xlu0 %1486
  %1488 = vrot.lane.b32.xlu0 %v1115, 1
  %v1489 = vpop.permute.xlu0 %1488
  %1490 = vrot.lane.b32.xlu0 %v1116, 1
  %v1491 = vpop.permute.xlu0 %1490
  %1492 = vrot.lane.b32.xlu0 %v1117, 1
  %v1493 = vpop.permute.xlu0 %1492
  %1494 = vrot.lane.b32.xlu0 %v1118, 1
  %v1495 = vpop.permute.xlu0 %1494
  %1496 = vrot.lane.b32.xlu0 %v1119, 1
  %v1497 = vpop.permute.xlu0 %1496
  %1498 = vrot.lane.b32.xlu0 %v1120, 1
  %v1499 = vpop.permute.xlu0 %1498
  %1500 = vrot.lane.b32.xlu0 %v1121, 1
  %v1501 = vpop.permute.xlu0 %1500
  %1502 = vrot.lane.b32.xlu0 %v1122, 1
  %v1503 = vpop.permute.xlu0 %1502
  %1504 = vrot.lane.b32.xlu0 %v1123, 1
  %v1505 = vpop.permute.xlu0 %1504
  %1506 = vrot.lane.b32.xlu0 %v1124, 1
  %v1507 = vpop.permute.xlu0 %1506
  %1508 = vrot.lane.b32.xlu0 %v1125, 1
  %v1509 = vpop.permute.xlu0 %1508
  %vm1638 = vcmp.gt.f32.partialorder %v998, %v1255
  %vm1639 = vcmp.gt.f32.partialorder %v999, %v1257
  %vm1640 = vcmp.gt.f32.partialorder %v1000, %v1259
  %vm1641 = vcmp.gt.f32.partialorder %v1001, %v1261
  %vm1642 = vcmp.gt.f32.partialorder %v1002, %v1263
  %vm1643 = vcmp.gt.f32.partialorder %v1003, %v1265
  %vm1644 = vcmp.gt.f32.partialorder %v1004, %v1267
  %vm1645 = vcmp.gt.f32.partialorder %v1005, %v1269
  %vm1646 = vcmp.gt.f32.partialorder %v1006, %v1271
  %vm1647 = vcmp.gt.f32.partialorder %v1007, %v1273
  %vm1648 = vcmp.gt.f32.partialorder %v1008, %v1275
  %vm1649 = vcmp.gt.f32.partialorder %v1009, %v1277
  %vm1650 = vcmp.gt.f32.partialorder %v1010, %v1279
  %vm1651 = vcmp.gt.f32.partialorder %v1011, %v1281
  %vm1652 = vcmp.gt.f32.partialorder %v1012, %v1283
  %vm1653 = vcmp.gt.f32.partialorder %v1013, %v1285
  %vm1654 = vcmp.gt.f32.partialorder %v1014, %v1287
  %vm1655 = vcmp.gt.f32.partialorder %v1015, %v1289
  %vm1656 = vcmp.gt.f32.partialorder %v1016, %v1291
  %vm1657 = vcmp.gt.f32.partialorder %v1017, %v1293
  %vm1658 = vcmp.gt.f32.partialorder %v1018, %v1295
  %vm1659 = vcmp.gt.f32.partialorder %v1019, %v1297
  %vm1660 = vcmp.gt.f32.partialorder %v1020, %v1299
  %vm1661 = vcmp.gt.f32.partialorder %v1021, %v1301
  %vm1662 = vcmp.gt.f32.partialorder %v1022, %v1303
  %vm1663 = vcmp.gt.f32.partialorder %v1023, %v1305
  %vm1664 = vcmp.gt.f32.partialorder %v1024, %v1307
  %vm1665 = vcmp.gt.f32.partialorder %v1025, %v1309
  %vm1666 = vcmp.gt.f32.partialorder %v1026, %v1311
  %vm1667 = vcmp.gt.f32.partialorder %v1027, %v1313
  %vm1668 = vcmp.gt.f32.partialorder %v1028, %v1315
  %vm1669 = vcmp.gt.f32.partialorder %v1029, %v1317
  %vm1670 = vcmp.gt.f32.partialorder %v1030, %v1319
  %vm1671 = vcmp.gt.f32.partialorder %v1031, %v1321
  %vm1672 = vcmp.gt.f32.partialorder %v1032, %v1323
  %vm1673 = vcmp.gt.f32.partialorder %v1033, %v1325
  %vm1674 = vcmp.gt.f32.partialorder %v1034, %v1327
  %vm1675 = vcmp.gt.f32.partialorder %v1035, %v1329
  %vm1676 = vcmp.gt.f32.partialorder %v1036, %v1331
  %vm1677 = vcmp.gt.f32.partialorder %v1037, %v1333
  %vm1678 = vcmp.gt.f32.partialorder %v1038, %v1335
  %vm1679 = vcmp.gt.f32.partialorder %v1039, %v1337
  %vm1680 = vcmp.gt.f32.partialorder %v1040, %v1339
  %vm1681 = vcmp.gt.f32.partialorder %v1041, %v1341
  %vm1682 = vcmp.gt.f32.partialorder %v1042, %v1343
  %vm1683 = vcmp.gt.f32.partialorder %v1043, %v1345
  %vm1684 = vcmp.gt.f32.partialorder %v1044, %v1347
  %vm1685 = vcmp.gt.f32.partialorder %v1045, %v1349
  %vm1686 = vcmp.gt.f32.partialorder %v1046, %v1351
  %vm1687 = vcmp.gt.f32.partialorder %v1047, %v1353
  %vm1688 = vcmp.gt.f32.partialorder %v1048, %v1355
  %vm1689 = vcmp.gt.f32.partialorder %v1049, %v1357
  %vm1690 = vcmp.gt.f32.partialorder %v1050, %v1359
  %vm1691 = vcmp.gt.f32.partialorder %v1051, %v1361
  %vm1692 = vcmp.gt.f32.partialorder %v1052, %v1363
  %vm1693 = vcmp.gt.f32.partialorder %v1053, %v1365
  %vm1694 = vcmp.gt.f32.partialorder %v1054, %v1367
  %vm1695 = vcmp.gt.f32.partialorder %v1055, %v1369
  %vm1696 = vcmp.gt.f32.partialorder %v1056, %v1371
  %vm1697 = vcmp.gt.f32.partialorder %v1057, %v1373
  %vm1698 = vcmp.gt.f32.partialorder %v1058, %v1375
  %vm1699 = vcmp.gt.f32.partialorder %v1059, %v1377
  %vm1700 = vcmp.gt.f32.partialorder %v1060, %v1379
  %vm1701 = vcmp.gt.f32.partialorder %v1061, %v1381
  %vm1702 = vcmp.gt.f32.partialorder %v1062, %v1383
  %vm1703 = vcmp.gt.f32.partialorder %v1063, %v1385
  %vm1704 = vcmp.gt.f32.partialorder %v1064, %v1387
  %vm1705 = vcmp.gt.f32.partialorder %v1065, %v1389
  %vm1706 = vcmp.gt.f32.partialorder %v1066, %v1391
  %vm1707 = vcmp.gt.f32.partialorder %v1067, %v1393
  %vm1708 = vcmp.gt.f32.partialorder %v1068, %v1395
  %vm1709 = vcmp.gt.f32.partialorder %v1069, %v1397
  %vm1710 = vcmp.gt.f32.partialorder %v1070, %v1399
  %vm1711 = vcmp.gt.f32.partialorder %v1071, %v1401
  %vm1712 = vcmp.gt.f32.partialorder %v1072, %v1403
  %vm1713 = vcmp.gt.f32.partialorder %v1073, %v1405
  %vm1714 = vcmp.gt.f32.partialorder %v1074, %v1407
  %vm1715 = vcmp.gt.f32.partialorder %v1075, %v1409
  %vm1716 = vcmp.gt.f32.partialorder %v1076, %v1411
  %vm1717 = vcmp.gt.f32.partialorder %v1077, %v1413
  %vm1718 = vcmp.gt.f32.partialorder %v1078, %v1415
  %vm1719 = vcmp.gt.f32.partialorder %v1079, %v1417
  %vm1720 = vcmp.gt.f32.partialorder %v1080, %v1419
  %vm1721 = vcmp.gt.f32.partialorder %v1081, %v1421
  %vm1722 = vcmp.gt.f32.partialorder %v1082, %v1423
  %vm1723 = vcmp.gt.f32.partialorder %v1083, %v1425
  %vm1724 = vcmp.gt.f32.partialorder %v1084, %v1427
  %vm1725 = vcmp.gt.f32.partialorder %v1085, %v1429
  %vm1726 = vcmp.gt.f32.partialorder %v1086, %v1431
  %vm1727 = vcmp.gt.f32.partialorder %v1087, %v1433
  %vm1728 = vcmp.gt.f32.partialorder %v1088, %v1435
  %vm1729 = vcmp.gt.f32.partialorder %v1089, %v1437
  %vm1730 = vcmp.gt.f32.partialorder %v1090, %v1439
  %vm1731 = vcmp.gt.f32.partialorder %v1091, %v1441
  %vm1732 = vcmp.gt.f32.partialorder %v1092, %v1443
  %vm1733 = vcmp.gt.f32.partialorder %v1093, %v1445
  %vm1734 = vcmp.gt.f32.partialorder %v1094, %v1447
  %vm1735 = vcmp.gt.f32.partialorder %v1095, %v1449
  %vm1736 = vcmp.gt.f32.partialorder %v1096, %v1451
  %vm1737 = vcmp.gt.f32.partialorder %v1097, %v1453
  %vm1738 = vcmp.gt.f32.partialorder %v1098, %v1455
  %vm1739 = vcmp.gt.f32.partialorder %v1099, %v1457
  %vm1740 = vcmp.gt.f32.partialorder %v1100, %v1459
  %vm1741 = vcmp.gt.f32.partialorder %v1101, %v1461
  %vm1742 = vcmp.gt.f32.partialorder %v1102, %v1463
  %vm1743 = vcmp.gt.f32.partialorder %v1103, %v1465
  %vm1744 = vcmp.gt.f32.partialorder %v1104, %v1467
  %vm1745 = vcmp.gt.f32.partialorder %v1105, %v1469
  %vm1746 = vcmp.gt.f32.partialorder %v1106, %v1471
  %vm1747 = vcmp.gt.f32.partialorder %v1107, %v1473
  %vm1748 = vcmp.gt.f32.partialorder %v1108, %v1475
  %vm1749 = vcmp.gt.f32.partialorder %v1109, %v1477
  %vm1750 = vcmp.gt.f32.partialorder %v1110, %v1479
  %vm1751 = vcmp.gt.f32.partialorder %v1111, %v1481
  %vm1752 = vcmp.gt.f32.partialorder %v1112, %v1483
  %vm1753 = vcmp.gt.f32.partialorder %v1113, %v1485
  %vm1754 = vcmp.gt.f32.partialorder %v1114, %v1487
  %vm1755 = vcmp.gt.f32.partialorder %v1115, %v1489
  %vm1756 = vcmp.gt.f32.partialorder %v1116, %v1491
  %vm1757 = vcmp.gt.f32.partialorder %v1117, %v1493
  %vm1758 = vcmp.gt.f32.partialorder %v1118, %v1495
  %vm1759 = vcmp.gt.f32.partialorder %v1119, %v1497
  %vm1760 = vcmp.gt.f32.partialorder %v1120, %v1499
  %vm1761 = vcmp.gt.f32.partialorder %v1121, %v1501
  %vm1762 = vcmp.gt.f32.partialorder %v1122, %v1503
  %vm1763 = vcmp.gt.f32.partialorder %v1123, %v1505
  %vm1764 = vcmp.gt.f32.partialorder %v1124, %v1507
  %vm1765 = vcmp.gt.f32.partialorder %v1125, %v1509
  %v1766 = vsel %vm1638, 1, 0
  %v1767 = vsel %vm1639, 1, 0
  %v1768 = vsel %vm1640, 1, 0
  %v1769 = vsel %vm1641, 1, 0
  %v1770 = vsel %vm1642, 1, 0
  %v1771 = vsel %vm1643, 1, 0
  %v1772 = vsel %vm1644, 1, 0
  %v1773 = vsel %vm1645, 1, 0
  %v1774 = vsel %vm1646, 1, 0
  %v1775 = vsel %vm1647, 1, 0
  %v1776 = vsel %vm1648, 1, 0
  %v1777 = vsel %vm1649, 1, 0
  %v1778 = vsel %vm1650, 1, 0
  %v1779 = vsel %vm1651, 1, 0
  %v1780 = vsel %vm1652, 1, 0
  %v1781 = vsel %vm1653, 1, 0
  %v1782 = vsel %vm1654, 1, 0
  %v1783 = vsel %vm1655, 1, 0
  %v1784 = vsel %vm1656, 1, 0
  %v1785 = vsel %vm1657, 1, 0
  %v1786 = vsel %vm1658, 1, 0
  %v1787 = vsel %vm1659, 1, 0
  %v1788 = vsel %vm1660, 1, 0
  %v1789 = vsel %vm1661, 1, 0
  %v1790 = vsel %vm1662, 1, 0
  %v1791 = vsel %vm1663, 1, 0
  %v1792 = vsel %vm1664, 1, 0
  %v1793 = vsel %vm1665, 1, 0
  %v1794 = vsel %vm1666, 1, 0
  %v1795 = vsel %vm1667, 1, 0
  %v1796 = vsel %vm1668, 1, 0
  %v1797 = vsel %vm1669, 1, 0
  %v1798 = vsel %vm1670, 1, 0
  %v1799 = vsel %vm1671, 1, 0
  %v1800 = vsel %vm1672, 1, 0
  %v1801 = vsel %vm1673, 1, 0
  %v1802 = vsel %vm1674, 1, 0
  %v1803 = vsel %vm1675, 1, 0
  %v1804 = vsel %vm1676, 1, 0
  %v1805 = vsel %vm1677, 1, 0
  %v1806 = vsel %vm1678, 1, 0
  %v1807 = vsel %vm1679, 1, 0
  %v1808 = vsel %vm1680, 1, 0
  %v1809 = vsel %vm1681, 1, 0
  %v1810 = vsel %vm1682, 1, 0
  %v1811 = vsel %vm1683, 1, 0
  %v1812 = vsel %vm1684, 1, 0
  %v1813 = vsel %vm1685, 1, 0
  %v1814 = vsel %vm1686, 1, 0
  %v1815 = vsel %vm1687, 1, 0
  %v1816 = vsel %vm1688, 1, 0
  %v1817 = vsel %vm1689, 1, 0
  %v1818 = vsel %vm1690, 1, 0
  %v1819 = vsel %vm1691, 1, 0
  %v1820 = vsel %vm1692, 1, 0
  %v1821 = vsel %vm1693, 1, 0
  %v1822 = vsel %vm1694, 1, 0
  %v1823 = vsel %vm1695, 1, 0
  %v1824 = vsel %vm1696, 1, 0
  %v1825 = vsel %vm1697, 1, 0
  %v1826 = vsel %vm1698, 1, 0
  %v1827 = vsel %vm1699, 1, 0
  %v1828 = vsel %vm1700, 1, 0
  %v1829 = vsel %vm1701, 1, 0
  %v1830 = vsel %vm1702, 1, 0
  %v1831 = vsel %vm1703, 1, 0
  %v1832 = vsel %vm1704, 1, 0
  %v1833 = vsel %vm1705, 1, 0
  %v1834 = vsel %vm1706, 1, 0
  %v1835 = vsel %vm1707, 1, 0
  %v1836 = vsel %vm1708, 1, 0
  %v1837 = vsel %vm1709, 1, 0
  %v1838 = vsel %vm1710, 1, 0
  %v1839 = vsel %vm1711, 1, 0
  %v1840 = vsel %vm1712, 1, 0
  %v1841 = vsel %vm1713, 1, 0
  %v1842 = vsel %vm1714, 1, 0
  %v1843 = vsel %vm1715, 1, 0
  %v1844 = vsel %vm1716, 1, 0
  %v1845 = vsel %vm1717, 1, 0
  %v1846 = vsel %vm1718, 1, 0
  %v1847 = vsel %vm1719, 1, 0
  %v1848 = vsel %vm1720, 1, 0
  %v1849 = vsel %vm1721, 1, 0
  %v1850 = vsel %vm1722, 1, 0
  %v1851 = vsel %vm1723, 1, 0
  %v1852 = vsel %vm1724, 1, 0
  %v1853 = vsel %vm1725, 1, 0
  %v1854 = vsel %vm1726, 1, 0
  %v1855 = vsel %vm1727, 1, 0
  %v1856 = vsel %vm1728, 1, 0
  %v1857 = vsel %vm1729, 1, 0
  %v1858 = vsel %vm1730, 1, 0
  %v1859 = vsel %vm1731, 1, 0
  %v1860 = vsel %vm1732, 1, 0
  %v1861 = vsel %vm1733, 1, 0
  %v1862 = vsel %vm1734, 1, 0
  %v1863 = vsel %vm1735, 1, 0
  %v1864 = vsel %vm1736, 1, 0
  %v1865 = vsel %vm1737, 1, 0
  %v1866 = vsel %vm1738, 1, 0
  %v1867 = vsel %vm1739, 1, 0
  %v1868 = vsel %vm1740, 1, 0
  %v1869 = vsel %vm1741, 1, 0
  %v1870 = vsel %vm1742, 1, 0
  %v1871 = vsel %vm1743, 1, 0
  %v1872 = vsel %vm1744, 1, 0
  %v1873 = vsel %vm1745, 1, 0
  %v1874 = vsel %vm1746, 1, 0
  %v1875 = vsel %vm1747, 1, 0
  %v1876 = vsel %vm1748, 1, 0
  %v1877 = vsel %vm1749, 1, 0
  %v1878 = vsel %vm1750, 1, 0
  %v1879 = vsel %vm1751, 1, 0
  %v1880 = vsel %vm1752, 1, 0
  %v1881 = vsel %vm1753, 1, 0
  %v1882 = vsel %vm1754, 1, 0
  %v1883 = vsel %vm1755, 1, 0
  %v1884 = vsel %vm1756, 1, 0
  %v1885 = vsel %vm1757, 1, 0
  %v1886 = vsel %vm1758, 1, 0
  %v1887 = vsel %vm1759, 1, 0
  %v1888 = vsel %vm1760, 1, 0
  %v1889 = vsel %vm1761, 1, 0
  %v1890 = vsel %vm1762, 1, 0
  %v1891 = vsel %vm1763, 1, 0
  %v1892 = vsel %vm1764, 1, 0
  %v1893 = vsel %vm1765, 1, 0
  %v1894 = vcvt.s32.f32 %v1766
  %v1895 = vcvt.s32.f32 %v1767
  %v1896 = vcvt.s32.f32 %v1768
  %v1897 = vcvt.s32.f32 %v1769
  %v1898 = vcvt.s32.f32 %v1770
  %v1899 = vcvt.s32.f32 %v1771
  %v1900 = vcvt.s32.f32 %v1772
  %v1901 = vcvt.s32.f32 %v1773
  %v1902 = vcvt.s32.f32 %v1774
  %v1903 = vcvt.s32.f32 %v1775
  %v1904 = vcvt.s32.f32 %v1776
  %v1905 = vcvt.s32.f32 %v1777
  %v1906 = vcvt.s32.f32 %v1778
  %v1907 = vcvt.s32.f32 %v1779
  %v1908 = vcvt.s32.f32 %v1780
  %v1909 = vcvt.s32.f32 %v1781
  %v1910 = vcvt.s32.f32 %v1782
  %v1911 = vcvt.s32.f32 %v1783
  %v1912 = vcvt.s32.f32 %v1784
  %v1913 = vcvt.s32.f32 %v1785
  %v1914 = vcvt.s32.f32 %v1786
  %v1915 = vcvt.s32.f32 %v1787
  %v1916 = vcvt.s32.f32 %v1788
  %v1917 = vcvt.s32.f32 %v1789
  %v1918 = vcvt.s32.f32 %v1790
  %v1919 = vcvt.s32.f32 %v1791
  %v1920 = vcvt.s32.f32 %v1792
  %v1921 = vcvt.s32.f32 %v1793
  %v1922 = vcvt.s32.f32 %v1794
  %v1923 = vcvt.s32.f32 %v1795
  %v1924 = vcvt.s32.f32 %v1796
  %v1925 = vcvt.s32.f32 %v1797
  %v1926 = vcvt.s32.f32 %v1798
  %v1927 = vcvt.s32.f32 %v1799
  %v1928 = vcvt.s32.f32 %v1800
  %v1929 = vcvt.s32.f32 %v1801
  %v1930 = vcvt.s32.f32 %v1802
  %v1931 = vcvt.s32.f32 %v1803
  %v1932 = vcvt.s32.f32 %v1804
  %v1933 = vcvt.s32.f32 %v1805
  %v1934 = vcvt.s32.f32 %v1806
  %v1935 = vcvt.s32.f32 %v1807
  %v1936 = vcvt.s32.f32 %v1808
  %v1937 = vcvt.s32.f32 %v1809
  %v1938 = vcvt.s32.f32 %v1810
  %v1939 = vcvt.s32.f32 %v1811
  %v1940 = vcvt.s32.f32 %v1812
  %v1941 = vcvt.s32.f32 %v1813
  %v1942 = vcvt.s32.f32 %v1814
  %v1943 = vcvt.s32.f32 %v1815
  %v1944 = vcvt.s32.f32 %v1816
  %v1945 = vcvt.s32.f32 %v1817
  %v1946 = vcvt.s32.f32 %v1818
  %v1947 = vcvt.s32.f32 %v1819
  %v1948 = vcvt.s32.f32 %v1820
  %v1949 = vcvt.s32.f32 %v1821
  %v1950 = vcvt.s32.f32 %v1822
  %v1951 = vcvt.s32.f32 %v1823
  %v1952 = vcvt.s32.f32 %v1824
  %v1953 = vcvt.s32.f32 %v1825
  %v1954 = vcvt.s32.f32 %v1826
  %v1955 = vcvt.s32.f32 %v1827
  %v1956 = vcvt.s32.f32 %v1828
  %v1957 = vcvt.s32.f32 %v1829
  %v1958 = vcvt.s32.f32 %v1830
  %v1959 = vcvt.s32.f32 %v1831
  %v1960 = vcvt.s32.f32 %v1832
  %v1961 = vcvt.s32.f32 %v1833
  %v1962 = vcvt.s32.f32 %v1834
  %v1963 = vcvt.s32.f32 %v1835
  %v1964 = vcvt.s32.f32 %v1836
  %v1965 = vcvt.s32.f32 %v1837
  %v1966 = vcvt.s32.f32 %v1838
  %v1967 = vcvt.s32.f32 %v1839
  %v1968 = vcvt.s32.f32 %v1840
  %v1969 = vcvt.s32.f32 %v1841
  %v1970 = vcvt.s32.f32 %v1842
  %v1971 = vcvt.s32.f32 %v1843
  %v1972 = vcvt.s32.f32 %v1844
  %v1973 = vcvt.s32.f32 %v1845
  %v1974 = vcvt.s32.f32 %v1846
  %v1975 = vcvt.s32.f32 %v1847
  %v1976 = vcvt.s32.f32 %v1848
  %v1977 = vcvt.s32.f32 %v1849
  %v1978 = vcvt.s32.f32 %v1850
  %v1979 = vcvt.s32.f32 %v1851
  %v1980 = vcvt.s32.f32 %v1852
  %v1981 = vcvt.s32.f32 %v1853
  %v1982 = vcvt.s32.f32 %v1854
  %v1983 = vcvt.s32.f32 %v1855
  %v1984 = vcvt.s32.f32 %v1856
  %v1985 = vcvt.s32.f32 %v1857
  %v1986 = vcvt.s32.f32 %v1858
  %v1987 = vcvt.s32.f32 %v1859
  %v1988 = vcvt.s32.f32 %v1860
  %v1989 = vcvt.s32.f32 %v1861
  %v1990 = vcvt.s32.f32 %v1862
  %v1991 = vcvt.s32.f32 %v1863
  %v1992 = vcvt.s32.f32 %v1864
  %v1993 = vcvt.s32.f32 %v1865
  %v1994 = vcvt.s32.f32 %v1866
  %v1995 = vcvt.s32.f32 %v1867
  %v1996 = vcvt.s32.f32 %v1868
  %v1997 = vcvt.s32.f32 %v1869
  %v1998 = vcvt.s32.f32 %v1870
  %v1999 = vcvt.s32.f32 %v1871
  %v2000 = vcvt.s32.f32 %v1872
  %v2001 = vcvt.s32.f32 %v1873
  %v2002 = vcvt.s32.f32 %v1874
  %v2003 = vcvt.s32.f32 %v1875
  %v2004 = vcvt.s32.f32 %v1876
  %v2005 = vcvt.s32.f32 %v1877
  %v2006 = vcvt.s32.f32 %v1878
  %v2007 = vcvt.s32.f32 %v1879
  %v2008 = vcvt.s32.f32 %v1880
  %v2009 = vcvt.s32.f32 %v1881
  %v2010 = vcvt.s32.f32 %v1882
  %v2011 = vcvt.s32.f32 %v1883
  %v2012 = vcvt.s32.f32 %v1884
  %v2013 = vcvt.s32.f32 %v1885
  %v2014 = vcvt.s32.f32 %v1886
  %v2015 = vcvt.s32.f32 %v1887
  %v2016 = vcvt.s32.f32 %v1888
  %v2017 = vcvt.s32.f32 %v1889
  %v2018 = vcvt.s32.f32 %v1890
  %v2019 = vcvt.s32.f32 %v1891
  %v2020 = vcvt.s32.f32 %v1892
  %v2021 = vcvt.s32.f32 %v1893
  %v2022 = vmax.f32 %v870, 0.0
  %v2023 = vmax.f32 %v871, 0.0
  %v2024 = vmax.f32 %v872, 0.0
  %v2025 = vmax.f32 %v873, 0.0
  %v2026 = vmax.f32 %v874, 0.0
  %v2027 = vmax.f32 %v875, 0.0
  %v2028 = vmax.f32 %v876, 0.0
  %v2029 = vmax.f32 %v877, 0.0
  %v2030 = vmax.f32 %v878, 0.0
  %v2031 = vmax.f32 %v879, 0.0
  %v2032 = vmax.f32 %v880, 0.0
  %v2033 = vmax.f32 %v881, 0.0
  %v2034 = vmax.f32 %v882, 0.0
  %v2035 = vmax.f32 %v883, 0.0
  %v2036 = vmax.f32 %v884, 0.0
  %v2037 = vmax.f32 %v885, 0.0
  %v2038 = vmax.f32 %v886, 0.0
  %v2039 = vmax.f32 %v887, 0.0
  %v2040 = vmax.f32 %v888, 0.0
  %v2041 = vmax.f32 %v889, 0.0
  %v2042 = vmax.f32 %v890, 0.0
  %v2043 = vmax.f32 %v891, 0.0
  %v2044 = vmax.f32 %v892, 0.0
  %v2045 = vmax.f32 %v893, 0.0
  %v2046 = vmax.f32 %v894, 0.0
  %v2047 = vmax.f32 %v895, 0.0
  %v2048 = vmax.f32 %v896, 0.0
  %v2049 = vmax.f32 %v897, 0.0
  %v2050 = vmax.f32 %v898, 0.0
  %v2051 = vmax.f32 %v899, 0.0
  %v2052 = vmax.f32 %v900, 0.0
  %v2053 = vmax.f32 %v901, 0.0
  %v2054 = vmax.f32 %v902, 0.0
  %v2055 = vmax.f32 %v903, 0.0
  %v2056 = vmax.f32 %v904, 0.0
  %v2057 = vmax.f32 %v905, 0.0
  %v2058 = vmax.f32 %v906, 0.0
  %v2059 = vmax.f32 %v907, 0.0
  %v2060 = vmax.f32 %v908, 0.0
  %v2061 = vmax.f32 %v909, 0.0
  %v2062 = vmax.f32 %v910, 0.0
  %v2063 = vmax.f32 %v911, 0.0
  %v2064 = vmax.f32 %v912, 0.0
  %v2065 = vmax.f32 %v913, 0.0
  %v2066 = vmax.f32 %v914, 0.0
  %v2067 = vmax.f32 %v915, 0.0
  %v2068 = vmax.f32 %v916, 0.0
  %v2069 = vmax.f32 %v917, 0.0
  %v2070 = vmax.f32 %v918, 0.0
  %v2071 = vmax.f32 %v919, 0.0
  %v2072 = vmax.f32 %v920, 0.0
  %v2073 = vmax.f32 %v921, 0.0
  %v2074 = vmax.f32 %v922, 0.0
  %v2075 = vmax.f32 %v923, 0.0
  %v2076 = vmax.f32 %v924, 0.0
  %v2077 = vmax.f32 %v925, 0.0
  %v2078 = vmax.f32 %v926, 0.0
  %v2079 = vmax.f32 %v927, 0.0
  %v2080 = vmax.f32 %v928, 0.0
  %v2081 = vmax.f32 %v929, 0.0
  %v2082 = vmax.f32 %v930, 0.0
  %v2083 = vmax.f32 %v931, 0.0
  %v2084 = vmax.f32 %v932, 0.0
  %v2085 = vmax.f32 %v933, 0.0
  %v2086 = vmax.f32 %v934, 0.0
  %v2087 = vmax.f32 %v935, 0.0
  %v2088 = vmax.f32 %v936, 0.0
  %v2089 = vmax.f32 %v937, 0.0
  %v2090 = vmax.f32 %v938, 0.0
  %v2091 = vmax.f32 %v939, 0.0
  %v2092 = vmax.f32 %v940, 0.0
  %v2093 = vmax.f32 %v941, 0.0
  %v2094 = vmax.f32 %v942, 0.0
  %v2095 = vmax.f32 %v943, 0.0
  %v2096 = vmax.f32 %v944, 0.0
  %v2097 = vmax.f32 %v945, 0.0
  %v2098 = vmax.f32 %v946, 0.0
  %v2099 = vmax.f32 %v947, 0.0
  %v2100 = vmax.f32 %v948, 0.0
  %v2101 = vmax.f32 %v949, 0.0
  %v2102 = vmax.f32 %v950, 0.0
  %v2103 = vmax.f32 %v951, 0.0
  %v2104 = vmax.f32 %v952, 0.0
  %v2105 = vmax.f32 %v953, 0.0
  %v2106 = vmax.f32 %v954, 0.0
  %v2107 = vmax.f32 %v955, 0.0
  %v2108 = vmax.f32 %v956, 0.0
  %v2109 = vmax.f32 %v957, 0.0
  %v2110 = vmax.f32 %v958, 0.0
  %v2111 = vmax.f32 %v959, 0.0
  %v2112 = vmax.f32 %v960, 0.0
  %v2113 = vmax.f32 %v961, 0.0
  %v2114 = vmax.f32 %v962, 0.0
  %v2115 = vmax.f32 %v963, 0.0
  %v2116 = vmax.f32 %v964, 0.0
  %v2117 = vmax.f32 %v965, 0.0
  %v2118 = vmax.f32 %v966, 0.0
  %v2119 = vmax.f32 %v967, 0.0
  %v2120 = vmax.f32 %v968, 0.0
  %v2121 = vmax.f32 %v969, 0.0
  %v2122 = vmax.f32 %v970, 0.0
  %v2123 = vmax.f32 %v971, 0.0
  %v2124 = vmax.f32 %v972, 0.0
  %v2125 = vmax.f32 %v973, 0.0
  %v2126 = vmax.f32 %v974, 0.0
  %v2127 = vmax.f32 %v975, 0.0
  %v2128 = vmax.f32 %v976, 0.0
  %v2129 = vmax.f32 %v977, 0.0
  %v2130 = vmax.f32 %v978, 0.0
  %v2131 = vmax.f32 %v979, 0.0
  %v2132 = vmax.f32 %v980, 0.0
  %v2133 = vmax.f32 %v981, 0.0
  %v2134 = vmax.f32 %v982, 0.0
  %v2135 = vmax.f32 %v983, 0.0
  %v2136 = vmax.f32 %v984, 0.0
  %v2137 = vmax.f32 %v985, 0.0
  %v2138 = vmax.f32 %v986, 0.0
  %v2139 = vmax.f32 %v987, 0.0
  %v2140 = vmax.f32 %v988, 0.0
  %v2141 = vmax.f32 %v989, 0.0
  %v2142 = vmax.f32 %v990, 0.0
  %v2143 = vmax.f32 %v991, 0.0
  %v2144 = vmax.f32 %v992, 0.0
  %v2145 = vmax.f32 %v993, 0.0
  %v2146 = vmax.f32 %v994, 0.0
  %v2147 = vmax.f32 %v995, 0.0
  %v2148 = vmax.f32 %v996, 0.0
  %v2149 = vmax.f32 %v997, 0.0
  %2151 = vset.pattern.permute.xlu0 1
  %2152 = vperm.xlu0 %2151, %v1894
  %v2153 = vpop.permute.xlu0 %2152
  %2156 = vset.pattern.permute.xlu0 1
  %2157 = vperm.xlu0 %2156, %v1895
  %v2158 = vpop.permute.xlu0 %2157
  %2161 = vset.pattern.permute.xlu0 1
  %2162 = vperm.xlu0 %2161, %v1896
  %v2163 = vpop.permute.xlu0 %2162
  %2166 = vset.pattern.permute.xlu0 1
  %2167 = vperm.xlu0 %2166, %v1897
  %v2168 = vpop.permute.xlu0 %2167
  %2171 = vset.pattern.permute.xlu0 1
  %2172 = vperm.xlu0 %2171, %v1898
  %v2173 = vpop.permute.xlu0 %2172
  %2176 = vset.pattern.permute.xlu0 1
  %2177 = vperm.xlu0 %2176, %v1899
  %v2178 = vpop.permute.xlu0 %2177
  %2181 = vset.pattern.permute.xlu0 1
  %2182 = vperm.xlu0 %2181, %v1900
  %v2183 = vpop.permute.xlu0 %2182
  %2186 = vset.pattern.permute.xlu0 1
  %2187 = vperm.xlu0 %2186, %v1901
  %v2188 = vpop.permute.xlu0 %2187
  %2191 = vset.pattern.permute.xlu0 1
  %2192 = vperm.xlu0 %2191, %v1902
  %v2193 = vpop.permute.xlu0 %2192
  %2196 = vset.pattern.permute.xlu0 1
  %2197 = vperm.xlu0 %2196, %v1903
  %v2198 = vpop.permute.xlu0 %2197
  %2201 = vset.pattern.permute.xlu0 1
  %2202 = vperm.xlu0 %2201, %v1904
  %v2203 = vpop.permute.xlu0 %2202
  %2206 = vset.pattern.permute.xlu0 1
  %2207 = vperm.xlu0 %2206, %v1905
  %v2208 = vpop.permute.xlu0 %2207
  %2211 = vset.pattern.permute.xlu0 1
  %2212 = vperm.xlu0 %2211, %v1906
  %v2213 = vpop.permute.xlu0 %2212
  %2216 = vset.pattern.permute.xlu0 1
  %2217 = vperm.xlu0 %2216, %v1907
  %v2218 = vpop.permute.xlu0 %2217
  %2221 = vset.pattern.permute.xlu0 1
  %2222 = vperm.xlu0 %2221, %v1908
  %v2223 = vpop.permute.xlu0 %2222
  %2226 = vset.pattern.permute.xlu0 1
  %2227 = vperm.xlu0 %2226, %v1909
  %v2228 = vpop.permute.xlu0 %2227
  %2231 = vset.pattern.permute.xlu0 1
  %2232 = vperm.xlu0 %2231, %v1910
  %v2233 = vpop.permute.xlu0 %2232
  %2236 = vset.pattern.permute.xlu0 1
  %2237 = vperm.xlu0 %2236, %v1911
  %v2238 = vpop.permute.xlu0 %2237
  %2241 = vset.pattern.permute.xlu0 1
  %2242 = vperm.xlu0 %2241, %v1912
  %v2243 = vpop.permute.xlu0 %2242
  %2246 = vset.pattern.permute.xlu0 1
  %2247 = vperm.xlu0 %2246, %v1913
  %v2248 = vpop.permute.xlu0 %2247
  %2251 = vset.pattern.permute.xlu0 1
  %2252 = vperm.xlu0 %2251, %v1914
  %v2253 = vpop.permute.xlu0 %2252
  %2256 = vset.pattern.permute.xlu0 1
  %2257 = vperm.xlu0 %2256, %v1915
  %v2258 = vpop.permute.xlu0 %2257
  %2261 = vset.pattern.permute.xlu0 1
  %2262 = vperm.xlu0 %2261, %v1916
  %v2263 = vpop.permute.xlu0 %2262
  %2266 = vset.pattern.permute.xlu0 1
  %2267 = vperm.xlu0 %2266, %v1917
  %v2268 = vpop.permute.xlu0 %2267
  %2271 = vset.pattern.permute.xlu0 1
  %2272 = vperm.xlu0 %2271, %v1918
  %v2273 = vpop.permute.xlu0 %2272
  %2276 = vset.pattern.permute.xlu0 1
  %2277 = vperm.xlu0 %2276, %v1919
  %v2278 = vpop.permute.xlu0 %2277
  %2281 = vset.pattern.permute.xlu0 1
  %2282 = vperm.xlu0 %2281, %v1920
  %v2283 = vpop.permute.xlu0 %2282
  %2286 = vset.pattern.permute.xlu0 1
  %2287 = vperm.xlu0 %2286, %v1921
  %v2288 = vpop.permute.xlu0 %2287
  %2291 = vset.pattern.permute.xlu0 1
  %2292 = vperm.xlu0 %2291, %v1922
  %v2293 = vpop.permute.xlu0 %2292
  %2296 = vset.pattern.permute.xlu0 1
  %2297 = vperm.xlu0 %2296, %v1923
  %v2298 = vpop.permute.xlu0 %2297
  %2301 = vset.pattern.permute.xlu0 1
  %2302 = vperm.xlu0 %2301, %v1924
  %v2303 = vpop.permute.xlu0 %2302
  %2306 = vset.pattern.permute.xlu0 1
  %2307 = vperm.xlu0 %2306, %v1925
  %v2308 = vpop.permute.xlu0 %2307
  %2311 = vset.pattern.permute.xlu0 1
  %2312 = vperm.xlu0 %2311, %v1926
  %v2313 = vpop.permute.xlu0 %2312
  %2316 = vset.pattern.permute.xlu0 1
  %2317 = vperm.xlu0 %2316, %v1927
  %v2318 = vpop.permute.xlu0 %2317
  %2321 = vset.pattern.permute.xlu0 1
  %2322 = vperm.xlu0 %2321, %v1928
  %v2323 = vpop.permute.xlu0 %2322
  %2326 = vset.pattern.permute.xlu0 1
  %2327 = vperm.xlu0 %2326, %v1929
  %v2328 = vpop.permute.xlu0 %2327
  %2331 = vset.pattern.permute.xlu0 1
  %2332 = vperm.xlu0 %2331, %v1930
  %v2333 = vpop.permute.xlu0 %2332
  %2336 = vset.pattern.permute.xlu0 1
  %2337 = vperm.xlu0 %2336, %v1931
  %v2338 = vpop.permute.xlu0 %2337
  %2341 = vset.pattern.permute.xlu0 1
  %2342 = vperm.xlu0 %2341, %v1932
  %v2343 = vpop.permute.xlu0 %2342
  %2346 = vset.pattern.permute.xlu0 1
  %2347 = vperm.xlu0 %2346, %v1933
  %v2348 = vpop.permute.xlu0 %2347
  %2351 = vset.pattern.permute.xlu0 1
  %2352 = vperm.xlu0 %2351, %v1934
  %v2353 = vpop.permute.xlu0 %2352
  %2356 = vset.pattern.permute.xlu0 1
  %2357 = vperm.xlu0 %2356, %v1935
  %v2358 = vpop.permute.xlu0 %2357
  %2361 = vset.pattern.permute.xlu0 1
  %2362 = vperm.xlu0 %2361, %v1936
  %v2363 = vpop.permute.xlu0 %2362
  %2366 = vset.pattern.permute.xlu0 1
  %2367 = vperm.xlu0 %2366, %v1937
  %v2368 = vpop.permute.xlu0 %2367
  %2371 = vset.pattern.permute.xlu0 1
  %2372 = vperm.xlu0 %2371, %v1938
  %v2373 = vpop.permute.xlu0 %2372
  %2376 = vset.pattern.permute.xlu0 1
  %2377 = vperm.xlu0 %2376, %v1939
  %v2378 = vpop.permute.xlu0 %2377
  %2381 = vset.pattern.permute.xlu0 1
  %2382 = vperm.xlu0 %2381, %v1940
  %v2383 = vpop.permute.xlu0 %2382
  %2386 = vset.pattern.permute.xlu0 1
  %2387 = vperm.xlu0 %2386, %v1941
  %v2388 = vpop.permute.xlu0 %2387
  %2391 = vset.pattern.permute.xlu0 1
  %2392 = vperm.xlu0 %2391, %v1942
  %v2393 = vpop.permute.xlu0 %2392
  %2396 = vset.pattern.permute.xlu0 1
  %2397 = vperm.xlu0 %2396, %v1943
  %v2398 = vpop.permute.xlu0 %2397
  %2401 = vset.pattern.permute.xlu0 1
  %2402 = vperm.xlu0 %2401, %v1944
  %v2403 = vpop.permute.xlu0 %2402
  %2406 = vset.pattern.permute.xlu0 1
  %2407 = vperm.xlu0 %2406, %v1945
  %v2408 = vpop.permute.xlu0 %2407
  %2411 = vset.pattern.permute.xlu0 1
  %2412 = vperm.xlu0 %2411, %v1946
  %v2413 = vpop.permute.xlu0 %2412
  %2416 = vset.pattern.permute.xlu0 1
  %2417 = vperm.xlu0 %2416, %v1947
  %v2418 = vpop.permute.xlu0 %2417
  %2421 = vset.pattern.permute.xlu0 1
  %2422 = vperm.xlu0 %2421, %v1948
  %v2423 = vpop.permute.xlu0 %2422
  %2426 = vset.pattern.permute.xlu0 1
  %2427 = vperm.xlu0 %2426, %v1949
  %v2428 = vpop.permute.xlu0 %2427
  %2431 = vset.pattern.permute.xlu0 1
  %2432 = vperm.xlu0 %2431, %v1950
  %v2433 = vpop.permute.xlu0 %2432
  %2436 = vset.pattern.permute.xlu0 1
  %2437 = vperm.xlu0 %2436, %v1951
  %v2438 = vpop.permute.xlu0 %2437
  %2441 = vset.pattern.permute.xlu0 1
  %2442 = vperm.xlu0 %2441, %v1952
  %v2443 = vpop.permute.xlu0 %2442
  %2446 = vset.pattern.permute.xlu0 1
  %2447 = vperm.xlu0 %2446, %v1953
  %v2448 = vpop.permute.xlu0 %2447
  %2451 = vset.pattern.permute.xlu0 1
  %2452 = vperm.xlu0 %2451, %v1954
  %v2453 = vpop.permute.xlu0 %2452
  %2456 = vset.pattern.permute.xlu0 1
  %2457 = vperm.xlu0 %2456, %v1955
  %v2458 = vpop.permute.xlu0 %2457
  %2461 = vset.pattern.permute.xlu0 1
  %2462 = vperm.xlu0 %2461, %v1956
  %v2463 = vpop.permute.xlu0 %2462
  %2466 = vset.pattern.permute.xlu0 1
  %2467 = vperm.xlu0 %2466, %v1957
  %v2468 = vpop.permute.xlu0 %2467
  %2471 = vset.pattern.permute.xlu0 1
  %2472 = vperm.xlu0 %2471, %v1958
  %v2473 = vpop.permute.xlu0 %2472
  %2476 = vset.pattern.permute.xlu0 1
  %2477 = vperm.xlu0 %2476, %v1959
  %v2478 = vpop.permute.xlu0 %2477
  %2481 = vset.pattern.permute.xlu0 1
  %2482 = vperm.xlu0 %2481, %v1960
  %v2483 = vpop.permute.xlu0 %2482
  %2486 = vset.pattern.permute.xlu0 1
  %2487 = vperm.xlu0 %2486, %v1961
  %v2488 = vpop.permute.xlu0 %2487
  %2491 = vset.pattern.permute.xlu0 1
  %2492 = vperm.xlu0 %2491, %v1962
  %v2493 = vpop.permute.xlu0 %2492
  %2496 = vset.pattern.permute.xlu0 1
  %2497 = vperm.xlu0 %2496, %v1963
  %v2498 = vpop.permute.xlu0 %2497
  %2501 = vset.pattern.permute.xlu0 1
  %2502 = vperm.xlu0 %2501, %v1964
  %v2503 = vpop.permute.xlu0 %2502
  %2506 = vset.pattern.permute.xlu0 1
  %2507 = vperm.xlu0 %2506, %v1965
  %v2508 = vpop.permute.xlu0 %2507
  %2511 = vset.pattern.permute.xlu0 1
  %2512 = vperm.xlu0 %2511, %v1966
  %v2513 = vpop.permute.xlu0 %2512
  %2516 = vset.pattern.permute.xlu0 1
  %2517 = vperm.xlu0 %2516, %v1967
  %v2518 = vpop.permute.xlu0 %2517
  %2521 = vset.pattern.permute.xlu0 1
  %2522 = vperm.xlu0 %2521, %v1968
  %v2523 = vpop.permute.xlu0 %2522
  %2526 = vset.pattern.permute.xlu0 1
  %2527 = vperm.xlu0 %2526, %v1969
  %v2528 = vpop.permute.xlu0 %2527
  %2531 = vset.pattern.permute.xlu0 1
  %2532 = vperm.xlu0 %2531, %v1970
  %v2533 = vpop.permute.xlu0 %2532
  %2536 = vset.pattern.permute.xlu0 1
  %2537 = vperm.xlu0 %2536, %v1971
  %v2538 = vpop.permute.xlu0 %2537
  %2541 = vset.pattern.permute.xlu0 1
  %2542 = vperm.xlu0 %2541, %v1972
  %v2543 = vpop.permute.xlu0 %2542
  %2546 = vset.pattern.permute.xlu0 1
  %2547 = vperm.xlu0 %2546, %v1973
  %v2548 = vpop.permute.xlu0 %2547
  %2551 = vset.pattern.permute.xlu0 1
  %2552 = vperm.xlu0 %2551, %v1974
  %v2553 = vpop.permute.xlu0 %2552
  %2556 = vset.pattern.permute.xlu0 1
  %2557 = vperm.xlu0 %2556, %v1975
  %v2558 = vpop.permute.xlu0 %2557
  %2561 = vset.pattern.permute.xlu0 1
  %2562 = vperm.xlu0 %2561, %v1976
  %v2563 = vpop.permute.xlu0 %2562
  %2566 = vset.pattern.permute.xlu0 1
  %2567 = vperm.xlu0 %2566, %v1977
  %v2568 = vpop.permute.xlu0 %2567
  %2571 = vset.pattern.permute.xlu0 1
  %2572 = vperm.xlu0 %2571, %v1978
  %v2573 = vpop.permute.xlu0 %2572
  %2576 = vset.pattern.permute.xlu0 1
  %2577 = vperm.xlu0 %2576, %v1979
  %v2578 = vpop.permute.xlu0 %2577
  %2581 = vset.pattern.permute.xlu0 1
  %2582 = vperm.xlu0 %2581, %v1980
  %v2583 = vpop.permute.xlu0 %2582
  %2586 = vset.pattern.permute.xlu0 1
  %2587 = vperm.xlu0 %2586, %v1981
  %v2588 = vpop.permute.xlu0 %2587
  %2591 = vset.pattern.permute.xlu0 1
  %2592 = vperm.xlu0 %2591, %v1982
  %v2593 = vpop.permute.xlu0 %2592
  %2596 = vset.pattern.permute.xlu0 1
  %2597 = vperm.xlu0 %2596, %v1983
  %v2598 = vpop.permute.xlu0 %2597
  %2601 = vset.pattern.permute.xlu0 1
  %2602 = vperm.xlu0 %2601, %v1984
  %v2603 = vpop.permute.xlu0 %2602
  %2606 = vset.pattern.permute.xlu0 1
  %2607 = vperm.xlu0 %2606, %v1985
  %v2608 = vpop.permute.xlu0 %2607
  %2611 = vset.pattern.permute.xlu0 1
  %2612 = vperm.xlu0 %2611, %v1986
  %v2613 = vpop.permute.xlu0 %2612
  %2616 = vset.pattern.permute.xlu0 1
  %2617 = vperm.xlu0 %2616, %v1987
  %v2618 = vpop.permute.xlu0 %2617
  %2621 = vset.pattern.permute.xlu0 1
  %2622 = vperm.xlu0 %2621, %v1988
  %v2623 = vpop.permute.xlu0 %2622
  %2626 = vset.pattern.permute.xlu0 1
  %2627 = vperm.xlu0 %2626, %v1989
  %v2628 = vpop.permute.xlu0 %2627
  %2631 = vset.pattern.permute.xlu0 1
  %2632 = vperm.xlu0 %2631, %v1990
  %v2633 = vpop.permute.xlu0 %2632
  %2636 = vset.pattern.permute.xlu0 1
  %2637 = vperm.xlu0 %2636, %v1991
  %v2638 = vpop.permute.xlu0 %2637
  %2641 = vset.pattern.permute.xlu0 1
  %2642 = vperm.xlu0 %2641, %v1992
  %v2643 = vpop.permute.xlu0 %2642
  %2646 = vset.pattern.permute.xlu0 1
  %2647 = vperm.xlu0 %2646, %v1993
  %v2648 = vpop.permute.xlu0 %2647
  %2651 = vset.pattern.permute.xlu0 1
  %2652 = vperm.xlu0 %2651, %v1994
  %v2653 = vpop.permute.xlu0 %2652
  %2656 = vset.pattern.permute.xlu0 1
  %2657 = vperm.xlu0 %2656, %v1995
  %v2658 = vpop.permute.xlu0 %2657
  %2661 = vset.pattern.permute.xlu0 1
  %2662 = vperm.xlu0 %2661, %v1996
  %v2663 = vpop.permute.xlu0 %2662
  %2666 = vset.pattern.permute.xlu0 1
  %2667 = vperm.xlu0 %2666, %v1997
  %v2668 = vpop.permute.xlu0 %2667
  %2671 = vset.pattern.permute.xlu0 1
  %2672 = vperm.xlu0 %2671, %v1998
  %v2673 = vpop.permute.xlu0 %2672
  %2676 = vset.pattern.permute.xlu0 1
  %2677 = vperm.xlu0 %2676, %v1999
  %v2678 = vpop.permute.xlu0 %2677
  %2681 = vset.pattern.permute.xlu0 1
  %2682 = vperm.xlu0 %2681, %v2000
  %v2683 = vpop.permute.xlu0 %2682
  %2686 = vset.pattern.permute.xlu0 1
  %2687 = vperm.xlu0 %2686, %v2001
  %v2688 = vpop.permute.xlu0 %2687
  %2691 = vset.pattern.permute.xlu0 1
  %2692 = vperm.xlu0 %2691, %v2002
  %v2693 = vpop.permute.xlu0 %2692
  %2696 = vset.pattern.permute.xlu0 1
  %2697 = vperm.xlu0 %2696, %v2003
  %v2698 = vpop.permute.xlu0 %2697
  %2701 = vset.pattern.permute.xlu0 1
  %2702 = vperm.xlu0 %2701, %v2004
  %v2703 = vpop.permute.xlu0 %2702
  %2706 = vset.pattern.permute.xlu0 1
  %2707 = vperm.xlu0 %2706, %v2005
  %v2708 = vpop.permute.xlu0 %2707
  %2711 = vset.pattern.permute.xlu0 1
  %2712 = vperm.xlu0 %2711, %v2006
  %v2713 = vpop.permute.xlu0 %2712
  %2716 = vset.pattern.permute.xlu0 1
  %2717 = vperm.xlu0 %2716, %v2007
  %v2718 = vpop.permute.xlu0 %2717
  %2721 = vset.pattern.permute.xlu0 1
  %2722 = vperm.xlu0 %2721, %v2008
  %v2723 = vpop.permute.xlu0 %2722
  %2726 = vset.pattern.permute.xlu0 1
  %2727 = vperm.xlu0 %2726, %v2009
  %v2728 = vpop.permute.xlu0 %2727
  %2731 = vset.pattern.permute.xlu0 1
  %2732 = vperm.xlu0 %2731, %v2010
  %v2733 = vpop.permute.xlu0 %2732
  %2736 = vset.pattern.permute.xlu0 1
  %2737 = vperm.xlu0 %2736, %v2011
  %v2738 = vpop.permute.xlu0 %2737
  %2741 = vset.pattern.permute.xlu0 1
  %2742 = vperm.xlu0 %2741, %v2012
  %v2743 = vpop.permute.xlu0 %2742
  %2746 = vset.pattern.permute.xlu0 1
  %2747 = vperm.xlu0 %2746, %v2013
  %v2748 = vpop.permute.xlu0 %2747
  %2751 = vset.pattern.permute.xlu0 1
  %2752 = vperm.xlu0 %2751, %v2014
  %v2753 = vpop.permute.xlu0 %2752
  %2756 = vset.pattern.permute.xlu0 1
  %2757 = vperm.xlu0 %2756, %v2015
  %v2758 = vpop.permute.xlu0 %2757
  %2761 = vset.pattern.permute.xlu0 1
  %2762 = vperm.xlu0 %2761, %v2016
  %v2763 = vpop.permute.xlu0 %2762
  %2766 = vset.pattern.permute.xlu0 1
  %2767 = vperm.xlu0 %2766, %v2017
  %v2768 = vpop.permute.xlu0 %2767
  %2771 = vset.pattern.permute.xlu0 1
  %2772 = vperm.xlu0 %2771, %v2018
  %v2773 = vpop.permute.xlu0 %2772
  %2776 = vset.pattern.permute.xlu0 1
  %2777 = vperm.xlu0 %2776, %v2019
  %v2778 = vpop.permute.xlu0 %2777
  %2781 = vset.pattern.permute.xlu0 1
  %2782 = vperm.xlu0 %2781, %v2020
  %v2783 = vpop.permute.xlu0 %2782
  %2786 = vset.pattern.permute.xlu0 1
  %2787 = vperm.xlu0 %2786, %v2021
  %v2788 = vpop.permute.xlu0 %2787
  %v2790 = vmul.f32 %v2022, %v2153
  %v2791 = vmul.f32 %v2023, %v2158
  %v2792 = vmul.f32 %v2024, %v2163
  %v2793 = vmul.f32 %v2025, %v2168
  %v2794 = vmul.f32 %v2026, %v2173
  %v2795 = vmul.f32 %v2027, %v2178
  %v2796 = vmul.f32 %v2028, %v2183
  %v2797 = vmul.f32 %v2029, %v2188
  %v2798 = vmul.f32 %v2030, %v2193
  %v2799 = vmul.f32 %v2031, %v2198
  %v2800 = vmul.f32 %v2032, %v2203
  %v2801 = vmul.f32 %v2033, %v2208
  %v2802 = vmul.f32 %v2034, %v2213
  %v2803 = vmul.f32 %v2035, %v2218
  %v2804 = vmul.f32 %v2036, %v2223
  %v2805 = vmul.f32 %v2037, %v2228
  %v2806 = vmul.f32 %v2038, %v2233
  %v2807 = vmul.f32 %v2039, %v2238
  %v2808 = vmul.f32 %v2040, %v2243
  %v2809 = vmul.f32 %v2041, %v2248
  %v2810 = vmul.f32 %v2042, %v2253
  %v2811 = vmul.f32 %v2043, %v2258
  %v2812 = vmul.f32 %v2044, %v2263
  %v2813 = vmul.f32 %v2045, %v2268
  %v2814 = vmul.f32 %v2046, %v2273
  %v2815 = vmul.f32 %v2047, %v2278
  %v2816 = vmul.f32 %v2048, %v2283
  %v2817 = vmul.f32 %v2049, %v2288
  %v2818 = vmul.f32 %v2050, %v2293
  %v2819 = vmul.f32 %v2051, %v2298
  %v2820 = vmul.f32 %v2052, %v2303
  %v2821 = vmul.f32 %v2053, %v2308
  %v2822 = vmul.f32 %v2054, %v2313
  %v2823 = vmul.f32 %v2055, %v2318
  %v2824 = vmul.f32 %v2056, %v2323
  %v2825 = vmul.f32 %v2057, %v2328
  %v2826 = vmul.f32 %v2058, %v2333
  %v2827 = vmul.f32 %v2059, %v2338
  %v2828 = vmul.f32 %v2060, %v2343
  %v2829 = vmul.f32 %v2061, %v2348
  %v2830 = vmul.f32 %v2062, %v2353
  %v2831 = vmul.f32 %v2063, %v2358
  %v2832 = vmul.f32 %v2064, %v2363
  %v2833 = vmul.f32 %v2065, %v2368
  %v2834 = vmul.f32 %v2066, %v2373
  %v2835 = vmul.f32 %v2067, %v2378
  %v2836 = vmul.f32 %v2068, %v2383
  %v2837 = vmul.f32 %v2069, %v2388
  %v2838 = vmul.f32 %v2070, %v2393
  %v2839 = vmul.f32 %v2071, %v2398
  %v2840 = vmul.f32 %v2072, %v2403
  %v2841 = vmul.f32 %v2073, %v2408
  %v2842 = vmul.f32 %v2074, %v2413
  %v2843 = vmul.f32 %v2075, %v2418
  %v2844 = vmul.f32 %v2076, %v2423
  %v2845 = vmul.f32 %v2077, %v2428
  %v2846 = vmul.f32 %v2078, %v2433
  %v2847 = vmul.f32 %v2079, %v2438
  %v2848 = vmul.f32 %v2080, %v2443
  %v2849 = vmul.f32 %v2081, %v2448
  %v2850 = vmul.f32 %v2082, %v2453
  %v2851 = vmul.f32 %v2083, %v2458
  %v2852 = vmul.f32 %v2084, %v2463
  %v2853 = vmul.f32 %v2085, %v2468
  %v2854 = vmul.f32 %v2086, %v2473
  %v2855 = vmul.f32 %v2087, %v2478
  %v2856 = vmul.f32 %v2088, %v2483
  %v2857 = vmul.f32 %v2089, %v2488
  %v2858 = vmul.f32 %v2090, %v2493
  %v2859 = vmul.f32 %v2091, %v2498
  %v2860 = vmul.f32 %v2092, %v2503
  %v2861 = vmul.f32 %v2093, %v2508
  %v2862 = vmul.f32 %v2094, %v2513
  %v2863 = vmul.f32 %v2095, %v2518
  %v2864 = vmul.f32 %v2096, %v2523
  %v2865 = vmul.f32 %v2097, %v2528
  %v2866 = vmul.f32 %v2098, %v2533
  %v2867 = vmul.f32 %v2099, %v2538
  %v2868 = vmul.f32 %v2100, %v2543
  %v2869 = vmul.f32 %v2101, %v2548
  %v2870 = vmul.f32 %v2102, %v2553
  %v2871 = vmul.f32 %v2103, %v2558
  %v2872 = vmul.f32 %v2104, %v2563
  %v2873 = vmul.f32 %v2105, %v2568
  %v2874 = vmul.f32 %v2106, %v2573
  %v2875 = vmul.f32 %v2107, %v2578
  %v2876 = vmul.f32 %v2108, %v2583
  %v2877 = vmul.f32 %v2109, %v2588
  %v2878 = vmul.f32 %v2110, %v2593
  %v2879 = vmul.f32 %v2111, %v2598
  %v2880 = vmul.f32 %v2112, %v2603
  %v2881 = vmul.f32 %v2113, %v2608
  %v2882 = vmul.f32 %v2114, %v2613
  %v2883 = vmul.f32 %v2115, %v2618
  %v2884 = vmul.f32 %v2116, %v2623
  %v2885 = vmul.f32 %v2117, %v2628
  %v2886 = vmul.f32 %v2118, %v2633
  %v2887 = vmul.f32 %v2119, %v2638
  %v2888 = vmul.f32 %v2120, %v2643
  %v2889 = vmul.f32 %v2121, %v2648
  %v2890 = vmul.f32 %v2122, %v2653
  %v2891 = vmul.f32 %v2123, %v2658
  %v2892 = vmul.f32 %v2124, %v2663
  %v2893 = vmul.f32 %v2125, %v2668
  %v2894 = vmul.f32 %v2126, %v2673
  %v2895 = vmul.f32 %v2127, %v2678
  %v2896 = vmul.f32 %v2128, %v2683
  %v2897 = vmul.f32 %v2129, %v2688
  %v2898 = vmul.f32 %v2130, %v2693
  %v2899 = vmul.f32 %v2131, %v2698
  %v2900 = vmul.f32 %v2132, %v2703
  %v2901 = vmul.f32 %v2133, %v2708
  %v2902 = vmul.f32 %v2134, %v2713
  %v2903 = vmul.f32 %v2135, %v2718
  %v2904 = vmul.f32 %v2136, %v2723
  %v2905 = vmul.f32 %v2137, %v2728
  %v2906 = vmul.f32 %v2138, %v2733
  %v2907 = vmul.f32 %v2139, %v2738
  %v2908 = vmul.f32 %v2140, %v2743
  %v2909 = vmul.f32 %v2141, %v2748
  %v2910 = vmul.f32 %v2142, %v2753
  %v2911 = vmul.f32 %v2143, %v2758
  %v2912 = vmul.f32 %v2144, %v2763
  %v2913 = vmul.f32 %v2145, %v2768
  %v2914 = vmul.f32 %v2146, %v2773
  %v2915 = vmul.f32 %v2147, %v2778
  %v2916 = vmul.f32 %v2148, %v2783
  %v2917 = vmul.f32 %v2149, %v2788
  %v2918 = vpack.c.bf16 %v2791, %v2790
  %v2919 = vpack.c.bf16 %v2793, %v2792
  %v2920 = vpack.c.bf16 %v2795, %v2794
  %v2921 = vpack.c.bf16 %v2797, %v2796
  %v2922 = vpack.c.bf16 %v2799, %v2798
  %v2923 = vpack.c.bf16 %v2801, %v2800
  %v2924 = vpack.c.bf16 %v2803, %v2802
  %v2925 = vpack.c.bf16 %v2805, %v2804
  %v2926 = vpack.c.bf16 %v2807, %v2806
  %v2927 = vpack.c.bf16 %v2809, %v2808
  %v2928 = vpack.c.bf16 %v2811, %v2810
  %v2929 = vpack.c.bf16 %v2813, %v2812
  %v2930 = vpack.c.bf16 %v2815, %v2814
  %v2931 = vpack.c.bf16 %v2817, %v2816
  %v2932 = vpack.c.bf16 %v2819, %v2818
  %v2933 = vpack.c.bf16 %v2821, %v2820
  %v2934 = vpack.c.bf16 %v2823, %v2822
  %v2935 = vpack.c.bf16 %v2825, %v2824
  %v2936 = vpack.c.bf16 %v2827, %v2826
  %v2937 = vpack.c.bf16 %v2829, %v2828
  %v2938 = vpack.c.bf16 %v2831, %v2830
  %v2939 = vpack.c.bf16 %v2833, %v2832
  %v2940 = vpack.c.bf16 %v2835, %v2834
  %v2941 = vpack.c.bf16 %v2837, %v2836
  %v2942 = vpack.c.bf16 %v2839, %v2838
  %v2943 = vpack.c.bf16 %v2841, %v2840
  %v2944 = vpack.c.bf16 %v2843, %v2842
  %v2945 = vpack.c.bf16 %v2845, %v2844
  %v2946 = vpack.c.bf16 %v2847, %v2846
  %v2947 = vpack.c.bf16 %v2849, %v2848
  %v2948 = vpack.c.bf16 %v2851, %v2850
  %v2949 = vpack.c.bf16 %v2853, %v2852
  %v2950 = vpack.c.bf16 %v2855, %v2854
  %v2951 = vpack.c.bf16 %v2857, %v2856
  %v2952 = vpack.c.bf16 %v2859, %v2858
  %v2953 = vpack.c.bf16 %v2861, %v2860
  %v2954 = vpack.c.bf16 %v2863, %v2862
  %v2955 = vpack.c.bf16 %v2865, %v2864
  %v2956 = vpack.c.bf16 %v2867, %v2866
  %v2957 = vpack.c.bf16 %v2869, %v2868
  %v2958 = vpack.c.bf16 %v2871, %v2870
  %v2959 = vpack.c.bf16 %v2873, %v2872
  %v2960 = vpack.c.bf16 %v2875, %v2874
  %v2961 = vpack.c.bf16 %v2877, %v2876
  %v2962 = vpack.c.bf16 %v2879, %v2878
  %v2963 = vpack.c.bf16 %v2881, %v2880
  %v2964 = vpack.c.bf16 %v2883, %v2882
  %v2965 = vpack.c.bf16 %v2885, %v2884
  %v2966 = vpack.c.bf16 %v2887, %v2886
  %v2967 = vpack.c.bf16 %v2889, %v2888
  %v2968 = vpack.c.bf16 %v2891, %v2890
  %v2969 = vpack.c.bf16 %v2893, %v2892
  %v2970 = vpack.c.bf16 %v2895, %v2894
  %v2971 = vpack.c.bf16 %v2897, %v2896
  %v2972 = vpack.c.bf16 %v2899, %v2898
  %v2973 = vpack.c.bf16 %v2901, %v2900
  %v2974 = vpack.c.bf16 %v2903, %v2902
  %v2975 = vpack.c.bf16 %v2905, %v2904
  %v2976 = vpack.c.bf16 %v2907, %v2906
  %v2977 = vpack.c.bf16 %v2909, %v2908
  %v2978 = vpack.c.bf16 %v2911, %v2910
  %v2979 = vpack.c.bf16 %v2913, %v2912
  %v2980 = vpack.c.bf16 %v2915, %v2914
  %v2981 = vpack.c.bf16 %v2917, %v2916
  %v2982 = vld [vmem:[%s4] sm:$0xf]
  %v2983 = vld [vmem:[%s4 + $0x4] sm:$0xf]
  %v2984 = vld [vmem:[%s4 + $0x8] sm:$0xf]
  %v2985 = vld [vmem:[%s4 + $0xc] sm:$0xf]
  %v2986 = vld [vmem:[%s4 + $0x10] sm:$0xf]
  %v2987 = vld [vmem:[%s4 + $0x14] sm:$0xf]
  %v2988 = vld [vmem:[%s4 + $0x18] sm:$0xf]
  %v2989 = vld [vmem:[%s4 + $0x1c] sm:$0xf]
  %v2990 = vld [vmem:[%s4 + $0x20] sm:$0xf]
  %v2991 = vld [vmem:[%s4 + $0x24] sm:$0xf]
  %v2992 = vld [vmem:[%s4 + $0x28] sm:$0xf]
  %v2993 = vld [vmem:[%s4 + $0x2c] sm:$0xf]
  %v2994 = vld [vmem:[%s4 + $0x30] sm:$0xf]
  %v2995 = vld [vmem:[%s4 + $0x34] sm:$0xf]
  %v2996 = vld [vmem:[%s4 + $0x38] sm:$0xf]
  %v2997 = vld [vmem:[%s4 + $0x3c] sm:$0xf]
  %v2998 = vlaneseq
  %v2999 = vshrl.u32 %v2998, 7
  %v3000 = vsub.s32 0, %v2999
  %v3001 = vrot.slane %v35, %v3000
  %v3018 = vunpack.c.l.b16 %v2982
  %v3019 = vunpack.c.l.b16 %v2983
  %v3020 = vunpack.c.l.b16 %v2984
  %v3021 = vunpack.c.l.b16 %v2985
  %v3022 = vunpack.c.l.b16 %v2986
  %v3023 = vunpack.c.l.b16 %v2987
  %v3024 = vunpack.c.l.b16 %v2988
  %v3025 = vunpack.c.l.b16 %v2989
  %v3026 = vunpack.c.l.b16 %v2990
  %v3027 = vunpack.c.l.b16 %v2991
  %v3028 = vunpack.c.l.b16 %v2992
  %v3029 = vunpack.c.l.b16 %v2993
  %v3030 = vunpack.c.l.b16 %v2994
  %v3031 = vunpack.c.l.b16 %v2995
  %v3032 = vunpack.c.l.b16 %v2996
  %v3033 = vunpack.c.l.b16 %v2997
  %v3034 = vpack.c.b16 %v3019, %v3018
  %v3035 = vpack.c.b16 %v3021, %v3020
  %v3036 = vpack.c.b16 %v3023, %v3022
  %v3037 = vpack.c.b16 %v3025, %v3024
  %v3038 = vpack.c.b16 %v3027, %v3026
  %v3039 = vpack.c.b16 %v3029, %v3028
  %v3040 = vpack.c.b16 %v3031, %v3030
  %v3041 = vpack.c.b16 %v3033, %v3032
  %3050 = vmatprep.subr.bf16.mxu0 0
  %3051 = vmatpush1.bf16.msra.mxu0 %v3034
  %3052 = vmatprep.subr.bf16.mxu0 0
  %3053 = vmatpush1.bf16.msra.mxu0 %v3035
  %3054 = vmatprep.subr.bf16.mxu0 0
  %3055 = vmatpush1.bf16.msra.mxu0 %v3036
  %3056 = vmatprep.subr.bf16.mxu0 0
  %3057 = vmatpush1.bf16.msra.mxu0 %v3037
  %3058 = vmatprep.subr.bf16.mxu0 0
  %3059 = vmatpush1.bf16.msra.mxu0 %v3038
  %3060 = vmatprep.subr.bf16.mxu0 0
  %3061 = vmatpush1.bf16.msra.mxu0 %v3039
  %3062 = vmatprep.subr.bf16.mxu0 0
  %3063 = vmatpush1.bf16.msra.mxu0 %v3040
  %3064 = vmatprep.subr.bf16.mxu0 0
  %3065 = vmatpush1.bf16.msra.mxu0 %v3041
  %3066 = vmatprep.subr.bf16.mxu0 0
  %3067 = vmatpush1.bf16.msra.mxu0 0
  %3068 = vmatprep.subr.bf16.mxu0 0
  %3069 = vmatpush1.bf16.msra.mxu0 0
  %3070 = vmatprep.subr.bf16.mxu0 0
  %3071 = vmatpush1.bf16.msra.mxu0 0
  %3072 = vmatprep.subr.bf16.mxu0 0
  %3073 = vmatpush1.bf16.msra.mxu0 0
  %3074 = vmatprep.subr.bf16.mxu0 0
  %3075 = vmatpush1.bf16.msra.mxu0 0
  %3076 = vmatprep.subr.bf16.mxu0 0
  %3077 = vmatpush1.bf16.msra.mxu0 0
  %3078 = vmatprep.subr.bf16.mxu0 0
  %3079 = vmatpush1.bf16.msra.mxu0 0
  %3080 = vmatprep.subr.bf16.mxu0 0
  %3081 = vmatpush1.bf16.msra.mxu0 0
  %3082 = vmatprep.mubr.bf16.mxu0 0
  %3083 = vmatmul.mubr.bf16.gmra.mrb[0].mxu0 %v2918
  %v3084 = vpop.f32.mrb[0].mxu0
  %v3085 = vadd.f32 %v3001, %v3084
  %v3086 = vpop.f32.mrb[0].mxu0
  %v3087 = vpop.f32.mrb[0].mxu0
  %v3088 = vadd.f32 %v3001, %v3087
  %v3089 = vpop.f32.mrb[0].mxu0
  %3090 = vmatprep.mubr.bf16.mxu0 0
  %3091 = vmatmul.mubr.bf16.gmra.mrb[0].mxu0 %v2919
  %v3092 = vpop.f32.mrb[0].mxu0
  %v3093 = vadd.f32 %v3001, %v3092
  %v3094 = vpop.f32.mrb[0].mxu0
  %v3095 = vpop.f32.mrb[0].mxu0
  %v3096 = vadd.f32 %v3001, %v3095
  %v3097 = vpop.f32.mrb[0].mxu0
  %3098 = vmatprep.mubr.bf16.mxu0 0
  %3099 = vmatmul.mubr.bf16.gmra.mrb[0].mxu0 %v2920
  %v3100 = vpop.f32.mrb[0].mxu0
  %v3101 = vadd.f32 %v3001, %v3100
  %v3102 = vpop.f32.mrb[0].mxu0
  %v3103 = vpop.f32.mrb[0].mxu0
  %v3104 = vadd.f32 %v3001, %v3103
  %v3105 = vpop.f32.mrb[0].mxu0
  %3106 = vmatprep.mubr.bf16.mxu0 0
  %3107 = vmatmul.mubr.bf16.gmra.mrb[0].mxu0 %v2921
  %v3108 = vpop.f32.mrb[0].mxu0
  %v3109 = vadd.f32 %v3001, %v3108
  %v3110 = vpop.f32.mrb[0].mxu0
  %v3111 = vpop.f32.mrb[0].mxu0
  %v3112 = vadd.f32 %v3001, %v3111
  %v3113 = vpop.f32.mrb[0].mxu0
  %3114 = vmatprep.mubr.bf16.mxu0 0
  %3115 = vmatmul.mubr.bf16.gmra.mrb[0].mxu0 %v2922
  %v3116 = vpop.f32.mrb[0].mxu0
  %v3117 = vadd.f32 %v3001, %v3116
  %v3118 = vpop.f32.mrb[0].mxu0
  %v3119 = vpop.f32.mrb[0].mxu0
  %v3120 = vadd.f32 %v3001, %v3119
  %v3121 = vpop.f32.mrb[0].mxu0
  %3122 = vmatprep.mubr.bf16.mxu0 0
  %3123 = vmatmul.mubr.bf16.gmra.mrb[0].mxu0 %v2923
  %v3124 = vpop.f32.mrb[0].mxu0
  %v3125 = vadd.f32 %v3001, %v3124
  %v3126 = vpop.f32.mrb[0].mxu0
  %v3127 = vpop.f32.mrb[0].mxu0
  %v3128 = vadd.f32 %v3001, %v3127
  %v3129 = vpop.f32.mrb[0].mxu0
  %3130 = vmatprep.mubr.bf16.mxu0 0
  %3131 = vmatmul.mubr.bf16.gmra.mrb[0].mxu0 %v2924
  %v3132 = vpop.f32.mrb[0].mxu0
  %v3133 = vadd.f32 %v3001, %v3132
  %v3134 = vpop.f32.mrb[0].mxu0
  %v3135 = vpop.f32.mrb[0].mxu0
  %v3136 = vadd.f32 %v3001, %v3135
  %v3137 = vpop.f32.mrb[0].mxu0
  %3138 = vmatprep.mubr.bf16.mxu0 0
  %3139 = vmatmul.mubr.bf16.gmra.mrb[0].mxu0 %v2925
  %v3140 = vpop.f32.mrb[0].mxu0
  %v3141 = vadd.f32 %v3001, %v3140
  %v3142 = vpop.f32.mrb[0].mxu0
  %v3143 = vpop.f32.mrb[0].mxu0
  %v3144 = vadd.f32 %v3001, %v3143
  %v3145 = vpop.f32.mrb[0].mxu0
  %3146 = vmatprep.mubr.bf16.mxu0 0
  %3147 = vmatmul.mubr.bf16.gmra.mrb[0].mxu0 %v2926
  %v3148 = vpop.f32.mrb[0].mxu0
  %v3149 = vadd.f32 %v3001, %v3148
  %v3150 = vpop.f32.mrb[0].mxu0
  %v3151 = vpop.f32.mrb[0].mxu0
  %v3152 = vadd.f32 %v3001, %v3151
  %v3153 = vpop.f32.mrb[0].mxu0
  %3154 = vmatprep.mubr.bf16.mxu0 0
  %3155 = vmatmul.mubr.bf16.gmra.mrb[0].mxu0 %v2927
  %v3156 = vpop.f32.mrb[0].mxu0
  %v3157 = vadd.f32 %v3001, %v3156
  %v3158 = vpop.f32.mrb[0].mxu0
  %v3159 = vpop.f32.mrb[0].mxu0
  %v3160 = vadd.f32 %v3001, %v3159
  %v3161 = vpop.f32.mrb[0].mxu0
  %3162 = vmatprep.mubr.bf16.mxu0 0
  %3163 = vmatmul.mubr.bf16.gmra.mrb[0].mxu0 %v2928
  %v3164 = vpop.f32.mrb[0].mxu0
  %v3165 = vadd.f32 %v3001, %v3164
  %v3166 = vpop.f32.mrb[0].mxu0
  %v3167 = vpop.f32.mrb[0].mxu0
  %v3168 = vadd.f32 %v3001, %v3167
  %v3169 = vpop.f32.mrb[0].mxu0
  %3170 = vmatprep.mubr.bf16.mxu0 0
  %3171 = vmatmul.mubr.bf16.gmra.mrb[0].mxu0 %v2929
  %v3172 = vpop.f32.mrb[0].mxu0
  %v3173 = vadd.f32 %v3001, %v3172
  %v3174 = vpop.f32.mrb[0].mxu0
  %v3175 = vpop.f32.mrb[0].mxu0
  %v3176 = vadd.f32 %v3001, %v3175
  %v3177 = vpop.f32.mrb[0].mxu0
  %3178 = vmatprep.mubr.bf16.mxu0 0
  %3179 = vmatmul.mubr.bf16.gmra.mrb[0].mxu0 %v2930
  %v3180 = vpop.f32.mrb[0].mxu0
  %v3181 = vadd.f32 %v3001, %v3180
  %v3182 = vpop.f32.mrb[0].mxu0
  %v3183 = vpop.f32.mrb[0].mxu0
  %v3184 = vadd.f32 %v3001, %v3183
  %v3185 = vpop.f32.mrb[0].mxu0
  %3186 = vmatprep.mubr.bf16.mxu0 0
  %3187 = vmatmul.mubr.bf16.gmra.mrb[0].mxu0 %v2931
  %v3188 = vpop.f32.mrb[0].mxu0
  %v3189 = vadd.f32 %v3001, %v3188
  %v3190 = vpop.f32.mrb[0].mxu0
  %v3191 = vpop.f32.mrb[0].mxu0
  %v3192 = vadd.f32 %v3001, %v3191
  %v3193 = vpop.f32.mrb[0].mxu0
  %3194 = vmatprep.mubr.bf16.mxu0 0
  %3195 = vmatmul.mubr.bf16.gmra.mrb[0].mxu0 %v2932
  %v3196 = vpop.f32.mrb[0].mxu0
  %v3197 = vadd.f32 %v3001, %v3196
  %v3198 = vpop.f32.mrb[0].mxu0
  %v3199 = vpop.f32.mrb[0].mxu0
  %v3200 = vadd.f32 %v3001, %v3199
  %v3201 = vpop.f32.mrb[0].mxu0
  %3202 = vmatprep.mubr.bf16.mxu0 0
  %3203 = vmatmul.mubr.bf16.gmra.mrb[0].mxu0 %v2933
  %v3204 = vpop.f32.mrb[0].mxu0
  %v3205 = vadd.f32 %v3001, %v3204
  %v3206 = vpop.f32.mrb[0].mxu0
  %v3207 = vpop.f32.mrb[0].mxu0
  %v3208 = vadd.f32 %v3001, %v3207
  %v3209 = vpop.f32.mrb[0].mxu0
  %3210 = vmatprep.mubr.bf16.mxu0 0
  %3211 = vmatmul.mubr.bf16.gmra.mrb[0].mxu0 %v2934
  %v3212 = vpop.f32.mrb[0].mxu0
  %v3213 = vadd.f32 %v3001, %v3212
  %v3214 = vpop.f32.mrb[0].mxu0
  %v3215 = vpop.f32.mrb[0].mxu0
  %v3216 = vadd.f32 %v3001, %v3215
  %v3217 = vpop.f32.mrb[0].mxu0
  %3218 = vmatprep.mubr.bf16.mxu0 0
  %3219 = vmatmul.mubr.bf16.gmra.mrb[0].mxu0 %v2935
  %v3220 = vpop.f32.mrb[0].mxu0
  %v3221 = vadd.f32 %v3001, %v3220
  %v3222 = vpop.f32.mrb[0].mxu0
  %v3223 = vpop.f32.mrb[0].mxu0
  %v3224 = vadd.f32 %v3001, %v3223
  %v3225 = vpop.f32.mrb[0].mxu0
  %3226 = vmatprep.mubr.bf16.mxu0 0
  %3227 = vmatmul.mubr.bf16.gmra.mrb[0].mxu0 %v2936
  %v3228 = vpop.f32.mrb[0].mxu0
  %v3229 = vadd.f32 %v3001, %v3228
  %v3230 = vpop.f32.mrb[0].mxu0
  %v3231 = vpop.f32.mrb[0].mxu0
  %v3232 = vadd.f32 %v3001, %v3231
  %v3233 = vpop.f32.mrb[0].mxu0
  %3234 = vmatprep.mubr.bf16.mxu0 0
  %3235 = vmatmul.mubr.bf16.gmra.mrb[0].mxu0 %v2937
  %v3236 = vpop.f32.mrb[0].mxu0
  %v3237 = vadd.f32 %v3001, %v3236
  %v3238 = vpop.f32.mrb[0].mxu0
  %v3239 = vpop.f32.mrb[0].mxu0
  %v3240 = vadd.f32 %v3001, %v3239
  %v3241 = vpop.f32.mrb[0].mxu0
  %3242 = vmatprep.mubr.bf16.mxu0 0
  %3243 = vmatmul.mubr.bf16.gmra.mrb[0].mxu0 %v2938
  %v3244 = vpop.f32.mrb[0].mxu0
  %v3245 = vadd.f32 %v3001, %v3244
  %v3246 = vpop.f32.mrb[0].mxu0
  %v3247 = vpop.f32.mrb[0].mxu0
  %v3248 = vadd.f32 %v3001, %v3247
  %v3249 = vpop.f32.mrb[0].mxu0
  %3250 = vmatprep.mubr.bf16.mxu0 0
  %3251 = vmatmul.mubr.bf16.gmra.mrb[0].mxu0 %v2939
  %v3252 = vpop.f32.mrb[0].mxu0
  %v3253 = vadd.f32 %v3001, %v3252
  %v3254 = vpop.f32.mrb[0].mxu0
  %v3255 = vpop.f32.mrb[0].mxu0
  %v3256 = vadd.f32 %v3001, %v3255
  %v3257 = vpop.f32.mrb[0].mxu0
  %3258 = vmatprep.mubr.bf16.mxu0 0
  %3259 = vmatmul.mubr.bf16.gmra.mrb[0].mxu0 %v2940
  %v3260 = vpop.f32.mrb[0].mxu0
  %v3261 = vadd.f32 %v3001, %v3260
  %v3262 = vpop.f32.mrb[0].mxu0
  %v3263 = vpop.f32.mrb[0].mxu0
  %v3264 = vadd.f32 %v3001, %v3263
  %v3265 = vpop.f32.mrb[0].mxu0
  %3266 = vmatprep.mubr.bf16.mxu0 0
  %3267 = vmatmul.mubr.bf16.gmra.mrb[0].mxu0 %v2941
  %v3268 = vpop.f32.mrb[0].mxu0
  %v3269 = vadd.f32 %v3001, %v3268
  %v3270 = vpop.f32.mrb[0].mxu0
  %v3271 = vpop.f32.mrb[0].mxu0
  %v3272 = vadd.f32 %v3001, %v3271
  %v3273 = vpop.f32.mrb[0].mxu0
  %3274 = vmatprep.mubr.bf16.mxu0 0
  %3275 = vmatmul.mubr.bf16.gmra.mrb[0].mxu0 %v2942
  %v3276 = vpop.f32.mrb[0].mxu0
  %v3277 = vadd.f32 %v3001, %v3276
  %v3278 = vpop.f32.mrb[0].mxu0
  %v3279 = vpop.f32.mrb[0].mxu0
  %v3280 = vadd.f32 %v3001, %v3279
  %v3281 = vpop.f32.mrb[0].mxu0
  %3282 = vmatprep.mubr.bf16.mxu0 0
  %3283 = vmatmul.mubr.bf16.gmra.mrb[0].mxu0 %v2943
  %v3284 = vpop.f32.mrb[0].mxu0
  %v3285 = vadd.f32 %v3001, %v3284
  %v3286 = vpop.f32.mrb[0].mxu0
  %v3287 = vpop.f32.mrb[0].mxu0
  %v3288 = vadd.f32 %v3001, %v3287
  %v3289 = vpop.f32.mrb[0].mxu0
  %3290 = vmatprep.mubr.bf16.mxu0 0
  %3291 = vmatmul.mubr.bf16.gmra.mrb[0].mxu0 %v2944
  %v3292 = vpop.f32.mrb[0].mxu0
  %v3293 = vadd.f32 %v3001, %v3292
  %v3294 = vpop.f32.mrb[0].mxu0
  %v3295 = vpop.f32.mrb[0].mxu0
  %v3296 = vadd.f32 %v3001, %v3295
  %v3297 = vpop.f32.mrb[0].mxu0
  %3298 = vmatprep.mubr.bf16.mxu0 0
  %3299 = vmatmul.mubr.bf16.gmra.mrb[0].mxu0 %v2945
  %v3300 = vpop.f32.mrb[0].mxu0
  %v3301 = vadd.f32 %v3001, %v3300
  %v3302 = vpop.f32.mrb[0].mxu0
  %v3303 = vpop.f32.mrb[0].mxu0
  %v3304 = vadd.f32 %v3001, %v3303
  %v3305 = vpop.f32.mrb[0].mxu0
  %3306 = vmatprep.mubr.bf16.mxu0 0
  %3307 = vmatmul.mubr.bf16.gmra.mrb[0].mxu0 %v2946
  %v3308 = vpop.f32.mrb[0].mxu0
  %v3309 = vadd.f32 %v3001, %v3308
  %v3310 = vpop.f32.mrb[0].mxu0
  %v3311 = vpop.f32.mrb[0].mxu0
  %v3312 = vadd.f32 %v3001, %v3311
  %v3313 = vpop.f32.mrb[0].mxu0
  %3314 = vmatprep.mubr.bf16.mxu0 0
  %3315 = vmatmul.mubr.bf16.gmra.mrb[0].mxu0 %v2947
  %v3316 = vpop.f32.mrb[0].mxu0
  %v3317 = vadd.f32 %v3001, %v3316
  %v3318 = vpop.f32.mrb[0].mxu0
  %v3319 = vpop.f32.mrb[0].mxu0
  %v3320 = vadd.f32 %v3001, %v3319
  %v3321 = vpop.f32.mrb[0].mxu0
  %3322 = vmatprep.mubr.bf16.mxu0 0
  %3323 = vmatmul.mubr.bf16.gmra.mrb[0].mxu0 %v2948
  %v3324 = vpop.f32.mrb[0].mxu0
  %v3325 = vadd.f32 %v3001, %v3324
  %v3326 = vpop.f32.mrb[0].mxu0
  %v3327 = vpop.f32.mrb[0].mxu0
  %v3328 = vadd.f32 %v3001, %v3327
  %v3329 = vpop.f32.mrb[0].mxu0
  %3330 = vmatprep.mubr.bf16.mxu0 0
  %3331 = vmatmul.mubr.bf16.gmra.mrb[0].mxu0 %v2949
  %v3332 = vpop.f32.mrb[0].mxu0
  %v3333 = vadd.f32 %v3001, %v3332
  %v3334 = vpop.f32.mrb[0].mxu0
  %v3335 = vpop.f32.mrb[0].mxu0
  %v3336 = vadd.f32 %v3001, %v3335
  %v3337 = vpop.f32.mrb[0].mxu0
  %3338 = vmatprep.mubr.bf16.mxu0 0
  %3339 = vmatmul.mubr.bf16.gmra.mrb[0].mxu0 %v2950
  %v3340 = vpop.f32.mrb[0].mxu0
  %v3341 = vadd.f32 %v3001, %v3340
  %v3342 = vpop.f32.mrb[0].mxu0
  %v3343 = vpop.f32.mrb[0].mxu0
  %v3344 = vadd.f32 %v3001, %v3343
  %v3345 = vpop.f32.mrb[0].mxu0
  %3346 = vmatprep.mubr.bf16.mxu0 0
  %3347 = vmatmul.mubr.bf16.gmra.mrb[0].mxu0 %v2951
  %v3348 = vpop.f32.mrb[0].mxu0
  %v3349 = vadd.f32 %v3001, %v3348
  %v3350 = vpop.f32.mrb[0].mxu0
  %v3351 = vpop.f32.mrb[0].mxu0
  %v3352 = vadd.f32 %v3001, %v3351
  %v3353 = vpop.f32.mrb[0].mxu0
  %3354 = vmatprep.mubr.bf16.mxu0 0
  %3355 = vmatmul.mubr.bf16.gmra.mrb[0].mxu0 %v2952
  %v3356 = vpop.f32.mrb[0].mxu0
  %v3357 = vadd.f32 %v3001, %v3356
  %v3358 = vpop.f32.mrb[0].mxu0
  %v3359 = vpop.f32.mrb[0].mxu0
  %v3360 = vadd.f32 %v3001, %v3359
  %v3361 = vpop.f32.mrb[0].mxu0
  %3362 = vmatprep.mubr.bf16.mxu0 0
  %3363 = vmatmul.mubr.bf16.gmra.mrb[0].mxu0 %v2953
  %v3364 = vpop.f32.mrb[0].mxu0
  %v3365 = vadd.f32 %v3001, %v3364
  %v3366 = vpop.f32.mrb[0].mxu0
  %v3367 = vpop.f32.mrb[0].mxu0
  %v3368 = vadd.f32 %v3001, %v3367
  %v3369 = vpop.f32.mrb[0].mxu0
  %3370 = vmatprep.mubr.bf16.mxu0 0
  %3371 = vmatmul.mubr.bf16.gmra.mrb[0].mxu0 %v2954
  %v3372 = vpop.f32.mrb[0].mxu0
  %v3373 = vadd.f32 %v3001, %v3372
  %v3374 = vpop.f32.mrb[0].mxu0
  %v3375 = vpop.f32.mrb[0].mxu0
  %v3376 = vadd.f32 %v3001, %v3375
  %v3377 = vpop.f32.mrb[0].mxu0
  %3378 = vmatprep.mubr.bf16.mxu0 0
  %3379 = vmatmul.mubr.bf16.gmra.mrb[0].mxu0 %v2955
  %v3380 = vpop.f32.mrb[0].mxu0
  %v3381 = vadd.f32 %v3001, %v3380
  %v3382 = vpop.f32.mrb[0].mxu0
  %v3383 = vpop.f32.mrb[0].mxu0
  %v3384 = vadd.f32 %v3001, %v3383
  %v3385 = vpop.f32.mrb[0].mxu0
  %3386 = vmatprep.mubr.bf16.mxu0 0
  %3387 = vmatmul.mubr.bf16.gmra.mrb[0].mxu0 %v2956
  %v3388 = vpop.f32.mrb[0].mxu0
  %v3389 = vadd.f32 %v3001, %v3388
  %v3390 = vpop.f32.mrb[0].mxu0
  %v3391 = vpop.f32.mrb[0].mxu0
  %v3392 = vadd.f32 %v3001, %v3391
  %v3393 = vpop.f32.mrb[0].mxu0
  %3394 = vmatprep.mubr.bf16.mxu0 0
  %3395 = vmatmul.mubr.bf16.gmra.mrb[0].mxu0 %v2957
  %v3396 = vpop.f32.mrb[0].mxu0
  %v3397 = vadd.f32 %v3001, %v3396
  %v3398 = vpop.f32.mrb[0].mxu0
  %v3399 = vpop.f32.mrb[0].mxu0
  %v3400 = vadd.f32 %v3001, %v3399
  %v3401 = vpop.f32.mrb[0].mxu0
  %3402 = vmatprep.mubr.bf16.mxu0 0
  %3403 = vmatmul.mubr.bf16.gmra.mrb[0].mxu0 %v2958
  %v3404 = vpop.f32.mrb[0].mxu0
  %v3405 = vadd.f32 %v3001, %v3404
  %v3406 = vpop.f32.mrb[0].mxu0
  %v3407 = vpop.f32.mrb[0].mxu0
  %v3408 = vadd.f32 %v3001, %v3407
  %v3409 = vpop.f32.mrb[0].mxu0
  %3410 = vmatprep.mubr.bf16.mxu0 0
  %3411 = vmatmul.mubr.bf16.gmra.mrb[0].mxu0 %v2959
  %v3412 = vpop.f32.mrb[0].mxu0
  %v3413 = vadd.f32 %v3001, %v3412
  %v3414 = vpop.f32.mrb[0].mxu0
  %v3415 = vpop.f32.mrb[0].mxu0
  %v3416 = vadd.f32 %v3001, %v3415
  %v3417 = vpop.f32.mrb[0].mxu0
  %3418 = vmatprep.mubr.bf16.mxu0 0
  %3419 = vmatmul.mubr.bf16.gmra.mrb[0].mxu0 %v2960
  %v3420 = vpop.f32.mrb[0].mxu0
  %v3421 = vadd.f32 %v3001, %v3420
  %v3422 = vpop.f32.mrb[0].mxu0
  %v3423 = vpop.f32.mrb[0].mxu0
  %v3424 = vadd.f32 %v3001, %v3423
  %v3425 = vpop.f32.mrb[0].mxu0
  %3426 = vmatprep.mubr.bf16.mxu0 0
  %3427 = vmatmul.mubr.bf16.gmra.mrb[0].mxu0 %v2961
  %v3428 = vpop.f32.mrb[0].mxu0
  %v3429 = vadd.f32 %v3001, %v3428
  %v3430 = vpop.f32.mrb[0].mxu0
  %v3431 = vpop.f32.mrb[0].mxu0
  %v3432 = vadd.f32 %v3001, %v3431
  %v3433 = vpop.f32.mrb[0].mxu0
  %3434 = vmatprep.mubr.bf16.mxu0 0
  %3435 = vmatmul.mubr.bf16.gmra.mrb[0].mxu0 %v2962
  %v3436 = vpop.f32.mrb[0].mxu0
  %v3437 = vadd.f32 %v3001, %v3436
  %v3438 = vpop.f32.mrb[0].mxu0
  %v3439 = vpop.f32.mrb[0].mxu0
  %v3440 = vadd.f32 %v3001, %v3439
  %v3441 = vpop.f32.mrb[0].mxu0
  %3442 = vmatprep.mubr.bf16.mxu0 0
  %3443 = vmatmul.mubr.bf16.gmra.mrb[0].mxu0 %v2963
  %v3444 = vpop.f32.mrb[0].mxu0
  %v3445 = vadd.f32 %v3001, %v3444
  %v3446 = vpop.f32.mrb[0].mxu0
  %v3447 = vpop.f32.mrb[0].mxu0
  %v3448 = vadd.f32 %v3001, %v3447
  %v3449 = vpop.f32.mrb[0].mxu0
  %3450 = vmatprep.mubr.bf16.mxu0 0
  %3451 = vmatmul.mubr.bf16.gmra.mrb[0].mxu0 %v2964
  %v3452 = vpop.f32.mrb[0].mxu0
  %v3453 = vadd.f32 %v3001, %v3452
  %v3454 = vpop.f32.mrb[0].mxu0
  %v3455 = vpop.f32.mrb[0].mxu0
  %v3456 = vadd.f32 %v3001, %v3455
  %v3457 = vpop.f32.mrb[0].mxu0
  %3458 = vmatprep.mubr.bf16.mxu0 0
  %3459 = vmatmul.mubr.bf16.gmra.mrb[0].mxu0 %v2965
  %v3460 = vpop.f32.mrb[0].mxu0
  %v3461 = vadd.f32 %v3001, %v3460
  %v3462 = vpop.f32.mrb[0].mxu0
  %v3463 = vpop.f32.mrb[0].mxu0
  %v3464 = vadd.f32 %v3001, %v3463
  %v3465 = vpop.f32.mrb[0].mxu0
  %3466 = vmatprep.mubr.bf16.mxu0 0
  %3467 = vmatmul.mubr.bf16.gmra.mrb[0].mxu0 %v2966
  %v3468 = vpop.f32.mrb[0].mxu0
  %v3469 = vadd.f32 %v3001, %v3468
  %v3470 = vpop.f32.mrb[0].mxu0
  %v3471 = vpop.f32.mrb[0].mxu0
  %v3472 = vadd.f32 %v3001, %v3471
  %v3473 = vpop.f32.mrb[0].mxu0
  %3474 = vmatprep.mubr.bf16.mxu0 0
  %3475 = vmatmul.mubr.bf16.gmra.mrb[0].mxu0 %v2967
  %v3476 = vpop.f32.mrb[0].mxu0
  %v3477 = vadd.f32 %v3001, %v3476
  %v3478 = vpop.f32.mrb[0].mxu0
  %v3479 = vpop.f32.mrb[0].mxu0
  %v3480 = vadd.f32 %v3001, %v3479
  %v3481 = vpop.f32.mrb[0].mxu0
  %3482 = vmatprep.mubr.bf16.mxu0 0
  %3483 = vmatmul.mubr.bf16.gmra.mrb[0].mxu0 %v2968
  %v3484 = vpop.f32.mrb[0].mxu0
  %v3485 = vadd.f32 %v3001, %v3484
  %v3486 = vpop.f32.mrb[0].mxu0
  %v3487 = vpop.f32.mrb[0].mxu0
  %v3488 = vadd.f32 %v3001, %v3487
  %v3489 = vpop.f32.mrb[0].mxu0
  %3490 = vmatprep.mubr.bf16.mxu0 0
  %3491 = vmatmul.mubr.bf16.gmra.mrb[0].mxu0 %v2969
  %v3492 = vpop.f32.mrb[0].mxu0
  %v3493 = vadd.f32 %v3001, %v3492
  %v3494 = vpop.f32.mrb[0].mxu0
  %v3495 = vpop.f32.mrb[0].mxu0
  %v3496 = vadd.f32 %v3001, %v3495
  %v3497 = vpop.f32.mrb[0].mxu0
  %3498 = vmatprep.mubr.bf16.mxu0 0
  %3499 = vmatmul.mubr.bf16.gmra.mrb[0].mxu0 %v2970
  %v3500 = vpop.f32.mrb[0].mxu0
  %v3501 = vadd.f32 %v3001, %v3500
  %v3502 = vpop.f32.mrb[0].mxu0
  %v3503 = vpop.f32.mrb[0].mxu0
  %v3504 = vadd.f32 %v3001, %v3503
  %v3505 = vpop.f32.mrb[0].mxu0
  %3506 = vmatprep.mubr.bf16.mxu0 0
  %3507 = vmatmul.mubr.bf16.gmra.mrb[0].mxu0 %v2971
  %v3508 = vpop.f32.mrb[0].mxu0
  %v3509 = vadd.f32 %v3001, %v3508
  %v3510 = vpop.f32.mrb[0].mxu0
  %v3511 = vpop.f32.mrb[0].mxu0
  %v3512 = vadd.f32 %v3001, %v3511
  %v3513 = vpop.f32.mrb[0].mxu0
  %3514 = vmatprep.mubr.bf16.mxu0 0
  %3515 = vmatmul.mubr.bf16.gmra.mrb[0].mxu0 %v2972
  %v3516 = vpop.f32.mrb[0].mxu0
  %v3517 = vadd.f32 %v3001, %v3516
  %v3518 = vpop.f32.mrb[0].mxu0
  %v3519 = vpop.f32.mrb[0].mxu0
  %v3520 = vadd.f32 %v3001, %v3519
  %v3521 = vpop.f32.mrb[0].mxu0
  %3522 = vmatprep.mubr.bf16.mxu0 0
  %3523 = vmatmul.mubr.bf16.gmra.mrb[0].mxu0 %v2973
  %v3524 = vpop.f32.mrb[0].mxu0
  %v3525 = vadd.f32 %v3001, %v3524
  %v3526 = vpop.f32.mrb[0].mxu0
  %v3527 = vpop.f32.mrb[0].mxu0
  %v3528 = vadd.f32 %v3001, %v3527
  %v3529 = vpop.f32.mrb[0].mxu0
  %3530 = vmatprep.mubr.bf16.mxu0 0
  %3531 = vmatmul.mubr.bf16.gmra.mrb[0].mxu0 %v2974
  %v3532 = vpop.f32.mrb[0].mxu0
  %v3533 = vadd.f32 %v3001, %v3532
  %v3534 = vpop.f32.mrb[0].mxu0
  %v3535 = vpop.f32.mrb[0].mxu0
  %v3536 = vadd.f32 %v3001, %v3535
  %v3537 = vpop.f32.mrb[0].mxu0
  %3538 = vmatprep.mubr.bf16.mxu0 0
  %3539 = vmatmul.mubr.bf16.gmra.mrb[0].mxu0 %v2975
  %v3540 = vpop.f32.mrb[0].mxu0
  %v3541 = vadd.f32 %v3001, %v3540
  %v3542 = vpop.f32.mrb[0].mxu0
  %v3543 = vpop.f32.mrb[0].mxu0
  %v3544 = vadd.f32 %v3001, %v3543
  %v3545 = vpop.f32.mrb[0].mxu0
  %3546 = vmatprep.mubr.bf16.mxu0 0
  %3547 = vmatmul.mubr.bf16.gmra.mrb[0].mxu0 %v2976
  %v3548 = vpop.f32.mrb[0].mxu0
  %v3549 = vadd.f32 %v3001, %v3548
  %v3550 = vpop.f32.mrb[0].mxu0
  %v3551 = vpop.f32.mrb[0].mxu0
  %v3552 = vadd.f32 %v3001, %v3551
  %v3553 = vpop.f32.mrb[0].mxu0
  %3554 = vmatprep.mubr.bf16.mxu0 0
  %3555 = vmatmul.mubr.bf16.gmra.mrb[0].mxu0 %v2977
  %v3556 = vpop.f32.mrb[0].mxu0
  %v3557 = vadd.f32 %v3001, %v3556
  %v3558 = vpop.f32.mrb[0].mxu0
  %v3559 = vpop.f32.mrb[0].mxu0
  %v3560 = vadd.f32 %v3001, %v3559
  %v3561 = vpop.f32.mrb[0].mxu0
  %3562 = vmatprep.mubr.bf16.mxu0 0
  %3563 = vmatmul.mubr.bf16.gmra.mrb[0].mxu0 %v2978
  %v3564 = vpop.f32.mrb[0].mxu0
  %v3565 = vadd.f32 %v3001, %v3564
  %v3566 = vpop.f32.mrb[0].mxu0
  %v3567 = vpop.f32.mrb[0].mxu0
  %v3568 = vadd.f32 %v3001, %v3567
  %v3569 = vpop.f32.mrb[0].mxu0
  %3570 = vmatprep.mubr.bf16.mxu0 0
  %3571 = vmatmul.mubr.bf16.gmra.mrb[0].mxu0 %v2979
  %v3572 = vpop.f32.mrb[0].mxu0
  %v3573 = vadd.f32 %v3001, %v3572
  %v3574 = vpop.f32.mrb[0].mxu0
  %v3575 = vpop.f32.mrb[0].mxu0
  %v3576 = vadd.f32 %v3001, %v3575
  %v3577 = vpop.f32.mrb[0].mxu0
  %3578 = vmatprep.mubr.bf16.mxu0 0
  %3579 = vmatmul.mubr.bf16.gmra.mrb[0].mxu0 %v2980
  %v3580 = vpop.f32.mrb[0].mxu0
  %v3581 = vadd.f32 %v3001, %v3580
  %v3582 = vpop.f32.mrb[0].mxu0
  %v3583 = vpop.f32.mrb[0].mxu0
  %v3584 = vadd.f32 %v3001, %v3583
  %v3585 = vpop.f32.mrb[0].mxu0
  %3586 = vmatprep.mubr.bf16.mxu0 0
  %3587 = vmatmul.mubr.bf16.gmra.mrb[0].mxu0 %v2981
  %v3588 = vpop.f32.mrb[0].mxu0
  %v3589 = vadd.f32 %v3001, %v3588
  %v3590 = vpop.f32.mrb[0].mxu0
  %v3591 = vpop.f32.mrb[0].mxu0
  %v3592 = vadd.f32 %v3001, %v3591
  %v3593 = vpop.f32.mrb[0].mxu0
  %3594 = vdwg.mxu0
  %v3595 = vmax.f32 %v3085, 0.0
  %v3596 = vmax.f32 %v3088, 0.0
  %v3597 = vmax.f32 %v3093, 0.0
  %v3598 = vmax.f32 %v3096, 0.0
  %v3599 = vmax.f32 %v3101, 0.0
  %v3600 = vmax.f32 %v3104, 0.0
  %v3601 = vmax.f32 %v3109, 0.0
  %v3602 = vmax.f32 %v3112, 0.0
  %v3603 = vmax.f32 %v3117, 0.0
  %v3604 = vmax.f32 %v3120, 0.0
  %v3605 = vmax.f32 %v3125, 0.0
  %v3606 = vmax.f32 %v3128, 0.0
  %v3607 = vmax.f32 %v3133, 0.0
  %v3608 = vmax.f32 %v3136, 0.0
  %v3609 = vmax.f32 %v3141, 0.0
  %v3610 = vmax.f32 %v3144, 0.0
  %v3611 = vmax.f32 %v3149, 0.0
  %v3612 = vmax.f32 %v3152, 0.0
  %v3613 = vmax.f32 %v3157, 0.0
  %v3614 = vmax.f32 %v3160, 0.0
  %v3615 = vmax.f32 %v3165, 0.0
  %v3616 = vmax.f32 %v3168, 0.0
  %v3617 = vmax.f32 %v3173, 0.0
  %v3618 = vmax.f32 %v3176, 0.0
  %v3619 = vmax.f32 %v3181, 0.0
  %v3620 = vmax.f32 %v3184, 0.0
  %v3621 = vmax.f32 %v3189, 0.0
  %v3622 = vmax.f32 %v3192, 0.0
  %v3623 = vmax.f32 %v3197, 0.0
  %v3624 = vmax.f32 %v3200, 0.0
  %v3625 = vmax.f32 %v3205, 0.0
  %v3626 = vmax.f32 %v3208, 0.0
  %v3627 = vmax.f32 %v3213, 0.0
  %v3628 = vmax.f32 %v3216, 0.0
  %v3629 = vmax.f32 %v3221, 0.0
  %v3630 = vmax.f32 %v3224, 0.0
  %v3631 = vmax.f32 %v3229, 0.0
  %v3632 = vmax.f32 %v3232, 0.0
  %v3633 = vmax.f32 %v3237, 0.0
  %v3634 = vmax.f32 %v3240, 0.0
  %v3635 = vmax.f32 %v3245, 0.0
  %v3636 = vmax.f32 %v3248, 0.0
  %v3637 = vmax.f32 %v3253, 0.0
  %v3638 = vmax.f32 %v3256, 0.0
  %v3639 = vmax.f32 %v3261, 0.0
  %v3640 = vmax.f32 %v3264, 0.0
  %v3641 = vmax.f32 %v3269, 0.0
  %v3642 = vmax.f32 %v3272, 0.0
  %v3643 = vmax.f32 %v3277, 0.0
  %v3644 = vmax.f32 %v3280, 0.0
  %v3645 = vmax.f32 %v3285, 0.0
  %v3646 = vmax.f32 %v3288, 0.0
  %v3647 = vmax.f32 %v3293, 0.0
  %v3648 = vmax.f32 %v3296, 0.0
  %v3649 = vmax.f32 %v3301, 0.0
  %v3650 = vmax.f32 %v3304, 0.0
  %v3651 = vmax.f32 %v3309, 0.0
  %v3652 = vmax.f32 %v3312, 0.0
  %v3653 = vmax.f32 %v3317, 0.0
  %v3654 = vmax.f32 %v3320, 0.0
  %v3655 = vmax.f32 %v3325, 0.0
  %v3656 = vmax.f32 %v3328, 0.0
  %v3657 = vmax.f32 %v3333, 0.0
  %v3658 = vmax.f32 %v3336, 0.0
  %v3659 = vmax.f32 %v3341, 0.0
  %v3660 = vmax.f32 %v3344, 0.0
  %v3661 = vmax.f32 %v3349, 0.0
  %v3662 = vmax.f32 %v3352, 0.0
  %v3663 = vmax.f32 %v3357, 0.0
  %v3664 = vmax.f32 %v3360, 0.0
  %v3665 = vmax.f32 %v3365, 0.0
  %v3666 = vmax.f32 %v3368, 0.0
  %v3667 = vmax.f32 %v3373, 0.0
  %v3668 = vmax.f32 %v3376, 0.0
  %v3669 = vmax.f32 %v3381, 0.0
  %v3670 = vmax.f32 %v3384, 0.0
  %v3671 = vmax.f32 %v3389, 0.0
  %v3672 = vmax.f32 %v3392, 0.0
  %v3673 = vmax.f32 %v3397, 0.0
  %v3674 = vmax.f32 %v3400, 0.0
  %v3675 = vmax.f32 %v3405, 0.0
  %v3676 = vmax.f32 %v3408, 0.0
  %v3677 = vmax.f32 %v3413, 0.0
  %v3678 = vmax.f32 %v3416, 0.0
  %v3679 = vmax.f32 %v3421, 0.0
  %v3680 = vmax.f32 %v3424, 0.0
  %v3681 = vmax.f32 %v3429, 0.0
  %v3682 = vmax.f32 %v3432, 0.0
  %v3683 = vmax.f32 %v3437, 0.0
  %v3684 = vmax.f32 %v3440, 0.0
  %v3685 = vmax.f32 %v3445, 0.0
  %v3686 = vmax.f32 %v3448, 0.0
  %v3687 = vmax.f32 %v3453, 0.0
  %v3688 = vmax.f32 %v3456, 0.0
  %v3689 = vmax.f32 %v3461, 0.0
  %v3690 = vmax.f32 %v3464, 0.0
  %v3691 = vmax.f32 %v3469, 0.0
  %v3692 = vmax.f32 %v3472, 0.0
  %v3693 = vmax.f32 %v3477, 0.0
  %v3694 = vmax.f32 %v3480, 0.0
  %v3695 = vmax.f32 %v3485, 0.0
  %v3696 = vmax.f32 %v3488, 0.0
  %v3697 = vmax.f32 %v3493, 0.0
  %v3698 = vmax.f32 %v3496, 0.0
  %v3699 = vmax.f32 %v3501, 0.0
  %v3700 = vmax.f32 %v3504, 0.0
  %v3701 = vmax.f32 %v3509, 0.0
  %v3702 = vmax.f32 %v3512, 0.0
  %v3703 = vmax.f32 %v3517, 0.0
  %v3704 = vmax.f32 %v3520, 0.0
  %v3705 = vmax.f32 %v3525, 0.0
  %v3706 = vmax.f32 %v3528, 0.0
  %v3707 = vmax.f32 %v3533, 0.0
  %v3708 = vmax.f32 %v3536, 0.0
  %v3709 = vmax.f32 %v3541, 0.0
  %v3710 = vmax.f32 %v3544, 0.0
  %v3711 = vmax.f32 %v3549, 0.0
  %v3712 = vmax.f32 %v3552, 0.0
  %v3713 = vmax.f32 %v3557, 0.0
  %v3714 = vmax.f32 %v3560, 0.0
  %v3715 = vmax.f32 %v3565, 0.0
  %v3716 = vmax.f32 %v3568, 0.0
  %v3717 = vmax.f32 %v3573, 0.0
  %v3718 = vmax.f32 %v3576, 0.0
  %v3719 = vmax.f32 %v3581, 0.0
  %v3720 = vmax.f32 %v3584, 0.0
  %v3721 = vmax.f32 %v3589, 0.0
  %v3722 = vmax.f32 %v3592, 0.0
  %v3723 = vlaneseq
  %v3724 = vshrl.u32 %v3723, 7
  %v3725 = vsub.s32 0, %v3724
  %v3726 = vrot.slane %v36, %v3725
  %v3727 = vmul.f32 %v3595, %v3726
  %v3728 = vmul.f32 %v3596, %v3726
  %v3729 = vmul.f32 %v3597, %v3726
  %v3730 = vmul.f32 %v3598, %v3726
  %v3731 = vmul.f32 %v3599, %v3726
  %v3732 = vmul.f32 %v3600, %v3726
  %v3733 = vmul.f32 %v3601, %v3726
  %v3734 = vmul.f32 %v3602, %v3726
  %v3735 = vmul.f32 %v3603, %v3726
  %v3736 = vmul.f32 %v3604, %v3726
  %v3737 = vmul.f32 %v3605, %v3726
  %v3738 = vmul.f32 %v3606, %v3726
  %v3739 = vmul.f32 %v3607, %v3726
  %v3740 = vmul.f32 %v3608, %v3726
  %v3741 = vmul.f32 %v3609, %v3726
  %v3742 = vmul.f32 %v3610, %v3726
  %v3743 = vmul.f32 %v3611, %v3726
  %v3744 = vmul.f32 %v3612, %v3726
  %v3745 = vmul.f32 %v3613, %v3726
  %v3746 = vmul.f32 %v3614, %v3726
  %v3747 = vmul.f32 %v3615, %v3726
  %v3748 = vmul.f32 %v3616, %v3726
  %v3749 = vmul.f32 %v3617, %v3726
  %v3750 = vmul.f32 %v3618, %v3726
  %v3751 = vmul.f32 %v3619, %v3726
  %v3752 = vmul.f32 %v3620, %v3726
  %v3753 = vmul.f32 %v3621, %v3726
  %v3754 = vmul.f32 %v3622, %v3726
  %v3755 = vmul.f32 %v3623, %v3726
  %v3756 = vmul.f32 %v3624, %v3726
  %v3757 = vmul.f32 %v3625, %v3726
  %v3758 = vmul.f32 %v3626, %v3726
  %v3759 = vmul.f32 %v3627, %v3726
  %v3760 = vmul.f32 %v3628, %v3726
  %v3761 = vmul.f32 %v3629, %v3726
  %v3762 = vmul.f32 %v3630, %v3726
  %v3763 = vmul.f32 %v3631, %v3726
  %v3764 = vmul.f32 %v3632, %v3726
  %v3765 = vmul.f32 %v3633, %v3726
  %v3766 = vmul.f32 %v3634, %v3726
  %v3767 = vmul.f32 %v3635, %v3726
  %v3768 = vmul.f32 %v3636, %v3726
  %v3769 = vmul.f32 %v3637, %v3726
  %v3770 = vmul.f32 %v3638, %v3726
  %v3771 = vmul.f32 %v3639, %v3726
  %v3772 = vmul.f32 %v3640, %v3726
  %v3773 = vmul.f32 %v3641, %v3726
  %v3774 = vmul.f32 %v3642, %v3726
  %v3775 = vmul.f32 %v3643, %v3726
  %v3776 = vmul.f32 %v3644, %v3726
  %v3777 = vmul.f32 %v3645, %v3726
  %v3778 = vmul.f32 %v3646, %v3726
  %v3779 = vmul.f32 %v3647, %v3726
  %v3780 = vmul.f32 %v3648, %v3726
  %v3781 = vmul.f32 %v3649, %v3726
  %v3782 = vmul.f32 %v3650, %v3726
  %v3783 = vmul.f32 %v3651, %v3726
  %v3784 = vmul.f32 %v3652, %v3726
  %v3785 = vmul.f32 %v3653, %v3726
  %v3786 = vmul.f32 %v3654, %v3726
  %v3787 = vmul.f32 %v3655, %v3726
  %v3788 = vmul.f32 %v3656, %v3726
  %v3789 = vmul.f32 %v3657, %v3726
  %v3790 = vmul.f32 %v3658, %v3726
  %v3791 = vmul.f32 %v3659, %v3726
  %v3792 = vmul.f32 %v3660, %v3726
  %v3793 = vmul.f32 %v3661, %v3726
  %v3794 = vmul.f32 %v3662, %v3726
  %v3795 = vmul.f32 %v3663, %v3726
  %v3796 = vmul.f32 %v3664, %v3726
  %v3797 = vmul.f32 %v3665, %v3726
  %v3798 = vmul.f32 %v3666, %v3726
  %v3799 = vmul.f32 %v3667, %v3726
  %v3800 = vmul.f32 %v3668, %v3726
  %v3801 = vmul.f32 %v3669, %v3726
  %v3802 = vmul.f32 %v3670, %v3726
  %v3803 = vmul.f32 %v3671, %v3726
  %v3804 = vmul.f32 %v3672, %v3726
  %v3805 = vmul.f32 %v3673, %v3726
  %v3806 = vmul.f32 %v3674, %v3726
  %v3807 = vmul.f32 %v3675, %v3726
  %v3808 = vmul.f32 %v3676, %v3726
  %v3809 = vmul.f32 %v3677, %v3726
  %v3810 = vmul.f32 %v3678, %v3726
  %v3811 = vmul.f32 %v3679, %v3726
  %v3812 = vmul.f32 %v3680, %v3726
  %v3813 = vmul.f32 %v3681, %v3726
  %v3814 = vmul.f32 %v3682, %v3726
  %v3815 = vmul.f32 %v3683, %v3726
  %v3816 = vmul.f32 %v3684, %v3726
  %v3817 = vmul.f32 %v3685, %v3726
  %v3818 = vmul.f32 %v3686, %v3726
  %v3819 = vmul.f32 %v3687, %v3726
  %v3820 = vmul.f32 %v3688, %v3726
  %v3821 = vmul.f32 %v3689, %v3726
  %v3822 = vmul.f32 %v3690, %v3726
  %v3823 = vmul.f32 %v3691, %v3726
  %v3824 = vmul.f32 %v3692, %v3726
  %v3825 = vmul.f32 %v3693, %v3726
  %v3826 = vmul.f32 %v3694, %v3726
  %v3827 = vmul.f32 %v3695, %v3726
  %v3828 = vmul.f32 %v3696, %v3726
  %v3829 = vmul.f32 %v3697, %v3726
  %v3830 = vmul.f32 %v3698, %v3726
  %v3831 = vmul.f32 %v3699, %v3726
  %v3832 = vmul.f32 %v3700, %v3726
  %v3833 = vmul.f32 %v3701, %v3726
  %v3834 = vmul.f32 %v3702, %v3726
  %v3835 = vmul.f32 %v3703, %v3726
  %v3836 = vmul.f32 %v3704, %v3726
  %v3837 = vmul.f32 %v3705, %v3726
  %v3838 = vmul.f32 %v3706, %v3726
  %v3839 = vmul.f32 %v3707, %v3726
  %v3840 = vmul.f32 %v3708, %v3726
  %v3841 = vmul.f32 %v3709, %v3726
  %v3842 = vmul.f32 %v3710, %v3726
  %v3843 = vmul.f32 %v3711, %v3726
  %v3844 = vmul.f32 %v3712, %v3726
  %v3845 = vmul.f32 %v3713, %v3726
  %v3846 = vmul.f32 %v3714, %v3726
  %v3847 = vmul.f32 %v3715, %v3726
  %v3848 = vmul.f32 %v3716, %v3726
  %v3849 = vmul.f32 %v3717, %v3726
  %v3850 = vmul.f32 %v3718, %v3726
  %v3851 = vmul.f32 %v3719, %v3726
  %v3852 = vmul.f32 %v3720, %v3726
  %v3853 = vmul.f32 %v3721, %v3726
  %v3854 = vmul.f32 %v3722, %v3726
  %v3855 = vlaneseq
  %v3856 = vshrl.u32 %v3855, 7
  %v3857 = vsub.s32 0, %v3856
  %v3858 = vrot.slane %v37, %v3857
  %v3859 = vadd.f32 %v3727, %v3858
  %v3860 = vadd.f32 %v3728, %v3858
  %v3861 = vadd.f32 %v3729, %v3858
  %v3862 = vadd.f32 %v3730, %v3858
  %v3863 = vadd.f32 %v3731, %v3858
  %v3864 = vadd.f32 %v3732, %v3858
  %v3865 = vadd.f32 %v3733, %v3858
  %v3866 = vadd.f32 %v3734, %v3858
  %v3867 = vadd.f32 %v3735, %v3858
  %v3868 = vadd.f32 %v3736, %v3858
  %v3869 = vadd.f32 %v3737, %v3858
  %v3870 = vadd.f32 %v3738, %v3858
  %v3871 = vadd.f32 %v3739, %v3858
  %v3872 = vadd.f32 %v3740, %v3858
  %v3873 = vadd.f32 %v3741, %v3858
  %v3874 = vadd.f32 %v3742, %v3858
  %v3875 = vadd.f32 %v3743, %v3858
  %v3876 = vadd.f32 %v3744, %v3858
  %v3877 = vadd.f32 %v3745, %v3858
  %v3878 = vadd.f32 %v3746, %v3858
  %v3879 = vadd.f32 %v3747, %v3858
  %v3880 = vadd.f32 %v3748, %v3858
  %v3881 = vadd.f32 %v3749, %v3858
  %v3882 = vadd.f32 %v3750, %v3858
  %v3883 = vadd.f32 %v3751, %v3858
  %v3884 = vadd.f32 %v3752, %v3858
  %v3885 = vadd.f32 %v3753, %v3858
  %v3886 = vadd.f32 %v3754, %v3858
  %v3887 = vadd.f32 %v3755, %v3858
  %v3888 = vadd.f32 %v3756, %v3858
  %v3889 = vadd.f32 %v3757, %v3858
  %v3890 = vadd.f32 %v3758, %v3858
  %v3891 = vadd.f32 %v3759, %v3858
  %v3892 = vadd.f32 %v3760, %v3858
  %v3893 = vadd.f32 %v3761, %v3858
  %v3894 = vadd.f32 %v3762, %v3858
  %v3895 = vadd.f32 %v3763, %v3858
  %v3896 = vadd.f32 %v3764, %v3858
  %v3897 = vadd.f32 %v3765, %v3858
  %v3898 = vadd.f32 %v3766, %v3858
  %v3899 = vadd.f32 %v3767, %v3858
  %v3900 = vadd.f32 %v3768, %v3858
  %v3901 = vadd.f32 %v3769, %v3858
  %v3902 = vadd.f32 %v3770, %v3858
  %v3903 = vadd.f32 %v3771, %v3858
  %v3904 = vadd.f32 %v3772, %v3858
  %v3905 = vadd.f32 %v3773, %v3858
  %v3906 = vadd.f32 %v3774, %v3858
  %v3907 = vadd.f32 %v3775, %v3858
  %v3908 = vadd.f32 %v3776, %v3858
  %v3909 = vadd.f32 %v3777, %v3858
  %v3910 = vadd.f32 %v3778, %v3858
  %v3911 = vadd.f32 %v3779, %v3858
  %v3912 = vadd.f32 %v3780, %v3858
  %v3913 = vadd.f32 %v3781, %v3858
  %v3914 = vadd.f32 %v3782, %v3858
  %v3915 = vadd.f32 %v3783, %v3858
  %v3916 = vadd.f32 %v3784, %v3858
  %v3917 = vadd.f32 %v3785, %v3858
  %v3918 = vadd.f32 %v3786, %v3858
  %v3919 = vadd.f32 %v3787, %v3858
  %v3920 = vadd.f32 %v3788, %v3858
  %v3921 = vadd.f32 %v3789, %v3858
  %v3922 = vadd.f32 %v3790, %v3858
  %v3923 = vadd.f32 %v3791, %v3858
  %v3924 = vadd.f32 %v3792, %v3858
  %v3925 = vadd.f32 %v3793, %v3858
  %v3926 = vadd.f32 %v3794, %v3858
  %v3927 = vadd.f32 %v3795, %v3858
  %v3928 = vadd.f32 %v3796, %v3858
  %v3929 = vadd.f32 %v3797, %v3858
  %v3930 = vadd.f32 %v3798, %v3858
  %v3931 = vadd.f32 %v3799, %v3858
  %v3932 = vadd.f32 %v3800, %v3858
  %v3933 = vadd.f32 %v3801, %v3858
  %v3934 = vadd.f32 %v3802, %v3858
  %v3935 = vadd.f32 %v3803, %v3858
  %v3936 = vadd.f32 %v3804, %v3858
  %v3937 = vadd.f32 %v3805, %v3858
  %v3938 = vadd.f32 %v3806, %v3858
  %v3939 = vadd.f32 %v3807, %v3858
  %v3940 = vadd.f32 %v3808, %v3858
  %v3941 = vadd.f32 %v3809, %v3858
  %v3942 = vadd.f32 %v3810, %v3858
  %v3943 = vadd.f32 %v3811, %v3858
  %v3944 = vadd.f32 %v3812, %v3858
  %v3945 = vadd.f32 %v3813, %v3858
  %v3946 = vadd.f32 %v3814, %v3858
  %v3947 = vadd.f32 %v3815, %v3858
  %v3948 = vadd.f32 %v3816, %v3858
  %v3949 = vadd.f32 %v3817, %v3858
  %v3950 = vadd.f32 %v3818, %v3858
  %v3951 = vadd.f32 %v3819, %v3858
  %v3952 = vadd.f32 %v3820, %v3858
  %v3953 = vadd.f32 %v3821, %v3858
  %v3954 = vadd.f32 %v3822, %v3858
  %v3955 = vadd.f32 %v3823, %v3858
  %v3956 = vadd.f32 %v3824, %v3858
  %v3957 = vadd.f32 %v3825, %v3858
  %v3958 = vadd.f32 %v3826, %v3858
  %v3959 = vadd.f32 %v3827, %v3858
  %v3960 = vadd.f32 %v3828, %v3858
  %v3961 = vadd.f32 %v3829, %v3858
  %v3962 = vadd.f32 %v3830, %v3858
  %v3963 = vadd.f32 %v3831, %v3858
  %v3964 = vadd.f32 %v3832, %v3858
  %v3965 = vadd.f32 %v3833, %v3858
  %v3966 = vadd.f32 %v3834, %v3858
  %v3967 = vadd.f32 %v3835, %v3858
  %v3968 = vadd.f32 %v3836, %v3858
  %v3969 = vadd.f32 %v3837, %v3858
  %v3970 = vadd.f32 %v3838, %v3858
  %v3971 = vadd.f32 %v3839, %v3858
  %v3972 = vadd.f32 %v3840, %v3858
  %v3973 = vadd.f32 %v3841, %v3858
  %v3974 = vadd.f32 %v3842, %v3858
  %v3975 = vadd.f32 %v3843, %v3858
  %v3976 = vadd.f32 %v3844, %v3858
  %v3977 = vadd.f32 %v3845, %v3858
  %v3978 = vadd.f32 %v3846, %v3858
  %v3979 = vadd.f32 %v3847, %v3858
  %v3980 = vadd.f32 %v3848, %v3858
  %v3981 = vadd.f32 %v3849, %v3858
  %v3982 = vadd.f32 %v3850, %v3858
  %v3983 = vadd.f32 %v3851, %v3858
  %v3984 = vadd.f32 %v3852, %v3858
  %v3985 = vadd.f32 %v3853, %v3858
  %v3986 = vadd.f32 %v3854, %v3858
  %v3987 = vpack.c.bf16 %v3860, %v3859
  %v3988 = vpack.c.bf16 %v3862, %v3861
  %v3989 = vpack.c.bf16 %v3864, %v3863
  %v3990 = vpack.c.bf16 %v3866, %v3865
  %v3991 = vpack.c.bf16 %v3868, %v3867
  %v3992 = vpack.c.bf16 %v3870, %v3869
  %v3993 = vpack.c.bf16 %v3872, %v3871
  %v3994 = vpack.c.bf16 %v3874, %v3873
  %v3995 = vpack.c.bf16 %v3876, %v3875
  %v3996 = vpack.c.bf16 %v3878, %v3877
  %v3997 = vpack.c.bf16 %v3880, %v3879
  %v3998 = vpack.c.bf16 %v3882, %v3881
  %v3999 = vpack.c.bf16 %v3884, %v3883
  %v4000 = vpack.c.bf16 %v3886, %v3885
  %v4001 = vpack.c.bf16 %v3888, %v3887
  %v4002 = vpack.c.bf16 %v3890, %v3889
  %v4003 = vpack.c.bf16 %v3892, %v3891
  %v4004 = vpack.c.bf16 %v3894, %v3893
  %v4005 = vpack.c.bf16 %v3896, %v3895
  %v4006 = vpack.c.bf16 %v3898, %v3897
  %v4007 = vpack.c.bf16 %v3900, %v3899
  %v4008 = vpack.c.bf16 %v3902, %v3901
  %v4009 = vpack.c.bf16 %v3904, %v3903
  %v4010 = vpack.c.bf16 %v3906, %v3905
  %v4011 = vpack.c.bf16 %v3908, %v3907
  %v4012 = vpack.c.bf16 %v3910, %v3909
  %v4013 = vpack.c.bf16 %v3912, %v3911
  %v4014 = vpack.c.bf16 %v3914, %v3913
  %v4015 = vpack.c.bf16 %v3916, %v3915
  %v4016 = vpack.c.bf16 %v3918, %v3917
  %v4017 = vpack.c.bf16 %v3920, %v3919
  %v4018 = vpack.c.bf16 %v3922, %v3921
  %v4019 = vpack.c.bf16 %v3924, %v3923
  %v4020 = vpack.c.bf16 %v3926, %v3925
  %v4021 = vpack.c.bf16 %v3928, %v3927
  %v4022 = vpack.c.bf16 %v3930, %v3929
  %v4023 = vpack.c.bf16 %v3932, %v3931
  %v4024 = vpack.c.bf16 %v3934, %v3933
  %v4025 = vpack.c.bf16 %v3936, %v3935
  %v4026 = vpack.c.bf16 %v3938, %v3937
  %v4027 = vpack.c.bf16 %v3940, %v3939
  %v4028 = vpack.c.bf16 %v3942, %v3941
  %v4029 = vpack.c.bf16 %v3944, %v3943
  %v4030 = vpack.c.bf16 %v3946, %v3945
  %v4031 = vpack.c.bf16 %v3948, %v3947
  %v4032 = vpack.c.bf16 %v3950, %v3949
  %v4033 = vpack.c.bf16 %v3952, %v3951
  %v4034 = vpack.c.bf16 %v3954, %v3953
  %v4035 = vpack.c.bf16 %v3956, %v3955
  %v4036 = vpack.c.bf16 %v3958, %v3957
  %v4037 = vpack.c.bf16 %v3960, %v3959
  %v4038 = vpack.c.bf16 %v3962, %v3961
  %v4039 = vpack.c.bf16 %v3964, %v3963
  %v4040 = vpack.c.bf16 %v3966, %v3965
  %v4041 = vpack.c.bf16 %v3968, %v3967
  %v4042 = vpack.c.bf16 %v3970, %v3969
  %v4043 = vpack.c.bf16 %v3972, %v3971
  %v4044 = vpack.c.bf16 %v3974, %v3973
  %v4045 = vpack.c.bf16 %v3976, %v3975
  %v4046 = vpack.c.bf16 %v3978, %v3977
  %v4047 = vpack.c.bf16 %v3980, %v3979
  %v4048 = vpack.c.bf16 %v3982, %v3981
  %v4049 = vpack.c.bf16 %v3984, %v3983
  %v4050 = vpack.c.bf16 %v3986, %v3985
  %v4051 = vld [vmem:[%s5] sm:$0xf]
  %v4052 = vld [vmem:[%s5 + $0x4] sm:$0xf]
  %v4053 = vld [vmem:[%s5 + $0x8] sm:$0xf]
  %v4054 = vld [vmem:[%s5 + $0xc] sm:$0xf]
  %v4055 = vld [vmem:[%s5 + $0x10] sm:$0xf]
  %v4056 = vld [vmem:[%s5 + $0x14] sm:$0xf]
  %v4057 = vld [vmem:[%s5 + $0x18] sm:$0xf]
  %v4058 = vld [vmem:[%s5 + $0x1c] sm:$0xf]
  %v4059 = vld [vmem:[%s5 + $0x20] sm:$0xf]
  %v4060 = vld [vmem:[%s5 + $0x24] sm:$0xf]
  %v4061 = vld [vmem:[%s5 + $0x28] sm:$0xf]
  %v4062 = vld [vmem:[%s5 + $0x2c] sm:$0xf]
  %v4063 = vld [vmem:[%s5 + $0x30] sm:$0xf]
  %v4064 = vld [vmem:[%s5 + $0x34] sm:$0xf]
  %v4065 = vld [vmem:[%s5 + $0x38] sm:$0xf]
  %v4066 = vld [vmem:[%s5 + $0x3c] sm:$0xf]
  %v4067 = vlaneseq
  %v4068 = vshrl.u32 %v4067, 7
  %v4069 = vsub.s32 0, %v4068
  %v4070 = vrot.slane %v38, %v4069
  %v4087 = vunpack.c.l.b16 %v4051
  %v4088 = vunpack.c.l.b16 %v4052
  %v4089 = vunpack.c.l.b16 %v4053
  %v4090 = vunpack.c.l.b16 %v4054
  %v4091 = vunpack.c.l.b16 %v4055
  %v4092 = vunpack.c.l.b16 %v4056
  %v4093 = vunpack.c.l.b16 %v4057
  %v4094 = vunpack.c.l.b16 %v4058
  %v4095 = vunpack.c.l.b16 %v4059
  %v4096 = vunpack.c.l.b16 %v4060
  %v4097 = vunpack.c.l.b16 %v4061
  %v4098 = vunpack.c.l.b16 %v4062
  %v4099 = vunpack.c.l.b16 %v4063
  %v4100 = vunpack.c.l.b16 %v4064
  %v4101 = vunpack.c.l.b16 %v4065
  %v4102 = vunpack.c.l.b16 %v4066
  %v4103 = vpack.c.b16 %v4088, %v4087
  %v4104 = vpack.c.b16 %v4090, %v4089
  %v4105 = vpack.c.b16 %v4092, %v4091
  %v4106 = vpack.c.b16 %v4094, %v4093
  %v4107 = vpack.c.b16 %v4096, %v4095
  %v4108 = vpack.c.b16 %v4098, %v4097
  %v4109 = vpack.c.b16 %v4100, %v4099
  %v4110 = vpack.c.b16 %v4102, %v4101
  %4119 = vmatprep.subr.bf16.mxu0 0
  %4120 = vmatpush1.bf16.msra.mxu0 %v4103
  %4121 = vmatprep.subr.bf16.mxu0 0
  %4122 = vmatpush1.bf16.msra.mxu0 %v4104
  %4123 = vmatprep.subr.bf16.mxu0 0
  %4124 = vmatpush1.bf16.msra.mxu0 %v4105
  %4125 = vmatprep.subr.bf16.mxu0 0
  %4126 = vmatpush1.bf16.msra.mxu0 %v4106
  %4127 = vmatprep.subr.bf16.mxu0 0
  %4128 = vmatpush1.bf16.msra.mxu0 %v4107
  %4129 = vmatprep.subr.bf16.mxu0 0
  %4130 = vmatpush1.bf16.msra.mxu0 %v4108
  %4131 = vmatprep.subr.bf16.mxu0 0
  %4132 = vmatpush1.bf16.msra.mxu0 %v4109
  %4133 = vmatprep.subr.bf16.mxu0 0
  %4134 = vmatpush1.bf16.msra.mxu0 %v4110
  %4135 = vmatprep.subr.bf16.mxu0 0
  %4136 = vmatpush1.bf16.msra.mxu0 0
  %4137 = vmatprep.subr.bf16.mxu0 0
  %4138 = vmatpush1.bf16.msra.mxu0 0
  %4139 = vmatprep.subr.bf16.mxu0 0
  %4140 = vmatpush1.bf16.msra.mxu0 0
  %4141 = vmatprep.subr.bf16.mxu0 0
  %4142 = vmatpush1.bf16.msra.mxu0 0
  %4143 = vmatprep.subr.bf16.mxu0 0
  %4144 = vmatpush1.bf16.msra.mxu0 0
  %4145 = vmatprep.subr.bf16.mxu0 0
  %4146 = vmatpush1.bf16.msra.mxu0 0
  %4147 = vmatprep.subr.bf16.mxu0 0
  %4148 = vmatpush1.bf16.msra.mxu0 0
  %4149 = vmatprep.subr.bf16.mxu0 0
  %4150 = vmatpush1.bf16.msra.mxu0 0
  %4151 = vmatprep.mubr.bf16.mxu0 0
  %4152 = vmatmul.mubr.bf16.gmra.mrb[0].mxu0 %v3987
  %v4153 = vpop.f32.mrb[0].mxu0
  %v4154 = vadd.f32 %v4070, %v4153
  %v4155 = vpop.f32.mrb[0].mxu0
  %v4156 = vpop.f32.mrb[0].mxu0
  %v4157 = vadd.f32 %v4070, %v4156
  %v4158 = vpop.f32.mrb[0].mxu0
  %4159 = vmatprep.mubr.bf16.mxu0 0
  %4160 = vmatmul.mubr.bf16.gmra.mrb[0].mxu0 %v3988
  %v4161 = vpop.f32.mrb[0].mxu0
  %v4162 = vadd.f32 %v4070, %v4161
  %v4163 = vpop.f32.mrb[0].mxu0
  %v4164 = vpop.f32.mrb[0].mxu0
  %v4165 = vadd.f32 %v4070, %v4164
  %v4166 = vpop.f32.mrb[0].mxu0
  %4167 = vmatprep.mubr.bf16.mxu0 0
  %4168 = vmatmul.mubr.bf16.gmra.mrb[0].mxu0 %v3989
  %v4169 = vpop.f32.mrb[0].mxu0
  %v4170 = vadd.f32 %v4070, %v4169
  %v4171 = vpop.f32.mrb[0].mxu0
  %v4172 = vpop.f32.mrb[0].mxu0
  %v4173 = vadd.f32 %v4070, %v4172
  %v4174 = vpop.f32.mrb[0].mxu0
  %4175 = vmatprep.mubr.bf16.mxu0 0
  %4176 = vmatmul.mubr.bf16.gmra.mrb[0].mxu0 %v3990
  %v4177 = vpop.f32.mrb[0].mxu0
  %v4178 = vadd.f32 %v4070, %v4177
  %v4179 = vpop.f32.mrb[0].mxu0
  %v4180 = vpop.f32.mrb[0].mxu0
  %v4181 = vadd.f32 %v4070, %v4180
  %v4182 = vpop.f32.mrb[0].mxu0
  %4183 = vmatprep.mubr.bf16.mxu0 0
  %4184 = vmatmul.mubr.bf16.gmra.mrb[0].mxu0 %v3991
  %v4185 = vpop.f32.mrb[0].mxu0
  %v4186 = vadd.f32 %v4070, %v4185
  %v4187 = vpop.f32.mrb[0].mxu0
  %v4188 = vpop.f32.mrb[0].mxu0
  %v4189 = vadd.f32 %v4070, %v4188
  %v4190 = vpop.f32.mrb[0].mxu0
  %4191 = vmatprep.mubr.bf16.mxu0 0
  %4192 = vmatmul.mubr.bf16.gmra.mrb[0].mxu0 %v3992
  %v4193 = vpop.f32.mrb[0].mxu0
  %v4194 = vadd.f32 %v4070, %v4193
  %v4195 = vpop.f32.mrb[0].mxu0
  %v4196 = vpop.f32.mrb[0].mxu0
  %v4197 = vadd.f32 %v4070, %v4196
  %v4198 = vpop.f32.mrb[0].mxu0
  %4199 = vmatprep.mubr.bf16.mxu0 0
  %4200 = vmatmul.mubr.bf16.gmra.mrb[0].mxu0 %v3993
  %v4201 = vpop.f32.mrb[0].mxu0
  %v4202 = vadd.f32 %v4070, %v4201
  %v4203 = vpop.f32.mrb[0].mxu0
  %v4204 = vpop.f32.mrb[0].mxu0
  %v4205 = vadd.f32 %v4070, %v4204
  %v4206 = vpop.f32.mrb[0].mxu0
  %4207 = vmatprep.mubr.bf16.mxu0 0
  %4208 = vmatmul.mubr.bf16.gmra.mrb[0].mxu0 %v3994
  %v4209 = vpop.f32.mrb[0].mxu0
  %v4210 = vadd.f32 %v4070, %v4209
  %v4211 = vpop.f32.mrb[0].mxu0
  %v4212 = vpop.f32.mrb[0].mxu0
  %v4213 = vadd.f32 %v4070, %v4212
  %v4214 = vpop.f32.mrb[0].mxu0
  %4215 = vmatprep.mubr.bf16.mxu0 0
  %4216 = vmatmul.mubr.bf16.gmra.mrb[0].mxu0 %v3995
  %v4217 = vpop.f32.mrb[0].mxu0
  %v4218 = vadd.f32 %v4070, %v4217
  %v4219 = vpop.f32.mrb[0].mxu0
  %v4220 = vpop.f32.mrb[0].mxu0
  %v4221 = vadd.f32 %v4070, %v4220
  %v4222 = vpop.f32.mrb[0].mxu0
  %4223 = vmatprep.mubr.bf16.mxu0 0
  %4224 = vmatmul.mubr.bf16.gmra.mrb[0].mxu0 %v3996
  %v4225 = vpop.f32.mrb[0].mxu0
  %v4226 = vadd.f32 %v4070, %v4225
  %v4227 = vpop.f32.mrb[0].mxu0
  %v4228 = vpop.f32.mrb[0].mxu0
  %v4229 = vadd.f32 %v4070, %v4228
  %v4230 = vpop.f32.mrb[0].mxu0
  %4231 = vmatprep.mubr.bf16.mxu0 0
  %4232 = vmatmul.mubr.bf16.gmra.mrb[0].mxu0 %v3997
  %v4233 = vpop.f32.mrb[0].mxu0
  %v4234 = vadd.f32 %v4070, %v4233
  %v4235 = vpop.f32.mrb[0].mxu0
  %v4236 = vpop.f32.mrb[0].mxu0
  %v4237 = vadd.f32 %v4070, %v4236
  %v4238 = vpop.f32.mrb[0].mxu0
  %4239 = vmatprep.mubr.bf16.mxu0 0
  %4240 = vmatmul.mubr.bf16.gmra.mrb[0].mxu0 %v3998
  %v4241 = vpop.f32.mrb[0].mxu0
  %v4242 = vadd.f32 %v4070, %v4241
  %v4243 = vpop.f32.mrb[0].mxu0
  %v4244 = vpop.f32.mrb[0].mxu0
  %v4245 = vadd.f32 %v4070, %v4244
  %v4246 = vpop.f32.mrb[0].mxu0
  %4247 = vmatprep.mubr.bf16.mxu0 0
  %4248 = vmatmul.mubr.bf16.gmra.mrb[0].mxu0 %v3999
  %v4249 = vpop.f32.mrb[0].mxu0
  %v4250 = vadd.f32 %v4070, %v4249
  %v4251 = vpop.f32.mrb[0].mxu0
  %v4252 = vpop.f32.mrb[0].mxu0
  %v4253 = vadd.f32 %v4070, %v4252
  %v4254 = vpop.f32.mrb[0].mxu0
  %4255 = vmatprep.mubr.bf16.mxu0 0
  %4256 = vmatmul.mubr.bf16.gmra.mrb[0].mxu0 %v4000
  %v4257 = vpop.f32.mrb[0].mxu0
  %v4258 = vadd.f32 %v4070, %v4257
  %v4259 = vpop.f32.mrb[0].mxu0
  %v4260 = vpop.f32.mrb[0].mxu0
  %v4261 = vadd.f32 %v4070, %v4260
  %v4262 = vpop.f32.mrb[0].mxu0
  %4263 = vmatprep.mubr.bf16.mxu0 0
  %4264 = vmatmul.mubr.bf16.gmra.mrb[0].mxu0 %v4001
  %v4265 = vpop.f32.mrb[0].mxu0
  %v4266 = vadd.f32 %v4070, %v4265
  %v4267 = vpop.f32.mrb[0].mxu0
  %v4268 = vpop.f32.mrb[0].mxu0
  %v4269 = vadd.f32 %v4070, %v4268
  %v4270 = vpop.f32.mrb[0].mxu0
  %4271 = vmatprep.mubr.bf16.mxu0 0
  %4272 = vmatmul.mubr.bf16.gmra.mrb[0].mxu0 %v4002
  %v4273 = vpop.f32.mrb[0].mxu0
  %v4274 = vadd.f32 %v4070, %v4273
  %v4275 = vpop.f32.mrb[0].mxu0
  %v4276 = vpop.f32.mrb[0].mxu0
  %v4277 = vadd.f32 %v4070, %v4276
  %v4278 = vpop.f32.mrb[0].mxu0
  %4279 = vmatprep.mubr.bf16.mxu0 0
  %4280 = vmatmul.mubr.bf16.gmra.mrb[0].mxu0 %v4003
  %v4281 = vpop.f32.mrb[0].mxu0
  %v4282 = vadd.f32 %v4070, %v4281
  %v4283 = vpop.f32.mrb[0].mxu0
  %v4284 = vpop.f32.mrb[0].mxu0
  %v4285 = vadd.f32 %v4070, %v4284
  %v4286 = vpop.f32.mrb[0].mxu0
  %4287 = vmatprep.mubr.bf16.mxu0 0
  %4288 = vmatmul.mubr.bf16.gmra.mrb[0].mxu0 %v4004
  %v4289 = vpop.f32.mrb[0].mxu0
  %v4290 = vadd.f32 %v4070, %v4289
  %v4291 = vpop.f32.mrb[0].mxu0
  %v4292 = vpop.f32.mrb[0].mxu0
  %v4293 = vadd.f32 %v4070, %v4292
  %v4294 = vpop.f32.mrb[0].mxu0
  %4295 = vmatprep.mubr.bf16.mxu0 0
  %4296 = vmatmul.mubr.bf16.gmra.mrb[0].mxu0 %v4005
  %v4297 = vpop.f32.mrb[0].mxu0
  %v4298 = vadd.f32 %v4070, %v4297
  %v4299 = vpop.f32.mrb[0].mxu0
  %v4300 = vpop.f32.mrb[0].mxu0
  %v4301 = vadd.f32 %v4070, %v4300
  %v4302 = vpop.f32.mrb[0].mxu0
  %4303 = vmatprep.mubr.bf16.mxu0 0
  %4304 = vmatmul.mubr.bf16.gmra.mrb[0].mxu0 %v4006
  %v4305 = vpop.f32.mrb[0].mxu0
  %v4306 = vadd.f32 %v4070, %v4305
  %v4307 = vpop.f32.mrb[0].mxu0
  %v4308 = vpop.f32.mrb[0].mxu0
  %v4309 = vadd.f32 %v4070, %v4308
  %v4310 = vpop.f32.mrb[0].mxu0
  %4311 = vmatprep.mubr.bf16.mxu0 0
  %4312 = vmatmul.mubr.bf16.gmra.mrb[0].mxu0 %v4007
  %v4313 = vpop.f32.mrb[0].mxu0
  %v4314 = vadd.f32 %v4070, %v4313
  %v4315 = vpop.f32.mrb[0].mxu0
  %v4316 = vpop.f32.mrb[0].mxu0
  %v4317 = vadd.f32 %v4070, %v4316
  %v4318 = vpop.f32.mrb[0].mxu0
  %4319 = vmatprep.mubr.bf16.mxu0 0
  %4320 = vmatmul.mubr.bf16.gmra.mrb[0].mxu0 %v4008
  %v4321 = vpop.f32.mrb[0].mxu0
  %v4322 = vadd.f32 %v4070, %v4321
  %v4323 = vpop.f32.mrb[0].mxu0
  %v4324 = vpop.f32.mrb[0].mxu0
  %v4325 = vadd.f32 %v4070, %v4324
  %v4326 = vpop.f32.mrb[0].mxu0
  %4327 = vmatprep.mubr.bf16.mxu0 0
  %4328 = vmatmul.mubr.bf16.gmra.mrb[0].mxu0 %v4009
  %v4329 = vpop.f32.mrb[0].mxu0
  %v4330 = vadd.f32 %v4070, %v4329
  %v4331 = vpop.f32.mrb[0].mxu0
  %v4332 = vpop.f32.mrb[0].mxu0
  %v4333 = vadd.f32 %v4070, %v4332
  %v4334 = vpop.f32.mrb[0].mxu0
  %4335 = vmatprep.mubr.bf16.mxu0 0
  %4336 = vmatmul.mubr.bf16.gmra.mrb[0].mxu0 %v4010
  %v4337 = vpop.f32.mrb[0].mxu0
  %v4338 = vadd.f32 %v4070, %v4337
  %v4339 = vpop.f32.mrb[0].mxu0
  %v4340 = vpop.f32.mrb[0].mxu0
  %v4341 = vadd.f32 %v4070, %v4340
  %v4342 = vpop.f32.mrb[0].mxu0
  %4343 = vmatprep.mubr.bf16.mxu0 0
  %4344 = vmatmul.mubr.bf16.gmra.mrb[0].mxu0 %v4011
  %v4345 = vpop.f32.mrb[0].mxu0
  %v4346 = vadd.f32 %v4070, %v4345
  %v4347 = vpop.f32.mrb[0].mxu0
  %v4348 = vpop.f32.mrb[0].mxu0
  %v4349 = vadd.f32 %v4070, %v4348
  %v4350 = vpop.f32.mrb[0].mxu0
  %4351 = vmatprep.mubr.bf16.mxu0 0
  %4352 = vmatmul.mubr.bf16.gmra.mrb[0].mxu0 %v4012
  %v4353 = vpop.f32.mrb[0].mxu0
  %v4354 = vadd.f32 %v4070, %v4353
  %v4355 = vpop.f32.mrb[0].mxu0
  %v4356 = vpop.f32.mrb[0].mxu0
  %v4357 = vadd.f32 %v4070, %v4356
  %v4358 = vpop.f32.mrb[0].mxu0
  %4359 = vmatprep.mubr.bf16.mxu0 0
  %4360 = vmatmul.mubr.bf16.gmra.mrb[0].mxu0 %v4013
  %v4361 = vpop.f32.mrb[0].mxu0
  %v4362 = vadd.f32 %v4070, %v4361
  %v4363 = vpop.f32.mrb[0].mxu0
  %v4364 = vpop.f32.mrb[0].mxu0
  %v4365 = vadd.f32 %v4070, %v4364
  %v4366 = vpop.f32.mrb[0].mxu0
  %4367 = vmatprep.mubr.bf16.mxu0 0
  %4368 = vmatmul.mubr.bf16.gmra.mrb[0].mxu0 %v4014
  %v4369 = vpop.f32.mrb[0].mxu0
  %v4370 = vadd.f32 %v4070, %v4369
  %v4371 = vpop.f32.mrb[0].mxu0
  %v4372 = vpop.f32.mrb[0].mxu0
  %v4373 = vadd.f32 %v4070, %v4372
  %v4374 = vpop.f32.mrb[0].mxu0
  %4375 = vmatprep.mubr.bf16.mxu0 0
  %4376 = vmatmul.mubr.bf16.gmra.mrb[0].mxu0 %v4015
  %v4377 = vpop.f32.mrb[0].mxu0
  %v4378 = vadd.f32 %v4070, %v4377
  %v4379 = vpop.f32.mrb[0].mxu0
  %v4380 = vpop.f32.mrb[0].mxu0
  %v4381 = vadd.f32 %v4070, %v4380
  %v4382 = vpop.f32.mrb[0].mxu0
  %4383 = vmatprep.mubr.bf16.mxu0 0
  %4384 = vmatmul.mubr.bf16.gmra.mrb[0].mxu0 %v4016
  %v4385 = vpop.f32.mrb[0].mxu0
  %v4386 = vadd.f32 %v4070, %v4385
  %v4387 = vpop.f32.mrb[0].mxu0
  %v4388 = vpop.f32.mrb[0].mxu0
  %v4389 = vadd.f32 %v4070, %v4388
  %v4390 = vpop.f32.mrb[0].mxu0
  %4391 = vmatprep.mubr.bf16.mxu0 0
  %4392 = vmatmul.mubr.bf16.gmra.mrb[0].mxu0 %v4017
  %v4393 = vpop.f32.mrb[0].mxu0
  %v4394 = vadd.f32 %v4070, %v4393
  %v4395 = vpop.f32.mrb[0].mxu0
  %v4396 = vpop.f32.mrb[0].mxu0
  %v4397 = vadd.f32 %v4070, %v4396
  %v4398 = vpop.f32.mrb[0].mxu0
  %4399 = vmatprep.mubr.bf16.mxu0 0
  %4400 = vmatmul.mubr.bf16.gmra.mrb[0].mxu0 %v4018
  %v4401 = vpop.f32.mrb[0].mxu0
  %v4402 = vadd.f32 %v4070, %v4401
  %v4403 = vpop.f32.mrb[0].mxu0
  %v4404 = vpop.f32.mrb[0].mxu0
  %v4405 = vadd.f32 %v4070, %v4404
  %v4406 = vpop.f32.mrb[0].mxu0
  %4407 = vmatprep.mubr.bf16.mxu0 0
  %4408 = vmatmul.mubr.bf16.gmra.mrb[0].mxu0 %v4019
  %v4409 = vpop.f32.mrb[0].mxu0
  %v4410 = vadd.f32 %v4070, %v4409
  %v4411 = vpop.f32.mrb[0].mxu0
  %v4412 = vpop.f32.mrb[0].mxu0
  %v4413 = vadd.f32 %v4070, %v4412
  %v4414 = vpop.f32.mrb[0].mxu0
  %4415 = vmatprep.mubr.bf16.mxu0 0
  %4416 = vmatmul.mubr.bf16.gmra.mrb[0].mxu0 %v4020
  %v4417 = vpop.f32.mrb[0].mxu0
  %v4418 = vadd.f32 %v4070, %v4417
  %v4419 = vpop.f32.mrb[0].mxu0
  %v4420 = vpop.f32.mrb[0].mxu0
  %v4421 = vadd.f32 %v4070, %v4420
  %v4422 = vpop.f32.mrb[0].mxu0
  %4423 = vmatprep.mubr.bf16.mxu0 0
  %4424 = vmatmul.mubr.bf16.gmra.mrb[0].mxu0 %v4021
  %v4425 = vpop.f32.mrb[0].mxu0
  %v4426 = vadd.f32 %v4070, %v4425
  %v4427 = vpop.f32.mrb[0].mxu0
  %v4428 = vpop.f32.mrb[0].mxu0
  %v4429 = vadd.f32 %v4070, %v4428
  %v4430 = vpop.f32.mrb[0].mxu0
  %4431 = vmatprep.mubr.bf16.mxu0 0
  %4432 = vmatmul.mubr.bf16.gmra.mrb[0].mxu0 %v4022
  %v4433 = vpop.f32.mrb[0].mxu0
  %v4434 = vadd.f32 %v4070, %v4433
  %v4435 = vpop.f32.mrb[0].mxu0
  %v4436 = vpop.f32.mrb[0].mxu0
  %v4437 = vadd.f32 %v4070, %v4436
  %v4438 = vpop.f32.mrb[0].mxu0
  %4439 = vmatprep.mubr.bf16.mxu0 0
  %4440 = vmatmul.mubr.bf16.gmra.mrb[0].mxu0 %v4023
  %v4441 = vpop.f32.mrb[0].mxu0
  %v4442 = vadd.f32 %v4070, %v4441
  %v4443 = vpop.f32.mrb[0].mxu0
  %v4444 = vpop.f32.mrb[0].mxu0
  %v4445 = vadd.f32 %v4070, %v4444
  %v4446 = vpop.f32.mrb[0].mxu0
  %4447 = vmatprep.mubr.bf16.mxu0 0
  %4448 = vmatmul.mubr.bf16.gmra.mrb[0].mxu0 %v4024
  %v4449 = vpop.f32.mrb[0].mxu0
  %v4450 = vadd.f32 %v4070, %v4449
  %v4451 = vpop.f32.mrb[0].mxu0
  %v4452 = vpop.f32.mrb[0].mxu0
  %v4453 = vadd.f32 %v4070, %v4452
  %v4454 = vpop.f32.mrb[0].mxu0
  %4455 = vmatprep.mubr.bf16.mxu0 0
  %4456 = vmatmul.mubr.bf16.gmra.mrb[0].mxu0 %v4025
  %v4457 = vpop.f32.mrb[0].mxu0
  %v4458 = vadd.f32 %v4070, %v4457
  %v4459 = vpop.f32.mrb[0].mxu0
  %v4460 = vpop.f32.mrb[0].mxu0
  %v4461 = vadd.f32 %v4070, %v4460
  %v4462 = vpop.f32.mrb[0].mxu0
  %4463 = vmatprep.mubr.bf16.mxu0 0
  %4464 = vmatmul.mubr.bf16.gmra.mrb[0].mxu0 %v4026
  %v4465 = vpop.f32.mrb[0].mxu0
  %v4466 = vadd.f32 %v4070, %v4465
  %v4467 = vpop.f32.mrb[0].mxu0
  %v4468 = vpop.f32.mrb[0].mxu0
  %v4469 = vadd.f32 %v4070, %v4468
  %v4470 = vpop.f32.mrb[0].mxu0
  %4471 = vmatprep.mubr.bf16.mxu0 0
  %4472 = vmatmul.mubr.bf16.gmra.mrb[0].mxu0 %v4027
  %v4473 = vpop.f32.mrb[0].mxu0
  %v4474 = vadd.f32 %v4070, %v4473
  %v4475 = vpop.f32.mrb[0].mxu0
  %v4476 = vpop.f32.mrb[0].mxu0
  %v4477 = vadd.f32 %v4070, %v4476
  %v4478 = vpop.f32.mrb[0].mxu0
  %4479 = vmatprep.mubr.bf16.mxu0 0
  %4480 = vmatmul.mubr.bf16.gmra.mrb[0].mxu0 %v4028
  %v4481 = vpop.f32.mrb[0].mxu0
  %v4482 = vadd.f32 %v4070, %v4481
  %v4483 = vpop.f32.mrb[0].mxu0
  %v4484 = vpop.f32.mrb[0].mxu0
  %v4485 = vadd.f32 %v4070, %v4484
  %v4486 = vpop.f32.mrb[0].mxu0
  %4487 = vmatprep.mubr.bf16.mxu0 0
  %4488 = vmatmul.mubr.bf16.gmra.mrb[0].mxu0 %v4029
  %v4489 = vpop.f32.mrb[0].mxu0
  %v4490 = vadd.f32 %v4070, %v4489
  %v4491 = vpop.f32.mrb[0].mxu0
  %v4492 = vpop.f32.mrb[0].mxu0
  %v4493 = vadd.f32 %v4070, %v4492
  %v4494 = vpop.f32.mrb[0].mxu0
  %4495 = vmatprep.mubr.bf16.mxu0 0
  %4496 = vmatmul.mubr.bf16.gmra.mrb[0].mxu0 %v4030
  %v4497 = vpop.f32.mrb[0].mxu0
  %v4498 = vadd.f32 %v4070, %v4497
  %v4499 = vpop.f32.mrb[0].mxu0
  %v4500 = vpop.f32.mrb[0].mxu0
  %v4501 = vadd.f32 %v4070, %v4500
  %v4502 = vpop.f32.mrb[0].mxu0
  %4503 = vmatprep.mubr.bf16.mxu0 0
  %4504 = vmatmul.mubr.bf16.gmra.mrb[0].mxu0 %v4031
  %v4505 = vpop.f32.mrb[0].mxu0
  %v4506 = vadd.f32 %v4070, %v4505
  %v4507 = vpop.f32.mrb[0].mxu0
  %v4508 = vpop.f32.mrb[0].mxu0
  %v4509 = vadd.f32 %v4070, %v4508
  %v4510 = vpop.f32.mrb[0].mxu0
  %4511 = vmatprep.mubr.bf16.mxu0 0
  %4512 = vmatmul.mubr.bf16.gmra.mrb[0].mxu0 %v4032
  %v4513 = vpop.f32.mrb[0].mxu0
  %v4514 = vadd.f32 %v4070, %v4513
  %v4515 = vpop.f32.mrb[0].mxu0
  %v4516 = vpop.f32.mrb[0].mxu0
  %v4517 = vadd.f32 %v4070, %v4516
  %v4518 = vpop.f32.mrb[0].mxu0
  %4519 = vmatprep.mubr.bf16.mxu0 0
  %4520 = vmatmul.mubr.bf16.gmra.mrb[0].mxu0 %v4033
  %v4521 = vpop.f32.mrb[0].mxu0
  %v4522 = vadd.f32 %v4070, %v4521
  %v4523 = vpop.f32.mrb[0].mxu0
  %v4524 = vpop.f32.mrb[0].mxu0
  %v4525 = vadd.f32 %v4070, %v4524
  %v4526 = vpop.f32.mrb[0].mxu0
  %4527 = vmatprep.mubr.bf16.mxu0 0
  %4528 = vmatmul.mubr.bf16.gmra.mrb[0].mxu0 %v4034
  %v4529 = vpop.f32.mrb[0].mxu0
  %v4530 = vadd.f32 %v4070, %v4529
  %v4531 = vpop.f32.mrb[0].mxu0
  %v4532 = vpop.f32.mrb[0].mxu0
  %v4533 = vadd.f32 %v4070, %v4532
  %v4534 = vpop.f32.mrb[0].mxu0
  %4535 = vmatprep.mubr.bf16.mxu0 0
  %4536 = vmatmul.mubr.bf16.gmra.mrb[0].mxu0 %v4035
  %v4537 = vpop.f32.mrb[0].mxu0
  %v4538 = vadd.f32 %v4070, %v4537
  %v4539 = vpop.f32.mrb[0].mxu0
  %v4540 = vpop.f32.mrb[0].mxu0
  %v4541 = vadd.f32 %v4070, %v4540
  %v4542 = vpop.f32.mrb[0].mxu0
  %4543 = vmatprep.mubr.bf16.mxu0 0
  %4544 = vmatmul.mubr.bf16.gmra.mrb[0].mxu0 %v4036
  %v4545 = vpop.f32.mrb[0].mxu0
  %v4546 = vadd.f32 %v4070, %v4545
  %v4547 = vpop.f32.mrb[0].mxu0
  %v4548 = vpop.f32.mrb[0].mxu0
  %v4549 = vadd.f32 %v4070, %v4548
  %v4550 = vpop.f32.mrb[0].mxu0
  %4551 = vmatprep.mubr.bf16.mxu0 0
  %4552 = vmatmul.mubr.bf16.gmra.mrb[0].mxu0 %v4037
  %v4553 = vpop.f32.mrb[0].mxu0
  %v4554 = vadd.f32 %v4070, %v4553
  %v4555 = vpop.f32.mrb[0].mxu0
  %v4556 = vpop.f32.mrb[0].mxu0
  %v4557 = vadd.f32 %v4070, %v4556
  %v4558 = vpop.f32.mrb[0].mxu0
  %4559 = vmatprep.mubr.bf16.mxu0 0
  %4560 = vmatmul.mubr.bf16.gmra.mrb[0].mxu0 %v4038
  %v4561 = vpop.f32.mrb[0].mxu0
  %v4562 = vadd.f32 %v4070, %v4561
  %v4563 = vpop.f32.mrb[0].mxu0
  %v4564 = vpop.f32.mrb[0].mxu0
  %v4565 = vadd.f32 %v4070, %v4564
  %v4566 = vpop.f32.mrb[0].mxu0
  %4567 = vmatprep.mubr.bf16.mxu0 0
  %4568 = vmatmul.mubr.bf16.gmra.mrb[0].mxu0 %v4039
  %v4569 = vpop.f32.mrb[0].mxu0
  %v4570 = vadd.f32 %v4070, %v4569
  %v4571 = vpop.f32.mrb[0].mxu0
  %v4572 = vpop.f32.mrb[0].mxu0
  %v4573 = vadd.f32 %v4070, %v4572
  %v4574 = vpop.f32.mrb[0].mxu0
  %4575 = vmatprep.mubr.bf16.mxu0 0
  %4576 = vmatmul.mubr.bf16.gmra.mrb[0].mxu0 %v4040
  %v4577 = vpop.f32.mrb[0].mxu0
  %v4578 = vadd.f32 %v4070, %v4577
  %v4579 = vpop.f32.mrb[0].mxu0
  %v4580 = vpop.f32.mrb[0].mxu0
  %v4581 = vadd.f32 %v4070, %v4580
  %v4582 = vpop.f32.mrb[0].mxu0
  %4583 = vmatprep.mubr.bf16.mxu0 0
  %4584 = vmatmul.mubr.bf16.gmra.mrb[0].mxu0 %v4041
  %v4585 = vpop.f32.mrb[0].mxu0
  %v4586 = vadd.f32 %v4070, %v4585
  %v4587 = vpop.f32.mrb[0].mxu0
  %v4588 = vpop.f32.mrb[0].mxu0
  %v4589 = vadd.f32 %v4070, %v4588
  %v4590 = vpop.f32.mrb[0].mxu0
  %4591 = vmatprep.mubr.bf16.mxu0 0
  %4592 = vmatmul.mubr.bf16.gmra.mrb[0].mxu0 %v4042
  %v4593 = vpop.f32.mrb[0].mxu0
  %v4594 = vadd.f32 %v4070, %v4593
  %v4595 = vpop.f32.mrb[0].mxu0
  %v4596 = vpop.f32.mrb[0].mxu0
  %v4597 = vadd.f32 %v4070, %v4596
  %v4598 = vpop.f32.mrb[0].mxu0
  %4599 = vmatprep.mubr.bf16.mxu0 0
  %4600 = vmatmul.mubr.bf16.gmra.mrb[0].mxu0 %v4043
  %v4601 = vpop.f32.mrb[0].mxu0
  %v4602 = vadd.f32 %v4070, %v4601
  %v4603 = vpop.f32.mrb[0].mxu0
  %v4604 = vpop.f32.mrb[0].mxu0
  %v4605 = vadd.f32 %v4070, %v4604
  %v4606 = vpop.f32.mrb[0].mxu0
  %4607 = vmatprep.mubr.bf16.mxu0 0
  %4608 = vmatmul.mubr.bf16.gmra.mrb[0].mxu0 %v4044
  %v4609 = vpop.f32.mrb[0].mxu0
  %v4610 = vadd.f32 %v4070, %v4609
  %v4611 = vpop.f32.mrb[0].mxu0
  %v4612 = vpop.f32.mrb[0].mxu0
  %v4613 = vadd.f32 %v4070, %v4612
  %v4614 = vpop.f32.mrb[0].mxu0
  %4615 = vmatprep.mubr.bf16.mxu0 0
  %4616 = vmatmul.mubr.bf16.gmra.mrb[0].mxu0 %v4045
  %v4617 = vpop.f32.mrb[0].mxu0
  %v4618 = vadd.f32 %v4070, %v4617
  %v4619 = vpop.f32.mrb[0].mxu0
  %v4620 = vpop.f32.mrb[0].mxu0
  %v4621 = vadd.f32 %v4070, %v4620
  %v4622 = vpop.f32.mrb[0].mxu0
  %4623 = vmatprep.mubr.bf16.mxu0 0
  %4624 = vmatmul.mubr.bf16.gmra.mrb[0].mxu0 %v4046
  %v4625 = vpop.f32.mrb[0].mxu0
  %v4626 = vadd.f32 %v4070, %v4625
  %v4627 = vpop.f32.mrb[0].mxu0
  %v4628 = vpop.f32.mrb[0].mxu0
  %v4629 = vadd.f32 %v4070, %v4628
  %v4630 = vpop.f32.mrb[0].mxu0
  %4631 = vmatprep.mubr.bf16.mxu0 0
  %4632 = vmatmul.mubr.bf16.gmra.mrb[0].mxu0 %v4047
  %v4633 = vpop.f32.mrb[0].mxu0
  %v4634 = vadd.f32 %v4070, %v4633
  %v4635 = vpop.f32.mrb[0].mxu0
  %v4636 = vpop.f32.mrb[0].mxu0
  %v4637 = vadd.f32 %v4070, %v4636
  %v4638 = vpop.f32.mrb[0].mxu0
  %4639 = vmatprep.mubr.bf16.mxu0 0
  %4640 = vmatmul.mubr.bf16.gmra.mrb[0].mxu0 %v4048
  %v4641 = vpop.f32.mrb[0].mxu0
  %v4642 = vadd.f32 %v4070, %v4641
  %v4643 = vpop.f32.mrb[0].mxu0
  %v4644 = vpop.f32.mrb[0].mxu0
  %v4645 = vadd.f32 %v4070, %v4644
  %v4646 = vpop.f32.mrb[0].mxu0
  %4647 = vmatprep.mubr.bf16.mxu0 0
  %4648 = vmatmul.mubr.bf16.gmra.mrb[0].mxu0 %v4049
  %v4649 = vpop.f32.mrb[0].mxu0
  %v4650 = vadd.f32 %v4070, %v4649
  %v4651 = vpop.f32.mrb[0].mxu0
  %v4652 = vpop.f32.mrb[0].mxu0
  %v4653 = vadd.f32 %v4070, %v4652
  %v4654 = vpop.f32.mrb[0].mxu0
  %4655 = vmatprep.mubr.bf16.mxu0 0
  %4656 = vmatmul.mubr.bf16.gmra.mrb[0].mxu0 %v4050
  %v4657 = vpop.f32.mrb[0].mxu0
  %v4658 = vadd.f32 %v4070, %v4657
  %v4659 = vpop.f32.mrb[0].mxu0
  %v4660 = vpop.f32.mrb[0].mxu0
  %v4661 = vadd.f32 %v4070, %v4660
  %v4662 = vpop.f32.mrb[0].mxu0
  %4663 = vdwg.mxu0
  %v4664 = vmax.f32 %v4154, 0.0
  %v4665 = vmax.f32 %v4157, 0.0
  %v4666 = vmax.f32 %v4162, 0.0
  %v4667 = vmax.f32 %v4165, 0.0
  %v4668 = vmax.f32 %v4170, 0.0
  %v4669 = vmax.f32 %v4173, 0.0
  %v4670 = vmax.f32 %v4178, 0.0
  %v4671 = vmax.f32 %v4181, 0.0
  %v4672 = vmax.f32 %v4186, 0.0
  %v4673 = vmax.f32 %v4189, 0.0
  %v4674 = vmax.f32 %v4194, 0.0
  %v4675 = vmax.f32 %v4197, 0.0
  %v4676 = vmax.f32 %v4202, 0.0
  %v4677 = vmax.f32 %v4205, 0.0
  %v4678 = vmax.f32 %v4210, 0.0
  %v4679 = vmax.f32 %v4213, 0.0
  %v4680 = vmax.f32 %v4218, 0.0
  %v4681 = vmax.f32 %v4221, 0.0
  %v4682 = vmax.f32 %v4226, 0.0
  %v4683 = vmax.f32 %v4229, 0.0
  %v4684 = vmax.f32 %v4234, 0.0
  %v4685 = vmax.f32 %v4237, 0.0
  %v4686 = vmax.f32 %v4242, 0.0
  %v4687 = vmax.f32 %v4245, 0.0
  %v4688 = vmax.f32 %v4250, 0.0
  %v4689 = vmax.f32 %v4253, 0.0
  %v4690 = vmax.f32 %v4258, 0.0
  %v4691 = vmax.f32 %v4261, 0.0
  %v4692 = vmax.f32 %v4266, 0.0
  %v4693 = vmax.f32 %v4269, 0.0
  %v4694 = vmax.f32 %v4274, 0.0
  %v4695 = vmax.f32 %v4277, 0.0
  %v4696 = vmax.f32 %v4282, 0.0
  %v4697 = vmax.f32 %v4285, 0.0
  %v4698 = vmax.f32 %v4290, 0.0
  %v4699 = vmax.f32 %v4293, 0.0
  %v4700 = vmax.f32 %v4298, 0.0
  %v4701 = vmax.f32 %v4301, 0.0
  %v4702 = vmax.f32 %v4306, 0.0
  %v4703 = vmax.f32 %v4309, 0.0
  %v4704 = vmax.f32 %v4314, 0.0
  %v4705 = vmax.f32 %v4317, 0.0
  %v4706 = vmax.f32 %v4322, 0.0
  %v4707 = vmax.f32 %v4325, 0.0
  %v4708 = vmax.f32 %v4330, 0.0
  %v4709 = vmax.f32 %v4333, 0.0
  %v4710 = vmax.f32 %v4338, 0.0
  %v4711 = vmax.f32 %v4341, 0.0
  %v4712 = vmax.f32 %v4346, 0.0
  %v4713 = vmax.f32 %v4349, 0.0
  %v4714 = vmax.f32 %v4354, 0.0
  %v4715 = vmax.f32 %v4357, 0.0
  %v4716 = vmax.f32 %v4362, 0.0
  %v4717 = vmax.f32 %v4365, 0.0
  %v4718 = vmax.f32 %v4370, 0.0
  %v4719 = vmax.f32 %v4373, 0.0
  %v4720 = vmax.f32 %v4378, 0.0
  %v4721 = vmax.f32 %v4381, 0.0
  %v4722 = vmax.f32 %v4386, 0.0
  %v4723 = vmax.f32 %v4389, 0.0
  %v4724 = vmax.f32 %v4394, 0.0
  %v4725 = vmax.f32 %v4397, 0.0
  %v4726 = vmax.f32 %v4402, 0.0
  %v4727 = vmax.f32 %v4405, 0.0
  %v4728 = vmax.f32 %v4410, 0.0
  %v4729 = vmax.f32 %v4413, 0.0
  %v4730 = vmax.f32 %v4418, 0.0
  %v4731 = vmax.f32 %v4421, 0.0
  %v4732 = vmax.f32 %v4426, 0.0
  %v4733 = vmax.f32 %v4429, 0.0
  %v4734 = vmax.f32 %v4434, 0.0
  %v4735 = vmax.f32 %v4437, 0.0
  %v4736 = vmax.f32 %v4442, 0.0
  %v4737 = vmax.f32 %v4445, 0.0
  %v4738 = vmax.f32 %v4450, 0.0
  %v4739 = vmax.f32 %v4453, 0.0
  %v4740 = vmax.f32 %v4458, 0.0
  %v4741 = vmax.f32 %v4461, 0.0
  %v4742 = vmax.f32 %v4466, 0.0
  %v4743 = vmax.f32 %v4469, 0.0
  %v4744 = vmax.f32 %v4474, 0.0
  %v4745 = vmax.f32 %v4477, 0.0
  %v4746 = vmax.f32 %v4482, 0.0
  %v4747 = vmax.f32 %v4485, 0.0
  %v4748 = vmax.f32 %v4490, 0.0
  %v4749 = vmax.f32 %v4493, 0.0
  %v4750 = vmax.f32 %v4498, 0.0
  %v4751 = vmax.f32 %v4501, 0.0
  %v4752 = vmax.f32 %v4506, 0.0
  %v4753 = vmax.f32 %v4509, 0.0
  %v4754 = vmax.f32 %v4514, 0.0
  %v4755 = vmax.f32 %v4517, 0.0
  %v4756 = vmax.f32 %v4522, 0.0
  %v4757 = vmax.f32 %v4525, 0.0
  %v4758 = vmax.f32 %v4530, 0.0
  %v4759 = vmax.f32 %v4533, 0.0
  %v4760 = vmax.f32 %v4538, 0.0
  %v4761 = vmax.f32 %v4541, 0.0
  %v4762 = vmax.f32 %v4546, 0.0
  %v4763 = vmax.f32 %v4549, 0.0
  %v4764 = vmax.f32 %v4554, 0.0
  %v4765 = vmax.f32 %v4557, 0.0
  %v4766 = vmax.f32 %v4562, 0.0
  %v4767 = vmax.f32 %v4565, 0.0
  %v4768 = vmax.f32 %v4570, 0.0
  %v4769 = vmax.f32 %v4573, 0.0
  %v4770 = vmax.f32 %v4578, 0.0
  %v4771 = vmax.f32 %v4581, 0.0
  %v4772 = vmax.f32 %v4586, 0.0
  %v4773 = vmax.f32 %v4589, 0.0
  %v4774 = vmax.f32 %v4594, 0.0
  %v4775 = vmax.f32 %v4597, 0.0
  %v4776 = vmax.f32 %v4602, 0.0
  %v4777 = vmax.f32 %v4605, 0.0
  %v4778 = vmax.f32 %v4610, 0.0
  %v4779 = vmax.f32 %v4613, 0.0
  %v4780 = vmax.f32 %v4618, 0.0
  %v4781 = vmax.f32 %v4621, 0.0
  %v4782 = vmax.f32 %v4626, 0.0
  %v4783 = vmax.f32 %v4629, 0.0
  %v4784 = vmax.f32 %v4634, 0.0
  %v4785 = vmax.f32 %v4637, 0.0
  %v4786 = vmax.f32 %v4642, 0.0
  %v4787 = vmax.f32 %v4645, 0.0
  %v4788 = vmax.f32 %v4650, 0.0
  %v4789 = vmax.f32 %v4653, 0.0
  %v4790 = vmax.f32 %v4658, 0.0
  %v4791 = vmax.f32 %v4661, 0.0
  %v4792 = vlaneseq
  %v4793 = vshrl.u32 %v4792, 7
  %v4794 = vsub.s32 0, %v4793
  %v4795 = vrot.slane %v39, %v4794
  %v4796 = vmul.f32 %v4664, %v4795
  %v4797 = vmul.f32 %v4665, %v4795
  %v4798 = vmul.f32 %v4666, %v4795
  %v4799 = vmul.f32 %v4667, %v4795
  %v4800 = vmul.f32 %v4668, %v4795
  %v4801 = vmul.f32 %v4669, %v4795
  %v4802 = vmul.f32 %v4670, %v4795
  %v4803 = vmul.f32 %v4671, %v4795
  %v4804 = vmul.f32 %v4672, %v4795
  %v4805 = vmul.f32 %v4673, %v4795
  %v4806 = vmul.f32 %v4674, %v4795
  %v4807 = vmul.f32 %v4675, %v4795
  %v4808 = vmul.f32 %v4676, %v4795
  %v4809 = vmul.f32 %v4677, %v4795
  %v4810 = vmul.f32 %v4678, %v4795
  %v4811 = vmul.f32 %v4679, %v4795
  %v4812 = vmul.f32 %v4680, %v4795
  %v4813 = vmul.f32 %v4681, %v4795
  %v4814 = vmul.f32 %v4682, %v4795
  %v4815 = vmul.f32 %v4683, %v4795
  %v4816 = vmul.f32 %v4684, %v4795
  %v4817 = vmul.f32 %v4685, %v4795
  %v4818 = vmul.f32 %v4686, %v4795
  %v4819 = vmul.f32 %v4687, %v4795
  %v4820 = vmul.f32 %v4688, %v4795
  %v4821 = vmul.f32 %v4689, %v4795
  %v4822 = vmul.f32 %v4690, %v4795
  %v4823 = vmul.f32 %v4691, %v4795
  %v4824 = vmul.f32 %v4692, %v4795
  %v4825 = vmul.f32 %v4693, %v4795
  %v4826 = vmul.f32 %v4694, %v4795
  %v4827 = vmul.f32 %v4695, %v4795
  %v4828 = vmul.f32 %v4696, %v4795
  %v4829 = vmul.f32 %v4697, %v4795
  %v4830 = vmul.f32 %v4698, %v4795
  %v4831 = vmul.f32 %v4699, %v4795
  %v4832 = vmul.f32 %v4700, %v4795
  %v4833 = vmul.f32 %v4701, %v4795
  %v4834 = vmul.f32 %v4702, %v4795
  %v4835 = vmul.f32 %v4703, %v4795
  %v4836 = vmul.f32 %v4704, %v4795
  %v4837 = vmul.f32 %v4705, %v4795
  %v4838 = vmul.f32 %v4706, %v4795
  %v4839 = vmul.f32 %v4707, %v4795
  %v4840 = vmul.f32 %v4708, %v4795
  %v4841 = vmul.f32 %v4709, %v4795
  %v4842 = vmul.f32 %v4710, %v4795
  %v4843 = vmul.f32 %v4711, %v4795
  %v4844 = vmul.f32 %v4712, %v4795
  %v4845 = vmul.f32 %v4713, %v4795
  %v4846 = vmul.f32 %v4714, %v4795
  %v4847 = vmul.f32 %v4715, %v4795
  %v4848 = vmul.f32 %v4716, %v4795
  %v4849 = vmul.f32 %v4717, %v4795
  %v4850 = vmul.f32 %v4718, %v4795
  %v4851 = vmul.f32 %v4719, %v4795
  %v4852 = vmul.f32 %v4720, %v4795
  %v4853 = vmul.f32 %v4721, %v4795
  %v4854 = vmul.f32 %v4722, %v4795
  %v4855 = vmul.f32 %v4723, %v4795
  %v4856 = vmul.f32 %v4724, %v4795
  %v4857 = vmul.f32 %v4725, %v4795
  %v4858 = vmul.f32 %v4726, %v4795
  %v4859 = vmul.f32 %v4727, %v4795
  %v4860 = vmul.f32 %v4728, %v4795
  %v4861 = vmul.f32 %v4729, %v4795
  %v4862 = vmul.f32 %v4730, %v4795
  %v4863 = vmul.f32 %v4731, %v4795
  %v4864 = vmul.f32 %v4732, %v4795
  %v4865 = vmul.f32 %v4733, %v4795
  %v4866 = vmul.f32 %v4734, %v4795
  %v4867 = vmul.f32 %v4735, %v4795
  %v4868 = vmul.f32 %v4736, %v4795
  %v4869 = vmul.f32 %v4737, %v4795
  %v4870 = vmul.f32 %v4738, %v4795
  %v4871 = vmul.f32 %v4739, %v4795
  %v4872 = vmul.f32 %v4740, %v4795
  %v4873 = vmul.f32 %v4741, %v4795
  %v4874 = vmul.f32 %v4742, %v4795
  %v4875 = vmul.f32 %v4743, %v4795
  %v4876 = vmul.f32 %v4744, %v4795
  %v4877 = vmul.f32 %v4745, %v4795
  %v4878 = vmul.f32 %v4746, %v4795
  %v4879 = vmul.f32 %v4747, %v4795
  %v4880 = vmul.f32 %v4748, %v4795
  %v4881 = vmul.f32 %v4749, %v4795
  %v4882 = vmul.f32 %v4750, %v4795
  %v4883 = vmul.f32 %v4751, %v4795
  %v4884 = vmul.f32 %v4752, %v4795
  %v4885 = vmul.f32 %v4753, %v4795
  %v4886 = vmul.f32 %v4754, %v4795
  %v4887 = vmul.f32 %v4755, %v4795
  %v4888 = vmul.f32 %v4756, %v4795
  %v4889 = vmul.f32 %v4757, %v4795
  %v4890 = vmul.f32 %v4758, %v4795
  %v4891 = vmul.f32 %v4759, %v4795
  %v4892 = vmul.f32 %v4760, %v4795
  %v4893 = vmul.f32 %v4761, %v4795
  %v4894 = vmul.f32 %v4762, %v4795
  %v4895 = vmul.f32 %v4763, %v4795
  %v4896 = vmul.f32 %v4764, %v4795
  %v4897 = vmul.f32 %v4765, %v4795
  %v4898 = vmul.f32 %v4766, %v4795
  %v4899 = vmul.f32 %v4767, %v4795
  %v4900 = vmul.f32 %v4768, %v4795
  %v4901 = vmul.f32 %v4769, %v4795
  %v4902 = vmul.f32 %v4770, %v4795
  %v4903 = vmul.f32 %v4771, %v4795
  %v4904 = vmul.f32 %v4772, %v4795
  %v4905 = vmul.f32 %v4773, %v4795
  %v4906 = vmul.f32 %v4774, %v4795
  %v4907 = vmul.f32 %v4775, %v4795
  %v4908 = vmul.f32 %v4776, %v4795
  %v4909 = vmul.f32 %v4777, %v4795
  %v4910 = vmul.f32 %v4778, %v4795
  %v4911 = vmul.f32 %v4779, %v4795
  %v4912 = vmul.f32 %v4780, %v4795
  %v4913 = vmul.f32 %v4781, %v4795
  %v4914 = vmul.f32 %v4782, %v4795
  %v4915 = vmul.f32 %v4783, %v4795
  %v4916 = vmul.f32 %v4784, %v4795
  %v4917 = vmul.f32 %v4785, %v4795
  %v4918 = vmul.f32 %v4786, %v4795
  %v4919 = vmul.f32 %v4787, %v4795
  %v4920 = vmul.f32 %v4788, %v4795
  %v4921 = vmul.f32 %v4789, %v4795
  %v4922 = vmul.f32 %v4790, %v4795
  %v4923 = vmul.f32 %v4791, %v4795
  %v4924 = vlaneseq
  %v4925 = vshrl.u32 %v4924, 7
  %v4926 = vsub.s32 0, %v4925
  %v4927 = vrot.slane %v40, %v4926
  %v4928 = vadd.f32 %v4796, %v4927
  %v4929 = vadd.f32 %v4797, %v4927
  %v4930 = vadd.f32 %v4798, %v4927
  %v4931 = vadd.f32 %v4799, %v4927
  %v4932 = vadd.f32 %v4800, %v4927
  %v4933 = vadd.f32 %v4801, %v4927
  %v4934 = vadd.f32 %v4802, %v4927
  %v4935 = vadd.f32 %v4803, %v4927
  %v4936 = vadd.f32 %v4804, %v4927
  %v4937 = vadd.f32 %v4805, %v4927
  %v4938 = vadd.f32 %v4806, %v4927
  %v4939 = vadd.f32 %v4807, %v4927
  %v4940 = vadd.f32 %v4808, %v4927
  %v4941 = vadd.f32 %v4809, %v4927
  %v4942 = vadd.f32 %v4810, %v4927
  %v4943 = vadd.f32 %v4811, %v4927
  %v4944 = vadd.f32 %v4812, %v4927
  %v4945 = vadd.f32 %v4813, %v4927
  %v4946 = vadd.f32 %v4814, %v4927
  %v4947 = vadd.f32 %v4815, %v4927
  %v4948 = vadd.f32 %v4816, %v4927
  %v4949 = vadd.f32 %v4817, %v4927
  %v4950 = vadd.f32 %v4818, %v4927
  %v4951 = vadd.f32 %v4819, %v4927
  %v4952 = vadd.f32 %v4820, %v4927
  %v4953 = vadd.f32 %v4821, %v4927
  %v4954 = vadd.f32 %v4822, %v4927
  %v4955 = vadd.f32 %v4823, %v4927
  %v4956 = vadd.f32 %v4824, %v4927
  %v4957 = vadd.f32 %v4825, %v4927
  %v4958 = vadd.f32 %v4826, %v4927
  %v4959 = vadd.f32 %v4827, %v4927
  %v4960 = vadd.f32 %v4828, %v4927
  %v4961 = vadd.f32 %v4829, %v4927
  %v4962 = vadd.f32 %v4830, %v4927
  %v4963 = vadd.f32 %v4831, %v4927
  %v4964 = vadd.f32 %v4832, %v4927
  %v4965 = vadd.f32 %v4833, %v4927
  %v4966 = vadd.f32 %v4834, %v4927
  %v4967 = vadd.f32 %v4835, %v4927
  %v4968 = vadd.f32 %v4836, %v4927
  %v4969 = vadd.f32 %v4837, %v4927
  %v4970 = vadd.f32 %v4838, %v4927
  %v4971 = vadd.f32 %v4839, %v4927
  %v4972 = vadd.f32 %v4840, %v4927
  %v4973 = vadd.f32 %v4841, %v4927
  %v4974 = vadd.f32 %v4842, %v4927
  %v4975 = vadd.f32 %v4843, %v4927
  %v4976 = vadd.f32 %v4844, %v4927
  %v4977 = vadd.f32 %v4845, %v4927
  %v4978 = vadd.f32 %v4846, %v4927
  %v4979 = vadd.f32 %v4847, %v4927
  %v4980 = vadd.f32 %v4848, %v4927
  %v4981 = vadd.f32 %v4849, %v4927
  %v4982 = vadd.f32 %v4850, %v4927
  %v4983 = vadd.f32 %v4851, %v4927
  %v4984 = vadd.f32 %v4852, %v4927
  %v4985 = vadd.f32 %v4853, %v4927
  %v4986 = vadd.f32 %v4854, %v4927
  %v4987 = vadd.f32 %v4855, %v4927
  %v4988 = vadd.f32 %v4856, %v4927
  %v4989 = vadd.f32 %v4857, %v4927
  %v4990 = vadd.f32 %v4858, %v4927
  %v4991 = vadd.f32 %v4859, %v4927
  %v4992 = vadd.f32 %v4860, %v4927
  %v4993 = vadd.f32 %v4861, %v4927
  %v4994 = vadd.f32 %v4862, %v4927
  %v4995 = vadd.f32 %v4863, %v4927
  %v4996 = vadd.f32 %v4864, %v4927
  %v4997 = vadd.f32 %v4865, %v4927
  %v4998 = vadd.f32 %v4866, %v4927
  %v4999 = vadd.f32 %v4867, %v4927
  %v5000 = vadd.f32 %v4868, %v4927
  %v5001 = vadd.f32 %v4869, %v4927
  %v5002 = vadd.f32 %v4870, %v4927
  %v5003 = vadd.f32 %v4871, %v4927
  %v5004 = vadd.f32 %v4872, %v4927
  %v5005 = vadd.f32 %v4873, %v4927
  %v5006 = vadd.f32 %v4874, %v4927
  %v5007 = vadd.f32 %v4875, %v4927
  %v5008 = vadd.f32 %v4876, %v4927
  %v5009 = vadd.f32 %v4877, %v4927
  %v5010 = vadd.f32 %v4878, %v4927
  %v5011 = vadd.f32 %v4879, %v4927
  %v5012 = vadd.f32 %v4880, %v4927
  %v5013 = vadd.f32 %v4881, %v4927
  %v5014 = vadd.f32 %v4882, %v4927
  %v5015 = vadd.f32 %v4883, %v4927
  %v5016 = vadd.f32 %v4884, %v4927
  %v5017 = vadd.f32 %v4885, %v4927
  %v5018 = vadd.f32 %v4886, %v4927
  %v5019 = vadd.f32 %v4887, %v4927
  %v5020 = vadd.f32 %v4888, %v4927
  %v5021 = vadd.f32 %v4889, %v4927
  %v5022 = vadd.f32 %v4890, %v4927
  %v5023 = vadd.f32 %v4891, %v4927
  %v5024 = vadd.f32 %v4892, %v4927
  %v5025 = vadd.f32 %v4893, %v4927
  %v5026 = vadd.f32 %v4894, %v4927
  %v5027 = vadd.f32 %v4895, %v4927
  %v5028 = vadd.f32 %v4896, %v4927
  %v5029 = vadd.f32 %v4897, %v4927
  %v5030 = vadd.f32 %v4898, %v4927
  %v5031 = vadd.f32 %v4899, %v4927
  %v5032 = vadd.f32 %v4900, %v4927
  %v5033 = vadd.f32 %v4901, %v4927
  %v5034 = vadd.f32 %v4902, %v4927
  %v5035 = vadd.f32 %v4903, %v4927
  %v5036 = vadd.f32 %v4904, %v4927
  %v5037 = vadd.f32 %v4905, %v4927
  %v5038 = vadd.f32 %v4906, %v4927
  %v5039 = vadd.f32 %v4907, %v4927
  %v5040 = vadd.f32 %v4908, %v4927
  %v5041 = vadd.f32 %v4909, %v4927
  %v5042 = vadd.f32 %v4910, %v4927
  %v5043 = vadd.f32 %v4911, %v4927
  %v5044 = vadd.f32 %v4912, %v4927
  %v5045 = vadd.f32 %v4913, %v4927
  %v5046 = vadd.f32 %v4914, %v4927
  %v5047 = vadd.f32 %v4915, %v4927
  %v5048 = vadd.f32 %v4916, %v4927
  %v5049 = vadd.f32 %v4917, %v4927
  %v5050 = vadd.f32 %v4918, %v4927
  %v5051 = vadd.f32 %v4919, %v4927
  %v5052 = vadd.f32 %v4920, %v4927
  %v5053 = vadd.f32 %v4921, %v4927
  %v5054 = vadd.f32 %v4922, %v4927
  %v5055 = vadd.f32 %v4923, %v4927
  %v5056 = vld [vmem:[%s6] sm:$0x1]
  %v5057 = vpack.c.bf16 %v4929, %v4928
  %v5058 = vpack.c.bf16 %v4931, %v4930
  %v5059 = vpack.c.bf16 %v4933, %v4932
  %v5060 = vpack.c.bf16 %v4935, %v4934
  %v5061 = vpack.c.bf16 %v4937, %v4936
  %v5062 = vpack.c.bf16 %v4939, %v4938
  %v5063 = vpack.c.bf16 %v4941, %v4940
  %v5064 = vpack.c.bf16 %v4943, %v4942
  %v5065 = vpack.c.bf16 %v4945, %v4944
  %v5066 = vpack.c.bf16 %v4947, %v4946
  %v5067 = vpack.c.bf16 %v4949, %v4948
  %v5068 = vpack.c.bf16 %v4951, %v4950
  %v5069 = vpack.c.bf16 %v4953, %v4952
  %v5070 = vpack.c.bf16 %v4955, %v4954
  %v5071 = vpack.c.bf16 %v4957, %v4956
  %v5072 = vpack.c.bf16 %v4959, %v4958
  %v5073 = vpack.c.bf16 %v4961, %v4960
  %v5074 = vpack.c.bf16 %v4963, %v4962
  %v5075 = vpack.c.bf16 %v4965, %v4964
  %v5076 = vpack.c.bf16 %v4967, %v4966
  %v5077 = vpack.c.bf16 %v4969, %v4968
  %v5078 = vpack.c.bf16 %v4971, %v4970
  %v5079 = vpack.c.bf16 %v4973, %v4972
  %v5080 = vpack.c.bf16 %v4975, %v4974
  %v5081 = vpack.c.bf16 %v4977, %v4976
  %v5082 = vpack.c.bf16 %v4979, %v4978
  %v5083 = vpack.c.bf16 %v4981, %v4980
  %v5084 = vpack.c.bf16 %v4983, %v4982
  %v5085 = vpack.c.bf16 %v4985, %v4984
  %v5086 = vpack.c.bf16 %v4987, %v4986
  %v5087 = vpack.c.bf16 %v4989, %v4988
  %v5088 = vpack.c.bf16 %v4991, %v4990
  %v5089 = vpack.c.bf16 %v4993, %v4992
  %v5090 = vpack.c.bf16 %v4995, %v4994
  %v5091 = vpack.c.bf16 %v4997, %v4996
  %v5092 = vpack.c.bf16 %v4999, %v4998
  %v5093 = vpack.c.bf16 %v5001, %v5000
  %v5094 = vpack.c.bf16 %v5003, %v5002
  %v5095 = vpack.c.bf16 %v5005, %v5004
  %v5096 = vpack.c.bf16 %v5007, %v5006
  %v5097 = vpack.c.bf16 %v5009, %v5008
  %v5098 = vpack.c.bf16 %v5011, %v5010
  %v5099 = vpack.c.bf16 %v5013, %v5012
  %v5100 = vpack.c.bf16 %v5015, %v5014
  %v5101 = vpack.c.bf16 %v5017, %v5016
  %v5102 = vpack.c.bf16 %v5019, %v5018
  %v5103 = vpack.c.bf16 %v5021, %v5020
  %v5104 = vpack.c.bf16 %v5023, %v5022
  %v5105 = vpack.c.bf16 %v5025, %v5024
  %v5106 = vpack.c.bf16 %v5027, %v5026
  %v5107 = vpack.c.bf16 %v5029, %v5028
  %v5108 = vpack.c.bf16 %v5031, %v5030
  %v5109 = vpack.c.bf16 %v5033, %v5032
  %v5110 = vpack.c.bf16 %v5035, %v5034
  %v5111 = vpack.c.bf16 %v5037, %v5036
  %v5112 = vpack.c.bf16 %v5039, %v5038
  %v5113 = vpack.c.bf16 %v5041, %v5040
  %v5114 = vpack.c.bf16 %v5043, %v5042
  %v5115 = vpack.c.bf16 %v5045, %v5044
  %v5116 = vpack.c.bf16 %v5047, %v5046
  %v5117 = vpack.c.bf16 %v5049, %v5048
  %v5118 = vpack.c.bf16 %v5051, %v5050
  %v5119 = vpack.c.bf16 %v5053, %v5052
  %v5120 = vpack.c.bf16 %v5055, %v5054
  %v5121 = vld [vmem:[#allocation2] sm:$0x1]
  %5123 = vset.pattern.permute.xlu0 0
  %5124 = vperm.xlu0 %5123, %v5121
  %v5125 = vpop.permute.xlu0 %5124
  %v5127 = vlaneseq
  %v5128 = vshrl.u32 %v5127, 7
  %v5129 = vsub.s32 0, %v5128
  %v5130 = vrot.slane %v5125, %v5129
  %5131 = vmatprep.subr.bf16.mxu0 0
  %5132 = vmatpush1.bf16.xpose.msra.mxu0 %v5057
  %5133 = vmatprep.subr.bf16.mxu0 0
  %5134 = vmatpush1.bf16.xpose.msra.mxu0 %v5058
  %5135 = vmatprep.subr.bf16.mxu0 0
  %5136 = vmatpush1.bf16.xpose.msra.mxu0 %v5059
  %5137 = vmatprep.subr.bf16.mxu0 0
  %5138 = vmatpush1.bf16.xpose.msra.mxu0 %v5060
  %5139 = vmatprep.subr.bf16.mxu0 0
  %5140 = vmatpush1.bf16.xpose.msra.mxu0 %v5061
  %5141 = vmatprep.subr.bf16.mxu0 0
  %5142 = vmatpush1.bf16.xpose.msra.mxu0 %v5062
  %5143 = vmatprep.subr.bf16.mxu0 0
  %5144 = vmatpush1.bf16.xpose.msra.mxu0 %v5063
  %5145 = vmatprep.subr.bf16.mxu0 0
  %5146 = vmatpush1.bf16.xpose.msra.mxu0 %v5064
  %5147 = vmatprep.subr.bf16.mxu0 0
  %5148 = vmatpush1.bf16.xpose.msra.mxu0 %v5065
  %5149 = vmatprep.subr.bf16.mxu0 0
  %5150 = vmatpush1.bf16.xpose.msra.mxu0 %v5066
  %5151 = vmatprep.subr.bf16.mxu0 0
  %5152 = vmatpush1.bf16.xpose.msra.mxu0 %v5067
  %5153 = vmatprep.subr.bf16.mxu0 0
  %5154 = vmatpush1.bf16.xpose.msra.mxu0 %v5068
  %5155 = vmatprep.subr.bf16.mxu0 0
  %5156 = vmatpush1.bf16.xpose.msra.mxu0 %v5069
  %5157 = vmatprep.subr.bf16.mxu0 0
  %5158 = vmatpush1.bf16.xpose.msra.mxu0 %v5070
  %5159 = vmatprep.subr.bf16.mxu0 0
  %5160 = vmatpush1.bf16.xpose.msra.mxu0 %v5071
  %5161 = vmatprep.subr.bf16.mxu0 0
  %5162 = vmatpush1.bf16.xpose.msra.mxu0 %v5072
  %5163 = vmatprep.mubr.bf16.mxu0 0
  %5164 = vmatmul.mubr.bf16.gmra.mrb[0].mxu0 %v5056
  %v5165 = vpop.f32.mrb[0].mxu0
  %v5166 = vadd.f32 %v5130, %v5165
  %v5167 = vpop.f32.mrb[0].mxu0
  %v5168 = vadd.f32 %v5130, %v5167
  %v5169 = vpop.f32.mrb[0].mxu0
  %v5170 = vpop.f32.mrb[0].mxu0
  %5171 = vdwg.mxu0
  %5172 = vmatprep.subr.bf16.mxu0 0
  %5173 = vmatpush1.bf16.xpose.msra.mxu0 %v5073
  %5174 = vmatprep.subr.bf16.mxu0 0
  %5175 = vmatpush1.bf16.xpose.msra.mxu0 %v5074
  %5176 = vmatprep.subr.bf16.mxu0 0
  %5177 = vmatpush1.bf16.xpose.msra.mxu0 %v5075
  %5178 = vmatprep.subr.bf16.mxu0 0
  %5179 = vmatpush1.bf16.xpose.msra.mxu0 %v5076
  %5180 = vmatprep.subr.bf16.mxu0 0
  %5181 = vmatpush1.bf16.xpose.msra.mxu0 %v5077
  %5182 = vmatprep.subr.bf16.mxu0 0
  %5183 = vmatpush1.bf16.xpose.msra.mxu0 %v5078
  %5184 = vmatprep.subr.bf16.mxu0 0
  %5185 = vmatpush1.bf16.xpose.msra.mxu0 %v5079
  %5186 = vmatprep.subr.bf16.mxu0 0
  %5187 = vmatpush1.bf16.xpose.msra.mxu0 %v5080
  %5188 = vmatprep.subr.bf16.mxu0 0
  %5189 = vmatpush1.bf16.xpose.msra.mxu0 %v5081
  %5190 = vmatprep.subr.bf16.mxu0 0
  %5191 = vmatpush1.bf16.xpose.msra.mxu0 %v5082
  %5192 = vmatprep.subr.bf16.mxu0 0
  %5193 = vmatpush1.bf16.xpose.msra.mxu0 %v5083
  %5194 = vmatprep.subr.bf16.mxu0 0
  %5195 = vmatpush1.bf16.xpose.msra.mxu0 %v5084
  %5196 = vmatprep.subr.bf16.mxu0 0
  %5197 = vmatpush1.bf16.xpose.msra.mxu0 %v5085
  %5198 = vmatprep.subr.bf16.mxu0 0
  %5199 = vmatpush1.bf16.xpose.msra.mxu0 %v5086
  %5200 = vmatprep.subr.bf16.mxu0 0
  %5201 = vmatpush1.bf16.xpose.msra.mxu0 %v5087
  %5202 = vmatprep.subr.bf16.mxu0 0
  %5203 = vmatpush1.bf16.xpose.msra.mxu0 %v5088
  %5204 = vmatprep.mubr.bf16.mxu0 0
  %5205 = vmatmul.mubr.bf16.gmra.mrb[0].mxu0 %v5056
  %v5206 = vpop.f32.mrb[0].mxu0
  %v5207 = vadd.f32 %v5130, %v5206
  %v5208 = vpop.f32.mrb[0].mxu0
  %v5209 = vadd.f32 %v5130, %v5208
  %v5210 = vpop.f32.mrb[0].mxu0
  %v5211 = vpop.f32.mrb[0].mxu0
  %5212 = vdwg.mxu0
  %5213 = vmatprep.subr.bf16.mxu0 0
  %5214 = vmatpush1.bf16.xpose.msra.mxu0 %v5089
  %5215 = vmatprep.subr.bf16.mxu0 0
  %5216 = vmatpush1.bf16.xpose.msra.mxu0 %v5090
  %5217 = vmatprep.subr.bf16.mxu0 0
  %5218 = vmatpush1.bf16.xpose.msra.mxu0 %v5091
  %5219 = vmatprep.subr.bf16.mxu0 0
  %5220 = vmatpush1.bf16.xpose.msra.mxu0 %v5092
  %5221 = vmatprep.subr.bf16.mxu0 0
  %5222 = vmatpush1.bf16.xpose.msra.mxu0 %v5093
  %5223 = vmatprep.subr.bf16.mxu0 0
  %5224 = vmatpush1.bf16.xpose.msra.mxu0 %v5094
  %5225 = vmatprep.subr.bf16.mxu0 0
  %5226 = vmatpush1.bf16.xpose.msra.mxu0 %v5095
  %5227 = vmatprep.subr.bf16.mxu0 0
  %5228 = vmatpush1.bf16.xpose.msra.mxu0 %v5096
  %5229 = vmatprep.subr.bf16.mxu0 0
  %5230 = vmatpush1.bf16.xpose.msra.mxu0 %v5097
  %5231 = vmatprep.subr.bf16.mxu0 0
  %5232 = vmatpush1.bf16.xpose.msra.mxu0 %v5098
  %5233 = vmatprep.subr.bf16.mxu0 0
  %5234 = vmatpush1.bf16.xpose.msra.mxu0 %v5099
  %5235 = vmatprep.subr.bf16.mxu0 0
  %5236 = vmatpush1.bf16.xpose.msra.mxu0 %v5100
  %5237 = vmatprep.subr.bf16.mxu0 0
  %5238 = vmatpush1.bf16.xpose.msra.mxu0 %v5101
  %5239 = vmatprep.subr.bf16.mxu0 0
  %5240 = vmatpush1.bf16.xpose.msra.mxu0 %v5102
  %5241 = vmatprep.subr.bf16.mxu0 0
  %5242 = vmatpush1.bf16.xpose.msra.mxu0 %v5103
  %5243 = vmatprep.subr.bf16.mxu0 0
  %5244 = vmatpush1.bf16.xpose.msra.mxu0 %v5104
  %5245 = vmatprep.mubr.bf16.mxu0 0
  %5246 = vmatmul.mubr.bf16.gmra.mrb[0].mxu0 %v5056
  %v5247 = vpop.f32.mrb[0].mxu0
  %v5248 = vadd.f32 %v5130, %v5247
  %v5249 = vpop.f32.mrb[0].mxu0
  %v5250 = vadd.f32 %v5130, %v5249
  %v5251 = vpop.f32.mrb[0].mxu0
  %v5252 = vpop.f32.mrb[0].mxu0
  %5253 = vdwg.mxu0
  %5254 = vmatprep.subr.bf16.mxu0 0
  %5255 = vmatpush1.bf16.xpose.msra.mxu0 %v5105
  %5256 = vmatprep.subr.bf16.mxu0 0
  %5257 = vmatpush1.bf16.xpose.msra.mxu0 %v5106
  %5258 = vmatprep.subr.bf16.mxu0 0
  %5259 = vmatpush1.bf16.xpose.msra.mxu0 %v5107
  %5260 = vmatprep.subr.bf16.mxu0 0
  %5261 = vmatpush1.bf16.xpose.msra.mxu0 %v5108
  %5262 = vmatprep.subr.bf16.mxu0 0
  %5263 = vmatpush1.bf16.xpose.msra.mxu0 %v5109
  %5264 = vmatprep.subr.bf16.mxu0 0
  %5265 = vmatpush1.bf16.xpose.msra.mxu0 %v5110
  %5266 = vmatprep.subr.bf16.mxu0 0
  %5267 = vmatpush1.bf16.xpose.msra.mxu0 %v5111
  %5268 = vmatprep.subr.bf16.mxu0 0
  %5269 = vmatpush1.bf16.xpose.msra.mxu0 %v5112
  %5270 = vmatprep.subr.bf16.mxu0 0
  %5271 = vmatpush1.bf16.xpose.msra.mxu0 %v5113
  %5272 = vmatprep.subr.bf16.mxu0 0
  %5273 = vmatpush1.bf16.xpose.msra.mxu0 %v5114
  %5274 = vmatprep.subr.bf16.mxu0 0
  %5275 = vmatpush1.bf16.xpose.msra.mxu0 %v5115
  %5276 = vmatprep.subr.bf16.mxu0 0
  %5277 = vmatpush1.bf16.xpose.msra.mxu0 %v5116
  %5278 = vmatprep.subr.bf16.mxu0 0
  %5279 = vmatpush1.bf16.xpose.msra.mxu0 %v5117
  %5280 = vmatprep.subr.bf16.mxu0 0
  %5281 = vmatpush1.bf16.xpose.msra.mxu0 %v5118
  %5282 = vmatprep.subr.bf16.mxu0 0
  %5283 = vmatpush1.bf16.xpose.msra.mxu0 %v5119
  %5284 = vmatprep.subr.bf16.mxu0 0
  %5285 = vmatpush1.bf16.xpose.msra.mxu0 %v5120
  %5286 = vmatprep.mubr.bf16.mxu0 0
  %5287 = vmatmul.mubr.bf16.gmra.mrb[0].mxu0 %v5056
  %v5288 = vpop.f32.mrb[0].mxu0
  %v5289 = vadd.f32 %v5130, %v5288
  %v5290 = vpop.f32.mrb[0].mxu0
  %v5291 = vadd.f32 %v5130, %v5290
  %v5292 = vpop.f32.mrb[0].mxu0
  %v5293 = vpop.f32.mrb[0].mxu0
  %5294 = vdwg.mxu0
  %v5303 = vcombine.low %v5166, %v5168
  %v5304 = vcombine.low %v5207, %v5209
  %v5305 = vcombine.low %v5248, %v5250
  %v5306 = vcombine.low %v5289, %v5291
  %v5308 = vunpack.c.l.s4 1966171168
  %v5309 = vunpack.c.0.s8 %v5308
  %v5310 = vlaneseq
  %v5311 = vshrl.u32 %v5310, 7
  %v5312 = vsub.s32 %v5309, %v5311
  %v5313 = vrot.slane %v5303, %v5312
  %v5315 = vunpack.c.l.s4 1966171168
  %v5316 = vunpack.c.0.s8 %v5315
  %v5317 = vlaneseq
  %v5318 = vshrl.u32 %v5317, 7
  %v5319 = vsub.s32 %v5316, %v5318
  %v5320 = vrot.slane %v5304, %v5319
  %v5322 = vunpack.c.l.s4 1966171168
  %v5323 = vunpack.c.0.s8 %v5322
  %v5324 = vlaneseq
  %v5325 = vshrl.u32 %v5324, 7
  %v5326 = vsub.s32 %v5323, %v5325
  %v5327 = vrot.slane %v5305, %v5326
  %v5329 = vunpack.c.l.s4 1966171168
  %v5330 = vunpack.c.0.s8 %v5329
  %v5331 = vlaneseq
  %v5332 = vshrl.u32 %v5331, 7
  %v5333 = vsub.s32 %v5330, %v5332
  %v5334 = vrot.slane %v5306, %v5333
  %v5335 = vcombine.low %v5313, %v5320
  %v5336 = vcombine.low %v5327, %v5334
  %v5338 = vunpack.c.l.s4 1966171168
  %v5339 = vunpack.c.0.s8 %v5338
  %v5340 = vlaneseq
  %v5341 = vshrl.u32 %v5340, 7
  %v5342 = vsub.s32 %v5339, %v5341
  %v5343 = vrot.slane %v5335, %v5342
  %v5345 = vunpack.c.l.s4 1966171168
  %v5346 = vunpack.c.0.s8 %v5345
  %v5347 = vlaneseq
  %v5348 = vshrl.u32 %v5347, 7
  %v5349 = vsub.s32 %v5346, %v5348
  %v5350 = vrot.slane %v5336, %v5349
  %v5351 = vcombine.low %v5343, %v5350
  %5353 = vst [vmem:[%s9] sm:$0xff] %v5351
  // Predicated region
  $region38: #{match_module_forward.1} parent=0 // pred_check
    _
  $region39: #{match_module_forward.1} parent=0 // pred_check_branch
    %5355 = sbr.rel (0) target = $region41
  $region40: #{match_module_forward.1} parent=0 // pred_region
    _
  $region41: #{match_module_forward.1} parent=0 // pred_fallthru
    _
  // Predicated region
  $region42: #{match_module_forward.1} parent=0 // pred_check
    _
  $region43: #{match_module_forward.1} parent=0 // pred_check_branch
    %5357 = sbr.rel (0) target = $region45
  $region44: #{match_module_forward.1} parent=0 // pred_region
    _
  $region45: #{match_module_forward.1} parent=0 // pred_fallthru
    _

</llo_original>
